<compile_context>
chip_gen: v5e
topology: v5e:2x2
jax: 0.10.0
libtpu: 0.0.40
codegen_flags: <defaults>
</compile_context>

<pallas_src>
import functools

import jax
import jax.numpy as jnp
from jax.experimental import pallas as pl
from jax.experimental.pallas import tpu as pltpu


# --------------------------------------------------------------------------
# helpers
# --------------------------------------------------------------------------
def _pick_tile_m(m, cap=512):
    """Row-tile for the M axis: a multiple of 8 that divides m, <= cap, and
    (when possible) gives >= 2 grid blocks so both v7x TensorCores get work."""
    if m <= 8 or m % 8 != 0:
        return m                      # full-dim block is always legal
    tm = m
    while tm % 2 == 0 and (tm // 2) % 8 == 0 and (tm > cap or tm == m):
        tm //= 2
    return tm


# --------------------------------------------------------------------------
# Pallas kernels
# --------------------------------------------------------------------------
def _patch_embed_kernel(a_ref, w_ref, b_ref, g_ref, bb_ref, o_ref, *, eps):
    """o = LayerNorm(a @ w + b) * gamma + beta   (bf16 in, f32 math, bf16 out)."""
    y = jnp.dot(a_ref[...], w_ref[...], preferred_element_type=jnp.float32)
    y = y + b_ref[...]
    mu = jnp.mean(y, axis=-1, keepdims=True)
    var = jnp.mean(jnp.square(y - mu), axis=-1, keepdims=True)
    yn = (y - mu) * jax.lax.rsqrt(var + eps)
    o_ref[...] = (yn * g_ref[...] + bb_ref[...]).astype(o_ref.dtype)


def _patch_merge_kernel(x_ref, g_ref, b_ref, w_ref, o_ref, *, eps):
    """o = (LayerNorm(x) * gamma + beta) @ w   (norm in f32, matmul in bf16)."""
    x = x_ref[...].astype(jnp.float32)
    mu = jnp.mean(x, axis=-1, keepdims=True)
    var = jnp.mean(jnp.square(x - mu), axis=-1, keepdims=True)
    xn = (x - mu) * jax.lax.rsqrt(var + eps)
    xn = xn * g_ref[...] + b_ref[...]
    o_ref[...] = jnp.dot(xn.astype(jnp.bfloat16), w_ref[...],
                         preferred_element_type=jnp.float32).astype(o_ref.dtype)


def _lstm_gate_kernel(ft_ref, cx_ref, hy_ref, cy_ref):
    """SwinLSTMCell gating (all math in f32)."""
    ft = ft_ref[...].astype(jnp.float32)
    cx = cx_ref[...].astype(jnp.float32)
    gate = jax.nn.sigmoid(ft)
    cell = jnp.tanh(ft)
    cy = gate * (cx + cell)
    hy = gate * jnp.tanh(cy)
    cy_ref[...] = cy.astype(cy_ref.dtype)
    hy_ref[...] = hy.astype(hy_ref.dtype)


# --------------------------------------------------------------------------
# pallas_call wrappers
# --------------------------------------------------------------------------
def patch_embed_gemm(a, w_t, b, g, beta, *, eps=1e-5):
    """a:(M,K) bf16, w_t:(K,N) bf16, b/g/beta:(1,N) f32 -> (M,N) bf16."""
    M, K = a.shape
    N = w_t.shape[1]
    tm = _pick_tile_m(M)
    full = lambda i: (0, 0)
    return pl.pallas_call(
        functools.partial(_patch_embed_kernel, eps=eps),
        out_shape=jax.ShapeDtypeStruct((M, N), jnp.bfloat16),
        grid_spec=pltpu.PrefetchScalarGridSpec(
            num_scalar_prefetch=0,
            grid=(M // tm,),
            in_specs=[
                pl.BlockSpec((tm, K), lambda i: (i, 0)),
                pl.BlockSpec((K, N), full),
                pl.BlockSpec((1, N), full),
                pl.BlockSpec((1, N), full),
                pl.BlockSpec((1, N), full),
            ],
            out_specs=pl.BlockSpec((tm, N), lambda i: (i, 0)),
        ),
        compiler_params=pltpu.CompilerParams(dimension_semantics=("parallel",)),
    )(a, w_t, b, g, beta)


def patch_merge_gemm(x4, g, beta, w_t, *, eps=1e-5):
    """x4:(M,4C) bf16, g/beta:(1,4C) f32, w_t:(4C,2C) bf16 -> (M,2C) bf16."""
    M, K = x4.shape
    N = w_t.shape[1]
    tm = _pick_tile_m(M)
    full = lambda i: (0, 0)
    return pl.pallas_call(
        functools.partial(_patch_merge_kernel, eps=eps),
        out_shape=jax.ShapeDtypeStruct((M, N), jnp.bfloat16),
        grid_spec=pltpu.PrefetchScalarGridSpec(
            num_scalar_prefetch=0,
            grid=(M // tm,),
            in_specs=[
                pl.BlockSpec((tm, K), lambda i: (i, 0)),
                pl.BlockSpec((1, K), full),
                pl.BlockSpec((1, K), full),
                pl.BlockSpec((K, N), full),
            ],
            out_specs=pl.BlockSpec((tm, N), lambda i: (i, 0)),
        ),
        compiler_params=pltpu.CompilerParams(dimension_semantics=("parallel",)),
    )(x4, g, beta, w_t)


def lstm_gate(ft, cx):
    """ft:(M,C) bf16, cx:(M,C) f32 -> (hy, cy) both (M,C) f32."""
    M, C = ft.shape
    tm = _pick_tile_m(M)
    blk = pl.BlockSpec((tm, C), lambda i: (i, 0))
    hy, cy = pl.pallas_call(
        _lstm_gate_kernel,
        out_shape=(jax.ShapeDtypeStruct((M, C), jnp.float32),
                   jax.ShapeDtypeStruct((M, C), jnp.float32)),
        grid_spec=pltpu.PrefetchScalarGridSpec(
            num_scalar_prefetch=0,
            grid=(M // tm,),
            in_specs=[blk, blk],
            out_specs=[blk, blk],
        ),
        compiler_params=pltpu.CompilerParams(dimension_semantics=("parallel",)),
    )(ft, cx)
    return hy, cy


# --------------------------------------------------------------------------
# plain-JAX layout glue (pure index shuffles, no compute)
# --------------------------------------------------------------------------
def _patchify(x, p):
    """(B,C,H,W) -> (B*Hp*Wp, C*p*p) with column order (C, ph, pw) matching
    torch Conv2d weight.reshape(out, -1)."""
    B, C, H, W = x.shape
    Hp, Wp = H // p, W // p
    xr = x.reshape(B, C, Hp, p, Wp, p)
    xr = xr.transpose(0, 2, 4, 1, 3, 5)          # (B, Hp, Wp, C, p, p)
    return xr.reshape(B * Hp * Wp, C * p * p)


def _merge_gather(h_flat, B, H, W, C):
    """PatchMerging space-to-depth: (B*H*W, C) -> (B*(H/2)*(W/2), 4C)
    with torch cat order [x0, x1, x2, x3]."""
    x = h_flat.reshape(B, H, W, C)
    x0 = x[:, 0::2, 0::2, :]
    x1 = x[:, 1::2, 0::2, :]
    x2 = x[:, 0::2, 1::2, :]
    x3 = x[:, 1::2, 1::2, :]
    x4 = jnp.concatenate([x0, x1, x2, x3], axis=-1)
    return x4.reshape(B * (H // 2) * (W // 2), 4 * C)


# --------------------------------------------------------------------------
# DownSample forward (Pallas path)
# --------------------------------------------------------------------------
def downsample_forward(x, y, kp, *, patch, num_layers):
    B = x.shape[0]
    Hp, Wp = x.shape[2] // patch, x.shape[3] // patch

    # ---- PatchEmbed: patchify + fused matmul + bias + LayerNorm -----------
    patches = _patchify(x, patch).astype(jnp.bfloat16)
    xt = patch_embed_gemm(patches, kp["pe_wT"], kp["pe_b"],
                          kp["pe_g"], kp["pe_beta"])        # (B*L, embed) bf16

    hidden_states_down = []
    for i in range(num_layers):
        M, C = xt.shape
        # TODO(synk): DATSwinTransformerBlock definition missing -> Ft = xt.
        if y[i] is None:
            cx = jnp.zeros((M, C), jnp.float32)
        else:
            cx = y[i][1].astype(jnp.float32).reshape(M, C)

        # ---- SwinLSTMCell gating (fused elementwise kernel) --------------
        hy, cy = lstm_gate(xt, cx)
        hidden_states_down.append((hy.reshape(B, -1, C), cy.reshape(B, -1, C)))

        # ---- PatchMerging: gather + fused LayerNorm + Linear --------------
        x4 = _merge_gather(hy, B, Hp, Wp, C).astype(jnp.bfloat16)
        xt = patch_merge_gemm(x4, kp[f"pm{i}_g"], kp[f"pm{i}_beta"],
                              kp[f"pm{i}_wT"])               # (M/4, 2C) bf16
        Hp, Wp = Hp // 2, Wp // 2

    x_out = xt.reshape(B, -1, xt.shape[1])
    return hidden_states_down, x_out


# --------------------------------------------------------------------------
# synthetic parameters (f32 masters + pre-packed bf16 kernel weights)
# --------------------------------------------------------------------------
def init_params(key, *, in_chans, embed_dim, patch, num_layers):
    params = {}
    keys = jax.random.split(key, 4 + 3 * num_layers)
    k = iter(keys)
    fan_in = in_chans * patch * patch
    params["pe_w"] = (2.0 / fan_in) ** 0.5 * jax.random.normal(
        next(k), (embed_dim, in_chans, patch, patch), jnp.float32)
    params["pe_b"] = 0.02 * jax.random.normal(next(k), (embed_dim,), jnp.float32)
    params["pe_g"] = 1.0 + 0.1 * jax.random.normal(next(k), (embed_dim,), jnp.float32)
    params["pe_beta"] = 0.05 * jax.random.normal(next(k), (embed_dim,), jnp.float32)
    dim = embed_dim
    for i in range(num_layers):
        params[f"pm{i}_g"] = 1.0 + 0.1 * jax.random.normal(next(k), (4 * dim,), jnp.float32)
        params[f"pm{i}_beta"] = 0.05 * jax.random.normal(next(k), (4 * dim,), jnp.float32)
        params[f"pm{i}_w"] = (2.0 / (4 * dim)) ** 0.5 * jax.random.normal(
            next(k), (2 * dim, 4 * dim), jnp.float32)        # torch Linear layout
        dim *= 2
    return params


def pack_params(p, num_layers):
    """Pre-transpose / pre-cast weights once (no per-call reshuffle)."""
    kp = {}
    w = p["pe_w"]
    kp["pe_wT"] = jnp.asarray(w.reshape(w.shape[0], -1).T, jnp.bfloat16)   # (K, N)
    kp["pe_b"] = p["pe_b"].reshape(1, -1)
    kp["pe_g"] = p["pe_g"].reshape(1, -1)
    kp["pe_beta"] = p["pe_beta"].reshape(1, -1)
    for i in range(num_layers):
        kp[f"pm{i}_g"] = p[f"pm{i}_g"].reshape(1, -1)
        kp[f"pm{i}_beta"] = p[f"pm{i}_beta"].reshape(1, -1)
        kp[f"pm{i}_wT"] = jnp.asarray(p[f"pm{i}_w"].T, jnp.bfloat16)       # (4C, 2C)
    return kp


# --------------------------------------------------------------------------
# pure-JAX f32 reference (mirrors the PyTorch forward)
# --------------------------------------------------------------------------
def _ln_ref(x, g, b, eps=1e-5):
    mu = jnp.mean(x, -1, keepdims=True)
    var = jnp.mean(jnp.square(x - mu), -1, keepdims=True)
    return (x - mu) * jax.lax.rsqrt(var + eps) * g + b


def ref_forward(x, y, p, *, patch, num_layers):
    hp = jax.lax.Precision.HIGHEST
    B = x.shape[0]
    Hp, Wp = x.shape[2] // patch, x.shape[3] // patch
    patches = _patchify(x, patch)
    w2 = p["pe_w"].reshape(p["pe_w"].shape[0], -1)
    xt = jnp.dot(patches, w2.T, precision=hp) + p["pe_b"]
    xt = _ln_ref(xt, p["pe_g"], p["pe_beta"])
    hidden = []
    for i in range(num_layers):
        M, C = xt.shape
        cx = jnp.zeros((M, C), jnp.float32) if y[i] is None else y[i][1].reshape(M, C)
        ft = xt                                   # DATSwin treated as identity
        gate = jax.nn.sigmoid(ft)
        cell = jnp.tanh(ft)
        cy = gate * (cx + cell)
        hy = gate * jnp.tanh(cy)
        hidden.append((hy.reshape(B, -1, C), cy.reshape(B, -1, C)))
        x4 = _merge_gather(hy, B, Hp, Wp, C)
        xn = _ln_ref(x4, p[f"pm{i}_g"], p[f"pm{i}_beta"])
        xt = jnp.dot(xn, p[f"pm{i}_w"].T, precision=hp)
        Hp, Wp = Hp // 2, Wp // 2
    return hidden, xt.reshape(B, -1, xt.shape[1])


# --------------------------------------------------------------------------
if __name__ == "__main__":
    B, in_chans, img, patch = 2, 4, 32, 4
    embed_dim, num_layers = 128, 2                 # dims: 128 -> 256 -> 512

    key = jax.random.PRNGKey(0)
    kx, kparam, kh0, kh1 = jax.random.split(key, 4)

    x = jax.random.normal(kx, (B, in_chans, img, img), jnp.float32)
    params = init_params(kparam, in_chans=in_chans, embed_dim=embed_dim,
                         patch=patch, num_layers=num_layers)
    kparams = pack_params(params, num_layers)

    # hidden states: real (hx, cx) for stage 0, None for stage 1 (like t=0)
    L0 = (img // patch) ** 2
    y = [(jax.random.normal(kh0, (B, L0, embed_dim), jnp.float32),
          jax.random.normal(kh1, (B, L0, embed_dim), jnp.float32)),
         None]

    fwd = jax.jit(functools.partial(downsample_forward,
                                    patch=patch, num_layers=num_layers))
    hs, x_out = fwd(x, y, kparams)
    hs, x_out = jax.block_until_ready((hs, x_out))

    rhs, rx_out = ref_forward(x, y, params, patch=patch, num_layers=num_layers)
    rhs, rx_out = jax.block_until_ready((rhs, rx_out))

    expected_shape = (B, (img // patch) ** 2 // 4 ** num_layers,
                      embed_dim * 2 ** num_layers)
    assert x_out.shape == rx_out.shape == expected_shape, (x_out.shape, expected_shape)

    def _check(a, b, name, tol=5e-2):
        a = jnp.asarray(a, jnp.float32)
        b = jnp.asarray(b, jnp.float32)
        err = float(jnp.max(jnp.abs(a - b)))
        assert err < tol, (name, err)

    _check(x_out, rx_out, "x_out")
    for i in range(num_layers):
        _check(hs[i][0], rhs[i][0], f"hx{i}")
        _check(hs[i][1], rhs[i][1], f"cx{i}")

    print("KERNEL_OK")
</pallas_src>

<mosaic_0001>
module attributes {stable_mosaic.version = 11 : i64} {
  func.func @_patch_embed_kernel(%arg0: i32, %arg1: memref<64x64xbf16, #tpu.memory_space<vmem>>, %arg2: memref<64x128xbf16, #tpu.memory_space<vmem>>, %arg3: memref<1x128xf32, #tpu.memory_space<vmem>>, %arg4: memref<1x128xf32, #tpu.memory_space<vmem>>, %arg5: memref<1x128xf32, #tpu.memory_space<vmem>>, %arg6: memref<64x128xbf16, #tpu.memory_space<vmem>>) attributes {dimension_semantics = [#tpu.dimension_semantics<parallel>], iteration_bounds = array<i64: 2>, scalar_prefetch = 0 : i64, scratch_operands = 0 : i64, tpu.core_type = #tpu.core_type<tc>, window_params = [{transform_indices = @transform_0, window_bounds = array<i64: 64, 64>}, {pipeline_mode = #tpu.pipeline_mode<synchronous>, transform_indices = @transform_1, window_bounds = array<i64: 64, 128>}, {pipeline_mode = #tpu.pipeline_mode<synchronous>, transform_indices = @transform_2, window_bounds = array<i64: 1, 128>}, {pipeline_mode = #tpu.pipeline_mode<synchronous>, transform_indices = @transform_3, window_bounds = array<i64: 1, 128>}, {pipeline_mode = #tpu.pipeline_mode<synchronous>, transform_indices = @transform_4, window_bounds = array<i64: 1, 128>}, {transform_indices = @transform_5, window_bounds = array<i64: 64, 128>}]} {
    %c0 = arith.constant 0 : index
    %c0_0 = arith.constant 0 : index
    %0 = vector.load %arg1[%c0, %c0_0] : memref<64x64xbf16, #tpu.memory_space<vmem>>, vector<64x64xbf16>
    %c0_1 = arith.constant 0 : index
    %c0_2 = arith.constant 0 : index
    %1 = vector.load %arg2[%c0_1, %c0_2] : memref<64x128xbf16, #tpu.memory_space<vmem>>, vector<64x128xbf16>
    %cst = arith.constant dense<0.000000e+00> : vector<64x128xf32>
    %2 = tpu.matmul %0, %1, %cst {dimension_numbers = #tpu.dot_dimension_numbers<[1], [0], [0], [1], [0, 0, 1, 1], [], []>} : vector<64x64xbf16>, vector<64x128xbf16>, vector<64x128xf32> -> vector<64x128xf32>
    %c0_3 = arith.constant 0 : index
    %c0_4 = arith.constant 0 : index
    %3 = vector.load %arg3[%c0_3, %c0_4] : memref<1x128xf32, #tpu.memory_space<vmem>>, vector<1x128xf32>
    %4 = vector.broadcast %3 : vector<1x128xf32> to vector<64x128xf32>
    %5 = arith.addf %2, %4 : vector<64x128xf32>
    %cst_5 = arith.constant dense<0.000000e+00> : vector<64xf32>
    %6 = vector.multi_reduction <add>, %5, %cst_5 [1] : vector<64x128xf32> to vector<64xf32>
    %7 = vector.shape_cast %6 : vector<64xf32> to vector<64x1xf32>
    %cst_6 = arith.constant 1.280000e+02 : f32
    %8 = vector.broadcast %cst_6 : f32 to vector<64x1xf32>
    %9 = arith.divf %7, %8 : vector<64x1xf32>
    %10 = vector.broadcast %9 : vector<64x1xf32> to vector<64x128xf32>
    %11 = arith.subf %5, %10 : vector<64x128xf32>
    %12 = arith.mulf %11, %11 : vector<64x128xf32>
    %cst_7 = arith.constant dense<0.000000e+00> : vector<64xf32>
    %13 = vector.multi_reduction <add>, %12, %cst_7 [1] : vector<64x128xf32> to vector<64xf32>
    %14 = vector.shape_cast %13 : vector<64xf32> to vector<64x1xf32>
    %cst_8 = arith.constant 1.280000e+02 : f32
    %15 = vector.broadcast %cst_8 : f32 to vector<64x1xf32>
    %16 = arith.divf %14, %15 : vector<64x1xf32>
    %17 = vector.broadcast %9 : vector<64x1xf32> to vector<64x128xf32>
    %18 = arith.subf %5, %17 : vector<64x128xf32>
    %cst_9 = arith.constant 9.99999974E-6 : f32
    %19 = vector.broadcast %cst_9 : f32 to vector<64x1xf32>
    %20 = arith.addf %16, %19 : vector<64x1xf32>
    %21 = math.rsqrt %20 : vector<64x1xf32>
    %22 = vector.broadcast %21 : vector<64x1xf32> to vector<64x128xf32>
    %23 = arith.mulf %18, %22 : vector<64x128xf32>
    %c0_10 = arith.constant 0 : index
    %c0_11 = arith.constant 0 : index
    %24 = vector.load %arg4[%c0_10, %c0_11] : memref<1x128xf32, #tpu.memory_space<vmem>>, vector<1x128xf32>
    %25 = vector.broadcast %24 : vector<1x128xf32> to vector<64x128xf32>
    %26 = arith.mulf %23, %25 : vector<64x128xf32>
    %c0_12 = arith.constant 0 : index
    %c0_13 = arith.constant 0 : index
    %27 = vector.load %arg5[%c0_12, %c0_13] : memref<1x128xf32, #tpu.memory_space<vmem>>, vector<1x128xf32>
    %28 = vector.broadcast %27 : vector<1x128xf32> to vector<64x128xf32>
    %29 = arith.addf %26, %28 : vector<64x128xf32>
    %30 = arith.truncf %29 : vector<64x128xf32> to vector<64x128xbf16>
    %c0_14 = arith.constant 0 : index
    %c0_15 = arith.constant 0 : index
    %31 = vector.load %arg6[%c0_14, %c0_15] : memref<64x128xbf16, #tpu.memory_space<vmem>>, vector<64x128xbf16>
    tpu.vector_store %arg6[%c0_14, %c0_15], %30 {strides = array<i32>} : memref<64x128xbf16, #tpu.memory_space<vmem>>, vector<64x128xbf16>,
    return
  }
  func.func @transform_0(%arg0: i32) -> (i32, i32) {
    %c0_i32 = arith.constant 0 : i32
    %c0_i32_0 = arith.constant 0 : i32
    return %arg0, %c0_i32 : i32, i32
  }
  func.func @transform_1(%arg0: i32) -> (i32, i32) {
    %c0_i32 = arith.constant 0 : i32
    %c0_i32_0 = arith.constant 0 : i32
    %c0_i32_1 = arith.constant 0 : i32
    return %c0_i32, %c0_i32_0 : i32, i32
  }
  func.func @transform_2(%arg0: i32) -> (i32, i32) {
    %c0_i32 = arith.constant 0 : i32
    %c0_i32_0 = arith.constant 0 : i32
    %c0_i32_1 = arith.constant 0 : i32
    return %c0_i32, %c0_i32_0 : i32, i32
  }
  func.func @transform_3(%arg0: i32) -> (i32, i32) {
    %c0_i32 = arith.constant 0 : i32
    %c0_i32_0 = arith.constant 0 : i32
    %c0_i32_1 = arith.constant 0 : i32
    return %c0_i32, %c0_i32_0 : i32, i32
  }
  func.func @transform_4(%arg0: i32) -> (i32, i32) {
    %c0_i32 = arith.constant 0 : i32
    %c0_i32_0 = arith.constant 0 : i32
    %c0_i32_1 = arith.constant 0 : i32
    return %c0_i32, %c0_i32_0 : i32, i32
  }
  func.func @transform_5(%arg0: i32) -> (i32, i32) {
    %c0_i32 = arith.constant 0 : i32
    %c0_i32_0 = arith.constant 0 : i32
    return %arg0, %c0_i32 : i32, i32
  }
}

module attributes {stable_mosaic.version = 11 : i64} {
  func.func @_lstm_gate_kernel(%arg0: i32, %arg1: memref<64x128xbf16, #tpu.memory_space<vmem>>, %arg2: memref<64x128xf32, #tpu.memory_space<vmem>>, %arg3: memref<64x128xf32, #tpu.memory_space<vmem>>, %arg4: memref<64x128xf32, #tpu.memory_space<vmem>>) attributes {dimension_semantics = [#tpu.dimension_semantics<parallel>], iteration_bounds = array<i64: 2>, scalar_prefetch = 0 : i64, scratch_operands = 0 : i64, tpu.core_type = #tpu.core_type<tc>, window_params = [{transform_indices = @transform_0, window_bounds = array<i64: 64, 128>}, {transform_indices = @transform_1, window_bounds = array<i64: 64, 128>}, {transform_indices = @transform_2, window_bounds = array<i64: 64, 128>}, {transform_indices = @transform_3, window_bounds = array<i64: 64, 128>}]} {
    %c0 = arith.constant 0 : index
    %c0_0 = arith.constant 0 : index
    %0 = vector.load %arg1[%c0, %c0_0] : memref<64x128xbf16, #tpu.memory_space<vmem>>, vector<64x128xbf16>
    %1 = arith.extf %0 : vector<64x128xbf16> to vector<64x128xf32>
    %c0_1 = arith.constant 0 : index
    %c0_2 = arith.constant 0 : index
    %2 = vector.load %arg2[%c0_1, %c0_2] : memref<64x128xf32, #tpu.memory_space<vmem>>, vector<64x128xf32>
    %3 = arith.negf %1 : vector<64x128xf32>
    %4 = math.exp %3 : vector<64x128xf32>
    %cst = arith.constant 1.000000e+00 : f32
    %5 = vector.broadcast %cst : f32 to vector<64x128xf32>
    %6 = arith.addf %5, %4 : vector<64x128xf32>
    %7 = arith.divf %5, %6 : vector<64x128xf32>
    %8 = math.tanh %1 : vector<64x128xf32>
    %9 = arith.addf %2, %8 : vector<64x128xf32>
    %10 = arith.mulf %7, %9 : vector<64x128xf32>
    %11 = math.tanh %10 : vector<64x128xf32>
    %12 = arith.mulf %7, %11 : vector<64x128xf32>
    %c0_3 = arith.constant 0 : index
    %c0_4 = arith.constant 0 : index
    %13 = vector.load %arg4[%c0_3, %c0_4] : memref<64x128xf32, #tpu.memory_space<vmem>>, vector<64x128xf32>
    tpu.vector_store %arg4[%c0_3, %c0_4], %10 {strides = array<i32>} : memref<64x128xf32, #tpu.memory_space<vmem>>, vector<64x128xf32>,
    %c0_5 = arith.constant 0 : index
    %c0_6 = arith.constant 0 : index
    %14 = vector.load %arg3[%c0_5, %c0_6] : memref<64x128xf32, #tpu.memory_space<vmem>>, vector<64x128xf32>
    tpu.vector_store %arg3[%c0_5, %c0_6], %12 {strides = array<i32>} : memref<64x128xf32, #tpu.memory_space<vmem>>, vector<64x128xf32>,
    return
  }
  func.func @transform_0(%arg0: i32) -> (i32, i32) {
    %c0_i32 = arith.constant 0 : i32
    %c0_i32_0 = arith.constant 0 : i32
    return %arg0, %c0_i32 : i32, i32
  }
  func.func @transform_1(%arg0: i32) -> (i32, i32) {
    %c0_i32 = arith.constant 0 : i32
    %c0_i32_0 = arith.constant 0 : i32
    return %arg0, %c0_i32 : i32, i32
  }
  func.func @transform_2(%arg0: i32) -> (i32, i32) {
    %c0_i32 = arith.constant 0 : i32
    %c0_i32_0 = arith.constant 0 : i32
    return %arg0, %c0_i32 : i32, i32
  }
  func.func @transform_3(%arg0: i32) -> (i32, i32) {
    %c0_i32 = arith.constant 0 : i32
    %c0_i32_0 = arith.constant 0 : i32
    return %arg0, %c0_i32 : i32, i32
  }
}

module attributes {stable_mosaic.version = 11 : i64} {
  func.func @_patch_merge_kernel(%arg0: i32, %arg1: memref<16x512xbf16, #tpu.memory_space<vmem>>, %arg2: memref<1x512xf32, #tpu.memory_space<vmem>>, %arg3: memref<1x512xf32, #tpu.memory_space<vmem>>, %arg4: memref<512x256xbf16, #tpu.memory_space<vmem>>, %arg5: memref<16x256xbf16, #tpu.memory_space<vmem>>) attributes {dimension_semantics = [#tpu.dimension_semantics<parallel>], iteration_bounds = array<i64: 2>, scalar_prefetch = 0 : i64, scratch_operands = 0 : i64, tpu.core_type = #tpu.core_type<tc>, window_params = [{transform_indices = @transform_0, window_bounds = array<i64: 16, 512>}, {pipeline_mode = #tpu.pipeline_mode<synchronous>, transform_indices = @transform_1, window_bounds = array<i64: 1, 512>}, {pipeline_mode = #tpu.pipeline_mode<synchronous>, transform_indices = @transform_2, window_bounds = array<i64: 1, 512>}, {pipeline_mode = #tpu.pipeline_mode<synchronous>, transform_indices = @transform_3, window_bounds = array<i64: 512, 256>}, {transform_indices = @transform_4, window_bounds = array<i64: 16, 256>}]} {
    %c0 = arith.constant 0 : index
    %c0_0 = arith.constant 0 : index
    %0 = vector.load %arg1[%c0, %c0_0] : memref<16x512xbf16, #tpu.memory_space<vmem>>, vector<16x512xbf16>
    %1 = arith.extf %0 : vector<16x512xbf16> to vector<16x512xf32>
    %cst = arith.constant dense<0.000000e+00> : vector<16xf32>
    %2 = vector.multi_reduction <add>, %1, %cst [1] : vector<16x512xf32> to vector<16xf32>
    %3 = vector.shape_cast %2 : vector<16xf32> to vector<16x1xf32>
    %cst_1 = arith.constant 5.120000e+02 : f32
    %4 = vector.broadcast %cst_1 : f32 to vector<16x1xf32>
    %5 = arith.divf %3, %4 : vector<16x1xf32>
    %6 = vector.broadcast %5 : vector<16x1xf32> to vector<16x512xf32>
    %7 = arith.subf %1, %6 : vector<16x512xf32>
    %8 = arith.mulf %7, %7 : vector<16x512xf32>
    %cst_2 = arith.constant dense<0.000000e+00> : vector<16xf32>
    %9 = vector.multi_reduction <add>, %8, %cst_2 [1] : vector<16x512xf32> to vector<16xf32>
    %10 = vector.shape_cast %9 : vector<16xf32> to vector<16x1xf32>
    %cst_3 = arith.constant 5.120000e+02 : f32
    %11 = vector.broadcast %cst_3 : f32 to vector<16x1xf32>
    %12 = arith.divf %10, %11 : vector<16x1xf32>
    %13 = vector.broadcast %5 : vector<16x1xf32> to vector<16x512xf32>
    %14 = arith.subf %1, %13 : vector<16x512xf32>
    %cst_4 = arith.constant 9.99999974E-6 : f32
    %15 = vector.broadcast %cst_4 : f32 to vector<16x1xf32>
    %16 = arith.addf %12, %15 : vector<16x1xf32>
    %17 = math.rsqrt %16 : vector<16x1xf32>
    %18 = vector.broadcast %17 : vector<16x1xf32> to vector<16x512xf32>
    %19 = arith.mulf %14, %18 : vector<16x512xf32>
    %c0_5 = arith.constant 0 : index
    %c0_6 = arith.constant 0 : index
    %20 = vector.load %arg2[%c0_5, %c0_6] : memref<1x512xf32, #tpu.memory_space<vmem>>, vector<1x512xf32>
    %21 = vector.broadcast %20 : vector<1x512xf32> to vector<16x512xf32>
    %22 = arith.mulf %19, %21 : vector<16x512xf32>
    %c0_7 = arith.constant 0 : index
    %c0_8 = arith.constant 0 : index
    %23 = vector.load %arg3[%c0_7, %c0_8] : memref<1x512xf32, #tpu.memory_space<vmem>>, vector<1x512xf32>
    %24 = vector.broadcast %23 : vector<1x512xf32> to vector<16x512xf32>
    %25 = arith.addf %22, %24 : vector<16x512xf32>
    %26 = arith.truncf %25 : vector<16x512xf32> to vector<16x512xbf16>
    %c0_9 = arith.constant 0 : index
    %c0_10 = arith.constant 0 : index
    %27 = vector.load %arg4[%c0_9, %c0_10] : memref<512x256xbf16, #tpu.memory_space<vmem>>, vector<512x256xbf16>
    %cst_11 = arith.constant dense<0.000000e+00> : vector<16x256xf32>
    %28 = tpu.matmul %26, %27, %cst_11 {dimension_numbers = #tpu.dot_dimension_numbers<[1], [0], [0], [1], [0, 0, 1, 1], [], []>} : vector<16x512xbf16>, vector<512x256xbf16>, vector<16x256xf32> -> vector<16x256xf32>
    %29 = arith.truncf %28 : vector<16x256xf32> to vector<16x256xbf16>
    %c0_12 = arith.constant 0 : index
    %c0_13 = arith.constant 0 : index
    %30 = vector.load %arg5[%c0_12, %c0_13] : memref<16x256xbf16, #tpu.memory_space<vmem>>, vector<16x256xbf16>
    tpu.vector_store %arg5[%c0_12, %c0_13], %29 {strides = array<i32>} : memref<16x256xbf16, #tpu.memory_space<vmem>>, vector<16x256xbf16>,
    return
  }
  func.func @transform_0(%arg0: i32) -> (i32, i32) {
    %c0_i32 = arith.constant 0 : i32
    %c0_i32_0 = arith.constant 0 : i32
    return %arg0, %c0_i32 : i32, i32
  }
  func.func @transform_1(%arg0: i32) -> (i32, i32) {
    %c0_i32 = arith.constant 0 : i32
    %c0_i32_0 = arith.constant 0 : i32
    %c0_i32_1 = arith.constant 0 : i32
    return %c0_i32, %c0_i32_0 : i32, i32
  }
  func.func @transform_2(%arg0: i32) -> (i32, i32) {
    %c0_i32 = arith.constant 0 : i32
    %c0_i32_0 = arith.constant 0 : i32
    %c0_i32_1 = arith.constant 0 : i32
    return %c0_i32, %c0_i32_0 : i32, i32
  }
  func.func @transform_3(%arg0: i32) -> (i32, i32) {
    %c0_i32 = arith.constant 0 : i32
    %c0_i32_0 = arith.constant 0 : i32
    %c0_i32_1 = arith.constant 0 : i32
    return %c0_i32, %c0_i32_0 : i32, i32
  }
  func.func @transform_4(%arg0: i32) -> (i32, i32) {
    %c0_i32 = arith.constant 0 : i32
    %c0_i32_0 = arith.constant 0 : i32
    return %arg0, %c0_i32 : i32, i32
  }
}

module attributes {stable_mosaic.version = 11 : i64} {
  func.func @_lstm_gate_kernel(%arg0: i32, %arg1: memref<16x256xbf16, #tpu.memory_space<vmem>>, %arg2: memref<16x256xf32, #tpu.memory_space<vmem>>, %arg3: memref<16x256xf32, #tpu.memory_space<vmem>>, %arg4: memref<16x256xf32, #tpu.memory_space<vmem>>) attributes {dimension_semantics = [#tpu.dimension_semantics<parallel>], iteration_bounds = array<i64: 2>, scalar_prefetch = 0 : i64, scratch_operands = 0 : i64, tpu.core_type = #tpu.core_type<tc>, window_params = [{transform_indices = @transform_0, window_bounds = array<i64: 16, 256>}, {transform_indices = @transform_1, window_bounds = array<i64: 16, 256>}, {transform_indices = @transform_2, window_bounds = array<i64: 16, 256>}, {transform_indices = @transform_3, window_bounds = array<i64: 16, 256>}]} {
    %c0 = arith.constant 0 : index
    %c0_0 = arith.constant 0 : index
    %0 = vector.load %arg1[%c0, %c0_0] : memref<16x256xbf16, #tpu.memory_space<vmem>>, vector<16x256xbf16>
    %1 = arith.extf %0 : vector<16x256xbf16> to vector<16x256xf32>
    %c0_1 = arith.constant 0 : index
    %c0_2 = arith.constant 0 : index
    %2 = vector.load %arg2[%c0_1, %c0_2] : memref<16x256xf32, #tpu.memory_space<vmem>>, vector<16x256xf32>
    %3 = arith.negf %1 : vector<16x256xf32>
    %4 = math.exp %3 : vector<16x256xf32>
    %cst = arith.constant 1.000000e+00 : f32
    %5 = vector.broadcast %cst : f32 to vector<16x256xf32>
    %6 = arith.addf %5, %4 : vector<16x256xf32>
    %7 = arith.divf %5, %6 : vector<16x256xf32>
    %8 = math.tanh %1 : vector<16x256xf32>
    %9 = arith.addf %2, %8 : vector<16x256xf32>
    %10 = arith.mulf %7, %9 : vector<16x256xf32>
    %11 = math.tanh %10 : vector<16x256xf32>
    %12 = arith.mulf %7, %11 : vector<16x256xf32>
    %c0_3 = arith.constant 0 : index
    %c0_4 = arith.constant 0 : index
    %13 = vector.load %arg4[%c0_3, %c0_4] : memref<16x256xf32, #tpu.memory_space<vmem>>, vector<16x256xf32>
    tpu.vector_store %arg4[%c0_3, %c0_4], %10 {strides = array<i32>} : memref<16x256xf32, #tpu.memory_space<vmem>>, vector<16x256xf32>,
    %c0_5 = arith.constant 0 : index
    %c0_6 = arith.constant 0 : index
    %14 = vector.load %arg3[%c0_5, %c0_6] : memref<16x256xf32, #tpu.memory_space<vmem>>, vector<16x256xf32>
    tpu.vector_store %arg3[%c0_5, %c0_6], %12 {strides = array<i32>} : memref<16x256xf32, #tpu.memory_space<vmem>>, vector<16x256xf32>,
    return
  }
  func.func @transform_0(%arg0: i32) -> (i32, i32) {
    %c0_i32 = arith.constant 0 : i32
    %c0_i32_0 = arith.constant 0 : i32
    return %arg0, %c0_i32 : i32, i32
  }
  func.func @transform_1(%arg0: i32) -> (i32, i32) {
    %c0_i32 = arith.constant 0 : i32
    %c0_i32_0 = arith.constant 0 : i32
    return %arg0, %c0_i32 : i32, i32
  }
  func.func @transform_2(%arg0: i32) -> (i32, i32) {
    %c0_i32 = arith.constant 0 : i32
    %c0_i32_0 = arith.constant 0 : i32
    return %arg0, %c0_i32 : i32, i32
  }
  func.func @transform_3(%arg0: i32) -> (i32, i32) {
    %c0_i32 = arith.constant 0 : i32
    %c0_i32_0 = arith.constant 0 : i32
    return %arg0, %c0_i32 : i32, i32
  }
}

module attributes {stable_mosaic.version = 11 : i64} {
  func.func @_patch_merge_kernel(%arg0: i32, %arg1: memref<8x1024xbf16, #tpu.memory_space<vmem>>, %arg2: memref<1x1024xf32, #tpu.memory_space<vmem>>, %arg3: memref<1x1024xf32, #tpu.memory_space<vmem>>, %arg4: memref<1024x512xbf16, #tpu.memory_space<vmem>>, %arg5: memref<8x512xbf16, #tpu.memory_space<vmem>>) attributes {dimension_semantics = [#tpu.dimension_semantics<parallel>], iteration_bounds = array<i64: 1>, scalar_prefetch = 0 : i64, scratch_operands = 0 : i64, tpu.core_type = #tpu.core_type<tc>, window_params = [{transform_indices = @transform_0, window_bounds = array<i64: 8, 1024>}, {pipeline_mode = #tpu.pipeline_mode<synchronous>, transform_indices = @transform_1, window_bounds = array<i64: 1, 1024>}, {pipeline_mode = #tpu.pipeline_mode<synchronous>, transform_indices = @transform_2, window_bounds = array<i64: 1, 1024>}, {pipeline_mode = #tpu.pipeline_mode<synchronous>, transform_indices = @transform_3, window_bounds = array<i64: 1024, 512>}, {transform_indices = @transform_4, window_bounds = array<i64: 8, 512>}]} {
    %c0 = arith.constant 0 : index
    %c0_0 = arith.constant 0 : index
    %0 = vector.load %arg1[%c0, %c0_0] : memref<8x1024xbf16, #tpu.memory_space<vmem>>, vector<8x1024xbf16>
    %1 = arith.extf %0 : vector<8x1024xbf16> to vector<8x1024xf32>
    %cst = arith.constant dense<0.000000e+00> : vector<8xf32>
    %2 = vector.multi_reduction <add>, %1, %cst [1] : vector<8x1024xf32> to vector<8xf32>
    %3 = vector.shape_cast %2 : vector<8xf32> to vector<8x1xf32>
    %cst_1 = arith.constant 1.024000e+03 : f32
    %4 = vector.broadcast %cst_1 : f32 to vector<8x1xf32>
    %5 = arith.divf %3, %4 : vector<8x1xf32>
    %6 = vector.broadcast %5 : vector<8x1xf32> to vector<8x1024xf32>
    %7 = arith.subf %1, %6 : vector<8x1024xf32>
    %8 = arith.mulf %7, %7 : vector<8x1024xf32>
    %cst_2 = arith.constant dense<0.000000e+00> : vector<8xf32>
    %9 = vector.multi_reduction <add>, %8, %cst_2 [1] : vector<8x1024xf32> to vector<8xf32>
    %10 = vector.shape_cast %9 : vector<8xf32> to vector<8x1xf32>
    %cst_3 = arith.constant 1.024000e+03 : f32
    %11 = vector.broadcast %cst_3 : f32 to vector<8x1xf32>
    %12 = arith.divf %10, %11 : vector<8x1xf32>
    %13 = vector.broadcast %5 : vector<8x1xf32> to vector<8x1024xf32>
    %14 = arith.subf %1, %13 : vector<8x1024xf32>
    %cst_4 = arith.constant 9.99999974E-6 : f32
    %15 = vector.broadcast %cst_4 : f32 to vector<8x1xf32>
    %16 = arith.addf %12, %15 : vector<8x1xf32>
    %17 = math.rsqrt %16 : vector<8x1xf32>
    %18 = vector.broadcast %17 : vector<8x1xf32> to vector<8x1024xf32>
    %19 = arith.mulf %14, %18 : vector<8x1024xf32>
    %c0_5 = arith.constant 0 : index
    %c0_6 = arith.constant 0 : index
    %20 = vector.load %arg2[%c0_5, %c0_6] : memref<1x1024xf32, #tpu.memory_space<vmem>>, vector<1x1024xf32>
    %21 = vector.broadcast %20 : vector<1x1024xf32> to vector<8x1024xf32>
    %22 = arith.mulf %19, %21 : vector<8x1024xf32>
    %c0_7 = arith.constant 0 : index
    %c0_8 = arith.constant 0 : index
    %23 = vector.load %arg3[%c0_7, %c0_8] : memref<1x1024xf32, #tpu.memory_space<vmem>>, vector<1x1024xf32>
    %24 = vector.broadcast %23 : vector<1x1024xf32> to vector<8x1024xf32>
    %25 = arith.addf %22, %24 : vector<8x1024xf32>
    %26 = arith.truncf %25 : vector<8x1024xf32> to vector<8x1024xbf16>
    %c0_9 = arith.constant 0 : index
    %c0_10 = arith.constant 0 : index
    %27 = vector.load %arg4[%c0_9, %c0_10] : memref<1024x512xbf16, #tpu.memory_space<vmem>>, vector<1024x512xbf16>
    %cst_11 = arith.constant dense<0.000000e+00> : vector<8x512xf32>
    %28 = tpu.matmul %26, %27, %cst_11 {dimension_numbers = #tpu.dot_dimension_numbers<[1], [0], [0], [1], [0, 0, 1, 1], [], []>} : vector<8x1024xbf16>, vector<1024x512xbf16>, vector<8x512xf32> -> vector<8x512xf32>
    %29 = arith.truncf %28 : vector<8x512xf32> to vector<8x512xbf16>
    %c0_12 = arith.constant 0 : index
    %c0_13 = arith.constant 0 : index
    %30 = vector.load %arg5[%c0_12, %c0_13] : memref<8x512xbf16, #tpu.memory_space<vmem>>, vector<8x512xbf16>
    tpu.vector_store %arg5[%c0_12, %c0_13], %29 {strides = array<i32>} : memref<8x512xbf16, #tpu.memory_space<vmem>>, vector<8x512xbf16>,
    return
  }
  func.func @transform_0(%arg0: i32) -> (i32, i32) {
    %c0_i32 = arith.constant 0 : i32
    %c0_i32_0 = arith.constant 0 : i32
    return %arg0, %c0_i32 : i32, i32
  }
  func.func @transform_1(%arg0: i32) -> (i32, i32) {
    %c0_i32 = arith.constant 0 : i32
    %c0_i32_0 = arith.constant 0 : i32
    %c0_i32_1 = arith.constant 0 : i32
    return %c0_i32, %c0_i32_0 : i32, i32
  }
  func.func @transform_2(%arg0: i32) -> (i32, i32) {
    %c0_i32 = arith.constant 0 : i32
    %c0_i32_0 = arith.constant 0 : i32
    %c0_i32_1 = arith.constant 0 : i32
    return %c0_i32, %c0_i32_0 : i32, i32
  }
  func.func @transform_3(%arg0: i32) -> (i32, i32) {
    %c0_i32 = arith.constant 0 : i32
    %c0_i32_0 = arith.constant 0 : i32
    %c0_i32_1 = arith.constant 0 : i32
    return %c0_i32, %c0_i32_0 : i32, i32
  }
  func.func @transform_4(%arg0: i32) -> (i32, i32) {
    %c0_i32 = arith.constant 0 : i32
    %c0_i32_0 = arith.constant 0 : i32
    return %arg0, %c0_i32 : i32, i32
  }
}

</mosaic_0001>

<llo_original>
// kernel: downsample_forward.5
$region0: #{downsample_forward.5}
  #allocation0 [shape = 'u32[]', space=smem, size = 0x4, offset = 0x4, fixed_abs, tag = 'smem constant byte address 0x4 - core index']
  #allocation1 [shape = 'u32[72,128]{1,0:T(1,128)}', space=vmem, size = 0x9000, scoped, tag = 'internal scratch']
  %s0 = inlined_call_operand.vmem [shape: bf16[128,64], index: 0, kind: input, shape index: {}]
  %s1 = inlined_call_operand.vmem [shape: bf16[64,128], index: 1, kind: input, shape index: {}]
  %s2 = inlined_call_operand.vmem [shape: f32[1,128], index: 2, kind: input, shape index: {}]
  %s3 = inlined_call_operand.vmem [shape: f32[1,128], index: 3, kind: input, shape index: {}]
  %s4 = inlined_call_operand.vmem [shape: f32[1,128], index: 4, kind: input, shape index: {}]
  %s5 = inlined_call_operand.vmem [shape: bf16[128,128], index: 5, kind: output, shape index: {}]
  %s6 = sld [smem:[#allocation0]]
  $region53: #{downsample_forward.5} parent=0
    _
  %s8 = ssub.s32 1, %s6
  %s9 = scalar_select 0, %s8, %s6
  loop: start=0, step=1, limit=4
  $region2: #{downsample_forward.5} parent=0 // loop_pre_header
    _
  $region3: #{downsample_forward.5} parent=0 // loop_header
    %s11 = sphi 0, %s15
    %p12 = scmp.ge.s32.totalorder %s11, 4
    %s21 = sphi 0, %s23
    %s24 = sphi 0, %s21
    %s25 = sphi 0, %s24
    %s41 = sphi 0, %s25
    %s45 = sphi 0, %s45
    %s47 = sphi 0, %s45
    %s48 = sphi 0, %s47
    %s62 = sphi 0, %s48
    %s66 = sphi 0, %s66
    %s68 = sphi 0, %s66
    %s69 = sphi 0, %s68
    %s83 = sphi 0, %s69
    %s87 = sphi 0, %s87
    %s89 = sphi 0, %s87
    %s90 = sphi 0, %s89
    %s104 = sphi 0, %s90
    %s108 = sphi 0, %s108
    %s110 = sphi 0, %s108
    %s111 = sphi 0, %s110
    %s125 = sphi 0, %s111
    %s131 = sphi 0, %s133
    %s134 = sphi 0, %s131
    %s135 = sphi 0, %s134
    %s151 = sphi 0, %s135
  $region4: #{downsample_forward.5} parent=0 // loop_header_branch
    %14 = sbr.rel (%p12) target = $region8
  $region5: #{downsample_forward.5} parent=0 // loop_body
    %s16 = ssub.s32 %s11, 1
    %s17 = ssub.s32 %s11, 2
    %s18 = sadd.s32 %s11, 1
    %s19 = ssub.s32 %s11, %s18
    %p20 = scmp.eq.s32.totalorder %s19, 0
    %s22 = sadd.s32 %s21, 1
    %s23 = scalar_select %p20, %s21, %s22
    %p26 = pneg %p20
    %p27 = scmp.eq.s32.totalorder %s11, 1
    %p28 = por %p26, %p27
    %p29 = scmp.ne.s32.totalorder %s21, %s24
    %p30 = scmp.eq.s32.totalorder %s11, 0
    %p31 = por %p29, %p30
    %p32 = scmp.ne.s32.totalorder %s21, %s24
    %p33 = scmp.eq.s32.totalorder %s16, 1
    %p34 = por %p32, %p33
    %p35 = scmp.ne.s32.totalorder %s24, %s25
    %p36 = scmp.eq.s32.totalorder %s16, 0
    %p37 = por %p35, %p36
    %p38 = scmp.ne.s32.totalorder %s24, %s25
    %p39 = scmp.eq.s32.totalorder %s17, 1
    %p40 = por %p38, %p39
    %p42 = scmp.ne.s32.totalorder %s25, %s41
    %p43 = scmp.eq.s32.totalorder %s17, 0
    %p44 = por %p42, %p43
    %s46 = sadd.s32 %s45, 1
    %p49 = scmp.eq.s32.totalorder %s11, 1
    %p50 = scmp.ne.s32.totalorder %s45, %s47
    %p51 = scmp.eq.s32.totalorder %s11, 0
    %p52 = por %p50, %p51
    %p53 = scmp.ne.s32.totalorder %s45, %s47
    %p54 = scmp.eq.s32.totalorder %s16, 1
    %p55 = por %p53, %p54
    %p56 = scmp.ne.s32.totalorder %s47, %s48
    %p57 = scmp.eq.s32.totalorder %s16, 0
    %p58 = por %p56, %p57
    %p59 = scmp.ne.s32.totalorder %s47, %s48
    %p60 = scmp.eq.s32.totalorder %s17, 1
    %p61 = por %p59, %p60
    %p63 = scmp.ne.s32.totalorder %s48, %s62
    %p64 = scmp.eq.s32.totalorder %s17, 0
    %p65 = por %p63, %p64
    %s67 = sadd.s32 %s66, 1
    %p70 = scmp.eq.s32.totalorder %s11, 1
    %p71 = scmp.ne.s32.totalorder %s66, %s68
    %p72 = scmp.eq.s32.totalorder %s11, 0
    %p73 = por %p71, %p72
    %p74 = scmp.ne.s32.totalorder %s66, %s68
    %p75 = scmp.eq.s32.totalorder %s16, 1
    %p76 = por %p74, %p75
    %p77 = scmp.ne.s32.totalorder %s68, %s69
    %p78 = scmp.eq.s32.totalorder %s16, 0
    %p79 = por %p77, %p78
    %p80 = scmp.ne.s32.totalorder %s68, %s69
    %p81 = scmp.eq.s32.totalorder %s17, 1
    %p82 = por %p80, %p81
    %p84 = scmp.ne.s32.totalorder %s69, %s83
    %p85 = scmp.eq.s32.totalorder %s17, 0
    %p86 = por %p84, %p85
    %s88 = sadd.s32 %s87, 1
    %p91 = scmp.eq.s32.totalorder %s11, 1
    %p92 = scmp.ne.s32.totalorder %s87, %s89
    %p93 = scmp.eq.s32.totalorder %s11, 0
    %p94 = por %p92, %p93
    %p95 = scmp.ne.s32.totalorder %s87, %s89
    %p96 = scmp.eq.s32.totalorder %s16, 1
    %p97 = por %p95, %p96
    %p98 = scmp.ne.s32.totalorder %s89, %s90
    %p99 = scmp.eq.s32.totalorder %s16, 0
    %p100 = por %p98, %p99
    %p101 = scmp.ne.s32.totalorder %s89, %s90
    %p102 = scmp.eq.s32.totalorder %s17, 1
    %p103 = por %p101, %p102
    %p105 = scmp.ne.s32.totalorder %s90, %s104
    %p106 = scmp.eq.s32.totalorder %s17, 0
    %p107 = por %p105, %p106
    %s109 = sadd.s32 %s108, 1
    %p112 = scmp.eq.s32.totalorder %s11, 1
    %p113 = scmp.ne.s32.totalorder %s108, %s110
    %p114 = scmp.eq.s32.totalorder %s11, 0
    %p115 = por %p113, %p114
    %p116 = scmp.ne.s32.totalorder %s108, %s110
    %p117 = scmp.eq.s32.totalorder %s16, 1
    %p118 = por %p116, %p117
    %p119 = scmp.ne.s32.totalorder %s110, %s111
    %p120 = scmp.eq.s32.totalorder %s16, 0
    %p121 = por %p119, %p120
    %p122 = scmp.ne.s32.totalorder %s110, %s111
    %p123 = scmp.eq.s32.totalorder %s17, 1
    %p124 = por %p122, %p123
    %p126 = scmp.ne.s32.totalorder %s111, %s125
    %p127 = scmp.eq.s32.totalorder %s17, 0
    %p128 = por %p126, %p127
    %s129 = ssub.s32 %s11, %s18
    %p130 = scmp.eq.s32.totalorder %s129, 0
    %s132 = sadd.s32 %s131, 1
    %s133 = scalar_select %p130, %s131, %s132
    %p136 = pneg %p130
    %p137 = scmp.eq.s32.totalorder %s11, 1
    %p138 = por %p136, %p137
    %p139 = scmp.ne.s32.totalorder %s131, %s134
    %p140 = scmp.eq.s32.totalorder %s11, 0
    %p141 = por %p139, %p140
    %p142 = scmp.ne.s32.totalorder %s131, %s134
    %p143 = scmp.eq.s32.totalorder %s16, 1
    %p144 = por %p142, %p143
    %p145 = scmp.ne.s32.totalorder %s134, %s135
    %p146 = scmp.eq.s32.totalorder %s16, 0
    %p147 = por %p145, %p146
    %p148 = scmp.ne.s32.totalorder %s134, %s135
    %p149 = scmp.eq.s32.totalorder %s17, 1
    %p150 = por %p148, %p149
    %p152 = scmp.ne.s32.totalorder %s135, %s151
    %p153 = scmp.eq.s32.totalorder %s17, 0
    %p154 = por %p152, %p153
    %p155 = scmp.le.s32.totalorder 1, %s11
    %p156 = scmp.lt.s32.totalorder %s11, 3
    %p157 = pnand %p155, %p156
    %p158 = pneg %p157
    // Predicated region
    $region9: #{downsample_forward.5} parent=5 // pred_check
      _
    $region10: #{downsample_forward.5} parent=5 // pred_check_branch
      %160 = sbr.rel (%p157) target = $region12
    $region11: #{downsample_forward.5} parent=5 // pred_region
      %s161 = ssub.s32 %s11, 1
      // Predicated region
      $region13: #{downsample_forward.5} parent=11 // pred_check
        %p162 = pneg %p58
      $region14: #{downsample_forward.5} parent=11 // pred_check_branch
        %164 = sbr.rel (%p162) target = $region16
      $region15: #{downsample_forward.5} parent=11 // pred_region
        _
      $region16: #{downsample_forward.5} parent=11 // pred_fallthru
        _
      // Predicated region
      $region17: #{downsample_forward.5} parent=11 // pred_check
        %p165 = pneg %p79
      $region18: #{downsample_forward.5} parent=11 // pred_check_branch
        %167 = sbr.rel (%p165) target = $region20
      $region19: #{downsample_forward.5} parent=11 // pred_region
        _
      $region20: #{downsample_forward.5} parent=11 // pred_fallthru
        _
      // Predicated region
      $region21: #{downsample_forward.5} parent=11 // pred_check
        %p168 = pneg %p100
      $region22: #{downsample_forward.5} parent=11 // pred_check_branch
        %170 = sbr.rel (%p168) target = $region24
      $region23: #{downsample_forward.5} parent=11 // pred_region
        _
      $region24: #{downsample_forward.5} parent=11 // pred_fallthru
        _
      // Predicated region
      $region25: #{downsample_forward.5} parent=11 // pred_check
        %p171 = pneg %p121
      $region26: #{downsample_forward.5} parent=11 // pred_check_branch
        %173 = sbr.rel (%p171) target = $region28
      $region27: #{downsample_forward.5} parent=11 // pred_region
        _
      $region28: #{downsample_forward.5} parent=11 // pred_fallthru
        _
    $region12: #{downsample_forward.5} parent=5 // pred_fallthru
      _
    %p174 = scmp.lt.s32.totalorder %s11, 2
    // Predicated region
    $region29: #{downsample_forward.5} parent=5 // pred_check
      %p175 = pneg %p174
    $region30: #{downsample_forward.5} parent=5 // pred_check_branch
      %177 = sbr.rel (%p175) target = $region32
    $region31: #{downsample_forward.5} parent=5 // pred_region
      // Predicated region
      $region33: #{downsample_forward.5} parent=31 // pred_check
        %p178 = pneg %p31
      $region34: #{downsample_forward.5} parent=31 // pred_check_branch
        %180 = sbr.rel (%p178) target = $region36
      $region35: #{downsample_forward.5} parent=31 // pred_region
        %s181 = smul.u32 8, %s11
        %p182 = scmp.lt.s32.totalorder %s181, 15
        %s183 = scalar_select %p182, %s181, 15
        %s184 = smul.addr %s183, 4
        %s185 = scalar_lea.vmem %s0, %s184
        %s186 = smul.u32 8, %s11
      $region36: #{downsample_forward.5} parent=31 // pred_fallthru
        _
    $region32: #{downsample_forward.5} parent=5 // pred_fallthru
      _
    %p187 = scmp.le.s32.totalorder 1, %s11
    %p188 = scmp.lt.s32.totalorder %s11, 3
    %p189 = pnand %p187, %p188
    %p190 = pneg %p189
    // Predicated region
    $region37: #{downsample_forward.5} parent=5 // pred_check
      _
    $region38: #{downsample_forward.5} parent=5 // pred_check_branch
      %192 = sbr.rel (%p189) target = $region40
    $region39: #{downsample_forward.5} parent=5 // pred_region
      %s193 = ssub.s32 %s11, 1
      %s194 = smul.u32 8, %s16
      %p195 = scmp.lt.s32.totalorder %s194, 15
      %s196 = scalar_select %p195, %s194, 15
      %s197 = smul.addr %s196, 4
      %s198 = scalar_lea.vmem %s0, %s197
      %p199 = pneg %p37
      %p200 = pneg %p34
      %p201 = pneg %p58
      %p202 = pneg %p55
      %p203 = pneg %p79
      %p204 = pneg %p76
      %p205 = pneg %p100
      %p206 = pneg %p97
      %p207 = pneg %p121
      %p208 = pneg %p118
      %p209 = pneg %p147
      %p210 = pneg %p144
      %s211 = smul.u32 8, %s16
      %p212 = scmp.lt.s32.totalorder %s211, 15
      %s213 = scalar_select %p212, %s211, 15
      %s214 = smul.addr %s213, 4
      %s215 = scalar_lea.vmem %s5, %s214
      %s216 = smul.u32 8, %s16
      %p217 = scmp.lt.s32.totalorder %s216, 15
      %s218 = scalar_select %p217, %s216, 15
      %s219 = smul.addr %s218, 4
      %s220 = scalar_lea.vmem %s0, %s219
      %s221 = smul.u32 8, %s16
      %s222 = smul.u32 8, %s16
      %p223 = scmp.lt.s32.totalorder %s222, 15
      %s224 = scalar_select %p223, %s222, 15
      %s225 = smul.addr %s224, 4
      %s226 = scalar_lea.vmem %s5, %s225
      %s227 = smul.u32 8, %s16
      %v229 = vld [vmem:[%s220] sm:$0xf]
      %v230 = vld [vmem:[%s220 + $0x4] sm:$0xf]
      %v231 = vld [vmem:[%s220 + $0x8] sm:$0xf]
      %v232 = vld [vmem:[%s220 + $0xc] sm:$0xf]
      %v233 = vld [vmem:[%s220 + $0x10] sm:$0xf]
      %v234 = vld [vmem:[%s220 + $0x14] sm:$0xf]
      %v235 = vld [vmem:[%s220 + $0x18] sm:$0xf]
      %v236 = vld [vmem:[%s220 + $0x1c] sm:$0xf]
      %v237 = vld [vmem:[%s1] sm:$0xf]
      %v238 = vld [vmem:[%s1 + $0x4] sm:$0xf]
      %v239 = vld [vmem:[%s1 + $0x8] sm:$0xf]
      %v240 = vld [vmem:[%s1 + $0xc] sm:$0xf]
      %v241 = vld [vmem:[%s1 + $0x10] sm:$0xf]
      %v242 = vld [vmem:[%s1 + $0x14] sm:$0xf]
      %v243 = vld [vmem:[%s1 + $0x18] sm:$0xf]
      %v244 = vld [vmem:[%s1 + $0x1c] sm:$0xf]
      %v245 = vld [vmem:[%s2] sm:$0x1]
      %v247 = vperm.slane %v245, 0
      %v257 = vunpack.c.l.b16 %v229
      %v258 = vunpack.c.l.b16 %v230
      %v259 = vunpack.c.l.b16 %v231
      %v260 = vunpack.c.l.b16 %v232
      %v261 = vunpack.c.l.b16 %v233
      %v262 = vunpack.c.l.b16 %v234
      %v263 = vunpack.c.l.b16 %v235
      %v264 = vunpack.c.l.b16 %v236
      %v265 = vpack.c.b16 %v258, %v257
      %v266 = vpack.c.b16 %v260, %v259
      %v267 = vpack.c.b16 %v262, %v261
      %v268 = vpack.c.b16 %v264, %v263
      %v277 = vunpack.c.l.b16 %v237
      %v278 = vunpack.c.l.b16 %v238
      %v279 = vunpack.c.l.b16 %v239
      %v280 = vunpack.c.l.b16 %v240
      %v281 = vunpack.c.l.b16 %v241
      %v282 = vunpack.c.l.b16 %v242
      %v283 = vunpack.c.l.b16 %v243
      %v284 = vunpack.c.l.b16 %v244
      %v285 = vpack.c.b16 %v278, %v277
      %v286 = vpack.c.b16 %v280, %v279
      %v287 = vpack.c.b16 %v282, %v281
      %v288 = vpack.c.b16 %v284, %v283
      %vm293 = vcmask 523264
      %v295 = vsel %vm293, %v265, 0
      %v298 = vsel %vm293, %v266, 0
      %v301 = vsel %vm293, %v267, 0
      %v304 = vsel %vm293, %v268, 0
      %306 = vmatpush.bf16.msra.mxu0 0
      %307 = vmatpush.bf16.msra.mxu0 0
      %308 = vmatpush.bf16.msra.mxu0 0
      %309 = vmatpush.bf16.msra.mxu0 0
      %310 = vmatpush.bf16.msra.mxu0 %v288
      %311 = vmatpush.bf16.msra.mxu0 %v287
      %312 = vmatpush.bf16.msra.mxu0 %v286
      %313 = vmatpush.bf16.msra.mxu0 %v285
      %314 = vmatmul.bf16.gmra.mxu0 %v295
      %v315 = vpop.f32.mrf.mxu0
      %v316 = vadd.f32 %v247, %v315
      %v317 = vpop.f32.mrf.mxu0
      %v318 = vadd.f32 %v247, %v317
      %319 = vmatmul.bf16.gmra.mxu0 %v298
      %v320 = vpop.f32.mrf.mxu0
      %v321 = vadd.f32 %v247, %v320
      %v322 = vpop.f32.mrf.mxu0
      %v323 = vadd.f32 %v247, %v322
      %324 = vmatmul.bf16.gmra.mxu0 %v301
      %v325 = vpop.f32.mrf.mxu0
      %v326 = vadd.f32 %v247, %v325
      %v327 = vpop.f32.mrf.mxu0
      %v328 = vadd.f32 %v247, %v327
      %329 = vmatmul.bf16.gmra.mxu0 %v304
      %v330 = vpop.f32.mrf.mxu0
      %v331 = vadd.f32 %v247, %v330
      %v332 = vpop.f32.mrf.mxu0
      %v333 = vadd.f32 %v247, %v332
      %334 = vdwg.mxu0
      %335 = vadd.xlane.f32.xlu0 %v316
      %v336 = vpop.xlane.xlu0 %335
      %337 = vadd.xlane.f32.xlu0 %v318
      %v338 = vpop.xlane.xlu0 %337
      %339 = vadd.xlane.f32.xlu0 %v321
      %v340 = vpop.xlane.xlu0 %339
      %341 = vadd.xlane.f32.xlu0 %v323
      %v342 = vpop.xlane.xlu0 %341
      %343 = vadd.xlane.f32.xlu0 %v326
      %v344 = vpop.xlane.xlu0 %343
      %345 = vadd.xlane.f32.xlu0 %v328
      %v346 = vpop.xlane.xlu0 %345
      %347 = vadd.xlane.f32.xlu0 %v331
      %v348 = vpop.xlane.xlu0 %347
      %349 = vadd.xlane.f32.xlu0 %v333
      %v350 = vpop.xlane.xlu0 %349
      %v351 = vrcp.pop 128.0
      %v352 = vmul.f32 128.0, %v351
      %v353 = vsub.f32 1.0, %v352
      %v354 = vmul.f32 %v351, %v353
      %v355 = vadd.f32 %v351, %v354
      %vm356 = vweird.f32 %v351
      %v357 = vsel %vm356, %v351, %v355
      %v358 = vmul.f32 %v336, %v357
      %v359 = vmul.f32 %v338, %v357
      %v360 = vmul.f32 %v340, %v357
      %v361 = vmul.f32 %v342, %v357
      %v362 = vmul.f32 %v344, %v357
      %v363 = vmul.f32 %v346, %v357
      %v364 = vmul.f32 %v348, %v357
      %v365 = vmul.f32 %v350, %v357
      %v366 = vsub.f32 %v316, %v358
      %v367 = vsub.f32 %v318, %v359
      %v368 = vsub.f32 %v321, %v360
      %v369 = vsub.f32 %v323, %v361
      %v370 = vsub.f32 %v326, %v362
      %v371 = vsub.f32 %v328, %v363
      %v372 = vsub.f32 %v331, %v364
      %v373 = vsub.f32 %v333, %v365
      %v374 = vmul.f32 %v366, %v366
      %v375 = vmul.f32 %v367, %v367
      %v376 = vmul.f32 %v368, %v368
      %v377 = vmul.f32 %v369, %v369
      %v378 = vmul.f32 %v370, %v370
      %v379 = vmul.f32 %v371, %v371
      %v380 = vmul.f32 %v372, %v372
      %v381 = vmul.f32 %v373, %v373
      %382 = vadd.xlane.f32.xlu0 %v374
      %v383 = vpop.xlane.xlu0 %382
      %384 = vadd.xlane.f32.xlu0 %v375
      %v385 = vpop.xlane.xlu0 %384
      %386 = vadd.xlane.f32.xlu0 %v376
      %v387 = vpop.xlane.xlu0 %386
      %388 = vadd.xlane.f32.xlu0 %v377
      %v389 = vpop.xlane.xlu0 %388
      %390 = vadd.xlane.f32.xlu0 %v378
      %v391 = vpop.xlane.xlu0 %390
      %392 = vadd.xlane.f32.xlu0 %v379
      %v393 = vpop.xlane.xlu0 %392
      %394 = vadd.xlane.f32.xlu0 %v380
      %v395 = vpop.xlane.xlu0 %394
      %396 = vadd.xlane.f32.xlu0 %v381
      %v397 = vpop.xlane.xlu0 %396
      %v398 = vmul.f32 %v383, %v357
      %v399 = vmul.f32 %v385, %v357
      %v400 = vmul.f32 %v387, %v357
      %v401 = vmul.f32 %v389, %v357
      %v402 = vmul.f32 %v391, %v357
      %v403 = vmul.f32 %v393, %v357
      %v404 = vmul.f32 %v395, %v357
      %v405 = vmul.f32 %v397, %v357
      %v406 = vadd.f32 %v398, 1e-05
      %v407 = vadd.f32 %v399, 1e-05
      %v408 = vadd.f32 %v400, 1e-05
      %v409 = vadd.f32 %v401, 1e-05
      %v410 = vadd.f32 %v402, 1e-05
      %v411 = vadd.f32 %v403, 1e-05
      %v412 = vadd.f32 %v404, 1e-05
      %v413 = vadd.f32 %v405, 1e-05
      %v414 = vrsqrt.pop %v406
      %v415 = vmul.f32 %v414, %v406
      %v416 = vmul.f32 %v415, %v414
      %v417 = vmul.f32 0.5, %v416
      %v418 = vsub.f32 1.5, %v417
      %v419 = vmul.f32 %v414, %v418
      %vm420 = vweird.f32 %v406
      %vm421 = vweird.f32 %v414
      %vm422 = vmor %vm420, %vm421
      %v423 = vsel %vm422, %v414, %v419
      %v424 = vrsqrt.pop %v407
      %v425 = vmul.f32 %v424, %v407
      %v426 = vmul.f32 %v425, %v424
      %v427 = vmul.f32 0.5, %v426
      %v428 = vsub.f32 1.5, %v427
      %v429 = vmul.f32 %v424, %v428
      %vm430 = vweird.f32 %v407
      %vm431 = vweird.f32 %v424
      %vm432 = vmor %vm430, %vm431
      %v433 = vsel %vm432, %v424, %v429
      %v434 = vrsqrt.pop %v408
      %v435 = vmul.f32 %v434, %v408
      %v436 = vmul.f32 %v435, %v434
      %v437 = vmul.f32 0.5, %v436
      %v438 = vsub.f32 1.5, %v437
      %v439 = vmul.f32 %v434, %v438
      %vm440 = vweird.f32 %v408
      %vm441 = vweird.f32 %v434
      %vm442 = vmor %vm440, %vm441
      %v443 = vsel %vm442, %v434, %v439
      %v444 = vrsqrt.pop %v409
      %v445 = vmul.f32 %v444, %v409
      %v446 = vmul.f32 %v445, %v444
      %v447 = vmul.f32 0.5, %v446
      %v448 = vsub.f32 1.5, %v447
      %v449 = vmul.f32 %v444, %v448
      %vm450 = vweird.f32 %v409
      %vm451 = vweird.f32 %v444
      %vm452 = vmor %vm450, %vm451
      %v453 = vsel %vm452, %v444, %v449
      %v454 = vrsqrt.pop %v410
      %v455 = vmul.f32 %v454, %v410
      %v456 = vmul.f32 %v455, %v454
      %v457 = vmul.f32 0.5, %v456
      %v458 = vsub.f32 1.5, %v457
      %v459 = vmul.f32 %v454, %v458
      %vm460 = vweird.f32 %v410
      %vm461 = vweird.f32 %v454
      %vm462 = vmor %vm460, %vm461
      %v463 = vsel %vm462, %v454, %v459
      %v464 = vrsqrt.pop %v411
      %v465 = vmul.f32 %v464, %v411
      %v466 = vmul.f32 %v465, %v464
      %v467 = vmul.f32 0.5, %v466
      %v468 = vsub.f32 1.5, %v467
      %v469 = vmul.f32 %v464, %v468
      %vm470 = vweird.f32 %v411
      %vm471 = vweird.f32 %v464
      %vm472 = vmor %vm470, %vm471
      %v473 = vsel %vm472, %v464, %v469
      %v474 = vrsqrt.pop %v412
      %v475 = vmul.f32 %v474, %v412
      %v476 = vmul.f32 %v475, %v474
      %v477 = vmul.f32 0.5, %v476
      %v478 = vsub.f32 1.5, %v477
      %v479 = vmul.f32 %v474, %v478
      %vm480 = vweird.f32 %v412
      %vm481 = vweird.f32 %v474
      %vm482 = vmor %vm480, %vm481
      %v483 = vsel %vm482, %v474, %v479
      %v484 = vrsqrt.pop %v413
      %v485 = vmul.f32 %v484, %v413
      %v486 = vmul.f32 %v485, %v484
      %v487 = vmul.f32 0.5, %v486
      %v488 = vsub.f32 1.5, %v487
      %v489 = vmul.f32 %v484, %v488
      %vm490 = vweird.f32 %v413
      %vm491 = vweird.f32 %v484
      %vm492 = vmor %vm490, %vm491
      %v493 = vsel %vm492, %v484, %v489
      %v494 = vmul.f32 %v366, %v423
      %v495 = vmul.f32 %v367, %v433
      %v496 = vmul.f32 %v368, %v443
      %v497 = vmul.f32 %v369, %v453
      %v498 = vmul.f32 %v370, %v463
      %v499 = vmul.f32 %v371, %v473
      %v500 = vmul.f32 %v372, %v483
      %v501 = vmul.f32 %v373, %v493
      %v502 = vld [vmem:[%s3] sm:$0x1]
      %v504 = vperm.slane %v502, 0
      %v506 = vmul.f32 %v494, %v504
      %v507 = vmul.f32 %v495, %v504
      %v508 = vmul.f32 %v496, %v504
      %v509 = vmul.f32 %v497, %v504
      %v510 = vmul.f32 %v498, %v504
      %v511 = vmul.f32 %v499, %v504
      %v512 = vmul.f32 %v500, %v504
      %v513 = vmul.f32 %v501, %v504
      %v514 = vld [vmem:[%s4] sm:$0x1]
      %v516 = vperm.slane %v514, 0
      %v518 = vadd.f32 %v506, %v516
      %v519 = vadd.f32 %v507, %v516
      %v520 = vadd.f32 %v508, %v516
      %v521 = vadd.f32 %v509, %v516
      %v522 = vadd.f32 %v510, %v516
      %v523 = vadd.f32 %v511, %v516
      %v524 = vadd.f32 %v512, %v516
      %v525 = vadd.f32 %v513, %v516
      %v526 = vpack.c.bf16 %v518, %v518
      %v527 = vpack.c.bf16 %v519, %v519
      %v528 = vpack.c.bf16 %v520, %v520
      %v529 = vpack.c.bf16 %v521, %v521
      %v530 = vpack.c.bf16 %v522, %v522
      %v531 = vpack.c.bf16 %v523, %v523
      %v532 = vpack.c.bf16 %v524, %v524
      %v533 = vpack.c.bf16 %v525, %v525
      %534 = vst [vmem:[%s226] sm:$0xf] %v526
      %535 = vst [vmem:[%s226 + $0x4] sm:$0xf] %v527
      %536 = vst [vmem:[%s226 + $0x8] sm:$0xf] %v528
      %537 = vst [vmem:[%s226 + $0xc] sm:$0xf] %v529
      %538 = vst [vmem:[%s226 + $0x10] sm:$0xf] %v530
      %539 = vst [vmem:[%s226 + $0x14] sm:$0xf] %v531
      %540 = vst [vmem:[%s226 + $0x18] sm:$0xf] %v532
      %541 = vst [vmem:[%s226 + $0x1c] sm:$0xf] %v533
      %s542 = smul.u32 8, %s16
      %p543 = scmp.lt.s32.totalorder %s542, 15
      %s544 = scalar_select %p543, %s542, 15
      %s545 = smul.addr %s544, 4
      %s546 = scalar_lea.vmem %s5, %s545
      // Predicated region
      $region41: #{downsample_forward.5} parent=39 // pred_check
        %p547 = pneg %p144
      $region42: #{downsample_forward.5} parent=39 // pred_check_branch
        %549 = sbr.rel (%p547) target = $region44
      $region43: #{downsample_forward.5} parent=39 // pred_region
        %s550 = smul.u32 8, %s16
      $region44: #{downsample_forward.5} parent=39 // pred_fallthru
        _
    $region40: #{downsample_forward.5} parent=5 // pred_fallthru
      _
    %p551 = scmp.le.s32.totalorder 2, %s11
    // Predicated region
    $region45: #{downsample_forward.5} parent=5 // pred_check
      %p552 = pneg %p551
    $region46: #{downsample_forward.5} parent=5 // pred_check_branch
      %554 = sbr.rel (%p552) target = $region48
    $region47: #{downsample_forward.5} parent=5 // pred_region
      %s555 = ssub.s32 %s11, 2
      // Predicated region
      $region49: #{downsample_forward.5} parent=47 // pred_check
        %p556 = pneg %p150
      $region50: #{downsample_forward.5} parent=47 // pred_check_branch
        %558 = sbr.rel (%p556) target = $region52
      $region51: #{downsample_forward.5} parent=47 // pred_region
        %s559 = smul.u32 8, %s17
        %p560 = scmp.lt.s32.totalorder %s559, 15
        %s561 = scalar_select %p560, %s559, 15
        %s562 = smul.addr %s561, 4
        %s563 = scalar_lea.vmem %s5, %s562
      $region52: #{downsample_forward.5} parent=47 // pred_fallthru
        _
    $region48: #{downsample_forward.5} parent=5 // pred_fallthru
      _
  $region6: #{downsample_forward.5} parent=0 // loop_footer
    %s15 = sadd.s32 1, %s11
  $region7: #{downsample_forward.5} parent=0 // loop_footer_branch
    %10 = sbr.rel target = $region3
  $region8: #{downsample_forward.5} parent=0 // loop_exit
    _

// kernel: downsample_forward.6
$region0: #{downsample_forward.6}
  #allocation0 [shape = 'u32[]', space=smem, size = 0x4, offset = 0x4, fixed_abs, tag = 'smem constant byte address 0x4 - core index']
  #allocation1 [shape = 'u32[72,128]{1,0:T(1,128)}', space=vmem, size = 0x9000, scoped, tag = 'internal scratch']
  %s0 = inlined_call_operand.vmem [shape: bf16[128,128], index: 0, kind: input, shape index: {}]
  %s1 = inlined_call_operand.vmem [shape: f32[128,128], index: 1, kind: input, shape index: {}]
  %s2 = inlined_call_operand.vmem [shape: f32[128,128], index: 2, kind: output, shape index: {0}]
  %s3 = inlined_call_operand.hbm [shape: f32[128,128], index: 3, kind: output, shape index: {1}]
  %4 = xla_tuple %s2, %s3
  %s5 = sld [smem:[#allocation0]]
  $region49: #{downsample_forward.6} parent=0
    _
  %s7 = ssub.s32 1, %s5
  %s8 = scalar_select 0, %s7, %s5
  $region1: #{downsample_forward.6} parent=0
    #allocation2 [shape = 'u8[65536]{0}', space=vmem, size = 0x10000, scoped, tag = 'output window, operand 1']
    #allocation3 [shape = 's32[2]{0}', space=sflag, size = 0x8, scoped, tag = 'scoped memory for downsample_forward.6']
    %9 = vsyncpa [#allocation3], 0
    %s10 = scalar_lea.sflag [#allocation3], 1
    %11 = vsyncpa %s10, 0
    loop: start=0, step=1, limit=4
    $region2: #{downsample_forward.6} parent=1 // loop_pre_header
      _
    $region3: #{downsample_forward.6} parent=1 // loop_header
      %s13 = sphi 0, %s17
      %p14 = scmp.ge.s32.totalorder %s13, 4
      %s23 = sphi 0, %s25
      %s26 = sphi 0, %s23
      %s27 = sphi 0, %s26
      %s43 = sphi 0, %s27
      %s49 = sphi 0, %s51
      %s52 = sphi 0, %s49
      %s53 = sphi 0, %s52
      %s69 = sphi 0, %s53
      %s75 = sphi 0, %s77
      %s78 = sphi 0, %s75
      %s79 = sphi 0, %s78
      %s95 = sphi 0, %s79
      %s101 = sphi 0, %s103
      %s104 = sphi 0, %s101
      %s105 = sphi 0, %s104
      %s121 = sphi 0, %s105
    $region4: #{downsample_forward.6} parent=1 // loop_header_branch
      %16 = sbr.rel (%p14) target = $region8
    $region5: #{downsample_forward.6} parent=1 // loop_body
      %s18 = ssub.s32 %s13, 1
      %s19 = ssub.s32 %s13, 2
      %s20 = sadd.s32 %s13, 1
      %s21 = ssub.s32 %s13, %s20
      %p22 = scmp.eq.s32.totalorder %s21, 0
      %s24 = sadd.s32 %s23, 1
      %s25 = scalar_select %p22, %s23, %s24
      %p28 = pneg %p22
      %p29 = scmp.eq.s32.totalorder %s13, 1
      %p30 = por %p28, %p29
      %p31 = scmp.ne.s32.totalorder %s23, %s26
      %p32 = scmp.eq.s32.totalorder %s13, 0
      %p33 = por %p31, %p32
      %p34 = scmp.ne.s32.totalorder %s23, %s26
      %p35 = scmp.eq.s32.totalorder %s18, 1
      %p36 = por %p34, %p35
      %p37 = scmp.ne.s32.totalorder %s26, %s27
      %p38 = scmp.eq.s32.totalorder %s18, 0
      %p39 = por %p37, %p38
      %p40 = scmp.ne.s32.totalorder %s26, %s27
      %p41 = scmp.eq.s32.totalorder %s19, 1
      %p42 = por %p40, %p41
      %p44 = scmp.ne.s32.totalorder %s27, %s43
      %p45 = scmp.eq.s32.totalorder %s19, 0
      %p46 = por %p44, %p45
      %s47 = ssub.s32 %s13, %s20
      %p48 = scmp.eq.s32.totalorder %s47, 0
      %s50 = sadd.s32 %s49, 1
      %s51 = scalar_select %p48, %s49, %s50
      %p54 = pneg %p48
      %p55 = scmp.eq.s32.totalorder %s13, 1
      %p56 = por %p54, %p55
      %p57 = scmp.ne.s32.totalorder %s49, %s52
      %p58 = scmp.eq.s32.totalorder %s13, 0
      %p59 = por %p57, %p58
      %p60 = scmp.ne.s32.totalorder %s49, %s52
      %p61 = scmp.eq.s32.totalorder %s18, 1
      %p62 = por %p60, %p61
      %p63 = scmp.ne.s32.totalorder %s52, %s53
      %p64 = scmp.eq.s32.totalorder %s18, 0
      %p65 = por %p63, %p64
      %p66 = scmp.ne.s32.totalorder %s52, %s53
      %p67 = scmp.eq.s32.totalorder %s19, 1
      %p68 = por %p66, %p67
      %p70 = scmp.ne.s32.totalorder %s53, %s69
      %p71 = scmp.eq.s32.totalorder %s19, 0
      %p72 = por %p70, %p71
      %s73 = ssub.s32 %s13, %s20
      %p74 = scmp.eq.s32.totalorder %s73, 0
      %s76 = sadd.s32 %s75, 1
      %s77 = scalar_select %p74, %s75, %s76
      %p80 = pneg %p74
      %p81 = scmp.eq.s32.totalorder %s13, 1
      %p82 = por %p80, %p81
      %p83 = scmp.ne.s32.totalorder %s75, %s78
      %p84 = scmp.eq.s32.totalorder %s13, 0
      %p85 = por %p83, %p84
      %p86 = scmp.ne.s32.totalorder %s75, %s78
      %p87 = scmp.eq.s32.totalorder %s18, 1
      %p88 = por %p86, %p87
      %p89 = scmp.ne.s32.totalorder %s78, %s79
      %p90 = scmp.eq.s32.totalorder %s18, 0
      %p91 = por %p89, %p90
      %p92 = scmp.ne.s32.totalorder %s78, %s79
      %p93 = scmp.eq.s32.totalorder %s19, 1
      %p94 = por %p92, %p93
      %p96 = scmp.ne.s32.totalorder %s79, %s95
      %p97 = scmp.eq.s32.totalorder %s19, 0
      %p98 = por %p96, %p97
      %s99 = ssub.s32 %s13, %s20
      %p100 = scmp.eq.s32.totalorder %s99, 0
      %s102 = sadd.s32 %s101, 1
      %s103 = scalar_select %p100, %s101, %s102
      %p106 = pneg %p100
      %p107 = scmp.eq.s32.totalorder %s13, 1
      %p108 = por %p106, %p107
      %p109 = scmp.ne.s32.totalorder %s101, %s104
      %p110 = scmp.eq.s32.totalorder %s13, 0
      %p111 = por %p109, %p110
      %p112 = scmp.ne.s32.totalorder %s101, %s104
      %p113 = scmp.eq.s32.totalorder %s18, 1
      %p114 = por %p112, %p113
      %p115 = scmp.ne.s32.totalorder %s104, %s105
      %p116 = scmp.eq.s32.totalorder %s18, 0
      %p117 = por %p115, %p116
      %p118 = scmp.ne.s32.totalorder %s104, %s105
      %p119 = scmp.eq.s32.totalorder %s19, 1
      %p120 = por %p118, %p119
      %p122 = scmp.ne.s32.totalorder %s105, %s121
      %p123 = scmp.eq.s32.totalorder %s19, 0
      %p124 = por %p122, %p123
      %p125 = scmp.le.s32.totalorder 1, %s13
      %p126 = scmp.lt.s32.totalorder %s13, 3
      %p127 = pnand %p125, %p126
      %p128 = pneg %p127
      // Predicated region
      $region9: #{downsample_forward.6} parent=5 // pred_check
        _
      $region10: #{downsample_forward.6} parent=5 // pred_check_branch
        %130 = sbr.rel (%p127) target = $region12
      $region11: #{downsample_forward.6} parent=5 // pred_region
        %s131 = ssub.s32 %s13, 1
      $region12: #{downsample_forward.6} parent=5 // pred_fallthru
        _
      %p132 = scmp.lt.s32.totalorder %s13, 2
      // Predicated region
      $region13: #{downsample_forward.6} parent=5 // pred_check
        %p133 = pneg %p132
      $region14: #{downsample_forward.6} parent=5 // pred_check_branch
        %135 = sbr.rel (%p133) target = $region16
      $region15: #{downsample_forward.6} parent=5 // pred_region
        // Predicated region
        $region17: #{downsample_forward.6} parent=15 // pred_check
          %p136 = pneg %p33
        $region18: #{downsample_forward.6} parent=15 // pred_check_branch
          %138 = sbr.rel (%p136) target = $region20
        $region19: #{downsample_forward.6} parent=15 // pred_region
          %s139 = smul.u32 8, %s13
          %p140 = scmp.lt.s32.totalorder %s139, 15
          %s141 = scalar_select %p140, %s139, 15
          %s142 = smul.addr %s141, 4
          %s143 = scalar_lea.vmem %s0, %s142
          %s144 = smul.u32 8, %s13
        $region20: #{downsample_forward.6} parent=15 // pred_fallthru
          _
        // Predicated region
        $region21: #{downsample_forward.6} parent=15 // pred_check
          %p145 = pneg %p59
        $region22: #{downsample_forward.6} parent=15 // pred_check_branch
          %147 = sbr.rel (%p145) target = $region24
        $region23: #{downsample_forward.6} parent=15 // pred_region
          %s148 = smul.u32 8, %s13
          %p149 = scmp.lt.s32.totalorder %s148, 15
          %s150 = scalar_select %p149, %s148, 15
          %s151 = smul.addr %s150, 8
          %s152 = scalar_lea.vmem %s1, %s151
          %s153 = smul.u32 8, %s13
        $region24: #{downsample_forward.6} parent=15 // pred_fallthru
          _
      $region16: #{downsample_forward.6} parent=5 // pred_fallthru
        _
      %p154 = scmp.le.s32.totalorder 1, %s13
      %p155 = scmp.lt.s32.totalorder %s13, 3
      %p156 = pnand %p154, %p155
      %p157 = pneg %p156
      // Predicated region
      $region25: #{downsample_forward.6} parent=5 // pred_check
        _
      $region26: #{downsample_forward.6} parent=5 // pred_check_branch
        %159 = sbr.rel (%p156) target = $region28
      $region27: #{downsample_forward.6} parent=5 // pred_region
        %s160 = ssub.s32 %s13, 1
        %s161 = smul.u32 8, %s18
        %p162 = scmp.lt.s32.totalorder %s161, 15
        %s163 = scalar_select %p162, %s161, 15
        %s164 = smul.addr %s163, 4
        %s165 = scalar_lea.vmem %s0, %s164
        %p166 = pneg %p39
        %p167 = pneg %p36
        %s168 = smul.u32 8, %s18
        %p169 = scmp.lt.s32.totalorder %s168, 15
        %s170 = scalar_select %p169, %s168, 15
        %s171 = smul.addr %s170, 8
        %s172 = scalar_lea.vmem %s1, %s171
        %p173 = pneg %p65
        %p174 = pneg %p62
        %p175 = pneg %p91
        %p176 = pneg %p88
        %s177 = smul.u32 8, %s18
        %p178 = scmp.lt.s32.totalorder %s177, 15
        %s179 = scalar_select %p178, %s177, 15
        %s180 = smul.addr %s179, 8
        %s181 = scalar_lea.vmem %s2, %s180
        %p182 = pneg %p117
        %p183 = pneg %p114
        %s184 = sand.u32 %s104, 1
        %s185 = scalar_lea.sflag [#allocation3], %s184
        %s186 = sand.u32 %s104, 1
        %s187 = smul.addr %s186, 64
        %s188 = scalar_lea.vmem [#allocation2], %s187
        %s189 = smul.u32 8, %s18
        %p190 = scmp.lt.s32.totalorder %s189, 15
        %s191 = scalar_select %p190, %s189, 15
        %s192 = smul.addr %s191, 4
        %s193 = scalar_lea.vmem %s0, %s192
        %s194 = smul.u32 8, %s18
        %s195 = smul.u32 8, %s18
        %p196 = scmp.lt.s32.totalorder %s195, 15
        %s197 = scalar_select %p196, %s195, 15
        %s198 = smul.addr %s197, 8
        %s199 = scalar_lea.vmem %s1, %s198
        %s200 = smul.u32 8, %s18
        %s201 = smul.u32 8, %s18
        %p202 = scmp.lt.s32.totalorder %s201, 15
        %s203 = scalar_select %p202, %s201, 15
        %s204 = smul.addr %s203, 8
        %s205 = scalar_lea.vmem %s2, %s204
        %s206 = smul.u32 8, %s18
        %s207 = smul.u32 8, %s18
        %v208 = vld [vmem:[%s193] sm:$0xf]
        %v209 = vld [vmem:[%s193 + $0x4] sm:$0xf]
        %v210 = vld [vmem:[%s193 + $0x8] sm:$0xf]
        %v211 = vld [vmem:[%s193 + $0xc] sm:$0xf]
        %v212 = vld [vmem:[%s193 + $0x10] sm:$0xf]
        %v213 = vld [vmem:[%s193 + $0x14] sm:$0xf]
        %v214 = vld [vmem:[%s193 + $0x18] sm:$0xf]
        %v215 = vld [vmem:[%s193 + $0x1c] sm:$0xf]
        %v216 = vunpack.c.l.bf16 %v208
        %v217 = vunpack.c.l.bf16 %v209
        %v218 = vunpack.c.l.bf16 %v210
        %v219 = vunpack.c.l.bf16 %v211
        %v220 = vunpack.c.l.bf16 %v212
        %v221 = vunpack.c.l.bf16 %v213
        %v222 = vunpack.c.l.bf16 %v214
        %v223 = vunpack.c.l.bf16 %v215
        %v224 = vld [vmem:[%s199] sm:$0xff]
        %v225 = vld [vmem:[%s199 + $0x8] sm:$0xff]
        %v226 = vld [vmem:[%s199 + $0x10] sm:$0xff]
        %v227 = vld [vmem:[%s199 + $0x18] sm:$0xff]
        %v228 = vld [vmem:[%s199 + $0x20] sm:$0xff]
        %v229 = vld [vmem:[%s199 + $0x28] sm:$0xff]
        %v230 = vld [vmem:[%s199 + $0x30] sm:$0xff]
        %v231 = vld [vmem:[%s199 + $0x38] sm:$0xff]
        %v232 = vxor.u32 %v216, 2147483648
        %v233 = vxor.u32 %v217, 2147483648
        %v234 = vxor.u32 %v218, 2147483648
        %v235 = vxor.u32 %v219, 2147483648
        %v236 = vxor.u32 %v220, 2147483648
        %v237 = vxor.u32 %v221, 2147483648
        %v238 = vxor.u32 %v222, 2147483648
        %v239 = vxor.u32 %v223, 2147483648
        %v240 = vmul.f32 %v232, 1.442695
        %v241 = vpow.pop %v240
        %v242 = vmul.f32 %v233, 1.442695
        %v243 = vpow.pop %v242
        %v244 = vmul.f32 %v234, 1.442695
        %v245 = vpow.pop %v244
        %v246 = vmul.f32 %v235, 1.442695
        %v247 = vpow.pop %v246
        %v248 = vmul.f32 %v236, 1.442695
        %v249 = vpow.pop %v248
        %v250 = vmul.f32 %v237, 1.442695
        %v251 = vpow.pop %v250
        %v252 = vmul.f32 %v238, 1.442695
        %v253 = vpow.pop %v252
        %v254 = vmul.f32 %v239, 1.442695
        %v255 = vpow.pop %v254
        %v256 = vadd.f32 %v241, 1.0
        %v257 = vadd.f32 %v243, 1.0
        %v258 = vadd.f32 %v245, 1.0
        %v259 = vadd.f32 %v247, 1.0
        %v260 = vadd.f32 %v249, 1.0
        %v261 = vadd.f32 %v251, 1.0
        %v262 = vadd.f32 %v253, 1.0
        %v263 = vadd.f32 %v255, 1.0
        %v264 = vrcp.pop %v256
        %v265 = vmul.f32 %v256, %v264
        %v266 = vsub.f32 1.0, %v265
        %v267 = vmul.f32 %v264, %v266
        %v268 = vadd.f32 %v264, %v267
        %vm269 = vweird.f32 %v256
        %vm270 = vweird.f32 %v264
        %vm271 = vmor %vm269, %vm270
        %v272 = vsel %vm271, %v264, %v268
        %v273 = vand.u32 2147483647, %v256
        %vm274 = vcmp.eq.f32.partialorder %v273, 8.507059e+37
        %v275 = vand.u32 %v256, 2147483648
        %v276 = vor.u32 1.1754944e-38, %v275
        %v277 = vsel %vm274, %v276, %v272
        %v278 = vmul.f32 1.0, %v277
        %v279 = vrcp.pop %v257
        %v280 = vmul.f32 %v257, %v279
        %v281 = vsub.f32 1.0, %v280
        %v282 = vmul.f32 %v279, %v281
        %v283 = vadd.f32 %v279, %v282
        %vm284 = vweird.f32 %v257
        %vm285 = vweird.f32 %v279
        %vm286 = vmor %vm284, %vm285
        %v287 = vsel %vm286, %v279, %v283
        %v288 = vand.u32 2147483647, %v257
        %vm289 = vcmp.eq.f32.partialorder %v288, 8.507059e+37
        %v290 = vand.u32 %v257, 2147483648
        %v291 = vor.u32 1.1754944e-38, %v290
        %v292 = vsel %vm289, %v291, %v287
        %v293 = vmul.f32 1.0, %v292
        %v294 = vrcp.pop %v258
        %v295 = vmul.f32 %v258, %v294
        %v296 = vsub.f32 1.0, %v295
        %v297 = vmul.f32 %v294, %v296
        %v298 = vadd.f32 %v294, %v297
        %vm299 = vweird.f32 %v258
        %vm300 = vweird.f32 %v294
        %vm301 = vmor %vm299, %vm300
        %v302 = vsel %vm301, %v294, %v298
        %v303 = vand.u32 2147483647, %v258
        %vm304 = vcmp.eq.f32.partialorder %v303, 8.507059e+37
        %v305 = vand.u32 %v258, 2147483648
        %v306 = vor.u32 1.1754944e-38, %v305
        %v307 = vsel %vm304, %v306, %v302
        %v308 = vmul.f32 1.0, %v307
        %v309 = vrcp.pop %v259
        %v310 = vmul.f32 %v259, %v309
        %v311 = vsub.f32 1.0, %v310
        %v312 = vmul.f32 %v309, %v311
        %v313 = vadd.f32 %v309, %v312
        %vm314 = vweird.f32 %v259
        %vm315 = vweird.f32 %v309
        %vm316 = vmor %vm314, %vm315
        %v317 = vsel %vm316, %v309, %v313
        %v318 = vand.u32 2147483647, %v259
        %vm319 = vcmp.eq.f32.partialorder %v318, 8.507059e+37
        %v320 = vand.u32 %v259, 2147483648
        %v321 = vor.u32 1.1754944e-38, %v320
        %v322 = vsel %vm319, %v321, %v317
        %v323 = vmul.f32 1.0, %v322
        %v324 = vrcp.pop %v260
        %v325 = vmul.f32 %v260, %v324
        %v326 = vsub.f32 1.0, %v325
        %v327 = vmul.f32 %v324, %v326
        %v328 = vadd.f32 %v324, %v327
        %vm329 = vweird.f32 %v260
        %vm330 = vweird.f32 %v324
        %vm331 = vmor %vm329, %vm330
        %v332 = vsel %vm331, %v324, %v328
        %v333 = vand.u32 2147483647, %v260
        %vm334 = vcmp.eq.f32.partialorder %v333, 8.507059e+37
        %v335 = vand.u32 %v260, 2147483648
        %v336 = vor.u32 1.1754944e-38, %v335
        %v337 = vsel %vm334, %v336, %v332
        %v338 = vmul.f32 1.0, %v337
        %v339 = vrcp.pop %v261
        %v340 = vmul.f32 %v261, %v339
        %v341 = vsub.f32 1.0, %v340
        %v342 = vmul.f32 %v339, %v341
        %v343 = vadd.f32 %v339, %v342
        %vm344 = vweird.f32 %v261
        %vm345 = vweird.f32 %v339
        %vm346 = vmor %vm344, %vm345
        %v347 = vsel %vm346, %v339, %v343
        %v348 = vand.u32 2147483647, %v261
        %vm349 = vcmp.eq.f32.partialorder %v348, 8.507059e+37
        %v350 = vand.u32 %v261, 2147483648
        %v351 = vor.u32 1.1754944e-38, %v350
        %v352 = vsel %vm349, %v351, %v347
        %v353 = vmul.f32 1.0, %v352
        %v354 = vrcp.pop %v262
        %v355 = vmul.f32 %v262, %v354
        %v356 = vsub.f32 1.0, %v355
        %v357 = vmul.f32 %v354, %v356
        %v358 = vadd.f32 %v354, %v357
        %vm359 = vweird.f32 %v262
        %vm360 = vweird.f32 %v354
        %vm361 = vmor %vm359, %vm360
        %v362 = vsel %vm361, %v354, %v358
        %v363 = vand.u32 2147483647, %v262
        %vm364 = vcmp.eq.f32.partialorder %v363, 8.507059e+37
        %v365 = vand.u32 %v262, 2147483648
        %v366 = vor.u32 1.1754944e-38, %v365
        %v367 = vsel %vm364, %v366, %v362
        %v368 = vmul.f32 1.0, %v367
        %v369 = vrcp.pop %v263
        %v370 = vmul.f32 %v263, %v369
        %v371 = vsub.f32 1.0, %v370
        %v372 = vmul.f32 %v369, %v371
        %v373 = vadd.f32 %v369, %v372
        %vm374 = vweird.f32 %v263
        %vm375 = vweird.f32 %v369
        %vm376 = vmor %vm374, %vm375
        %v377 = vsel %vm376, %v369, %v373
        %v378 = vand.u32 2147483647, %v263
        %vm379 = vcmp.eq.f32.partialorder %v378, 8.507059e+37
        %v380 = vand.u32 %v263, 2147483648
        %v381 = vor.u32 1.1754944e-38, %v380
        %v382 = vsel %vm379, %v381, %v377
        %v383 = vmul.f32 1.0, %v382
        %v384 = vtanh.pop %v216
        %v385 = vtanh.pop %v217
        %v386 = vtanh.pop %v218
        %v387 = vtanh.pop %v219
        %v388 = vtanh.pop %v220
        %v389 = vtanh.pop %v221
        %v390 = vtanh.pop %v222
        %v391 = vtanh.pop %v223
        %v392 = vadd.f32 %v224, %v384
        %v393 = vadd.f32 %v225, %v385
        %v394 = vadd.f32 %v226, %v386
        %v395 = vadd.f32 %v227, %v387
        %v396 = vadd.f32 %v228, %v388
        %v397 = vadd.f32 %v229, %v389
        %v398 = vadd.f32 %v230, %v390
        %v399 = vadd.f32 %v231, %v391
        %v400 = vmul.f32 %v278, %v392
        %v401 = vmul.f32 %v293, %v393
        %v402 = vmul.f32 %v308, %v394
        %v403 = vmul.f32 %v323, %v395
        %v404 = vmul.f32 %v338, %v396
        %v405 = vmul.f32 %v353, %v397
        %v406 = vmul.f32 %v368, %v398
        %v407 = vmul.f32 %v383, %v399
        %v408 = vtanh.pop %v400
        %v409 = vtanh.pop %v401
        %v410 = vtanh.pop %v402
        %v411 = vtanh.pop %v403
        %v412 = vtanh.pop %v404
        %v413 = vtanh.pop %v405
        %v414 = vtanh.pop %v406
        %v415 = vtanh.pop %v407
        %v416 = vmul.f32 %v278, %v408
        %v417 = vmul.f32 %v293, %v409
        %v418 = vmul.f32 %v308, %v410
        %v419 = vmul.f32 %v323, %v411
        %v420 = vmul.f32 %v338, %v412
        %v421 = vmul.f32 %v353, %v413
        %v422 = vmul.f32 %v368, %v414
        %v423 = vmul.f32 %v383, %v415
        %424 = vst [vmem:[%s188] sm:$0xff] %v400
        %425 = vst [vmem:[%s188 + $0x8] sm:$0xff] %v401
        %426 = vst [vmem:[%s188 + $0x10] sm:$0xff] %v402
        %427 = vst [vmem:[%s188 + $0x18] sm:$0xff] %v403
        %428 = vst [vmem:[%s188 + $0x20] sm:$0xff] %v404
        %429 = vst [vmem:[%s188 + $0x28] sm:$0xff] %v405
        %430 = vst [vmem:[%s188 + $0x30] sm:$0xff] %v406
        %431 = vst [vmem:[%s188 + $0x38] sm:$0xff] %v407
        %432 = vst [vmem:[%s205] sm:$0xff] %v416
        %433 = vst [vmem:[%s205 + $0x8] sm:$0xff] %v417
        %434 = vst [vmem:[%s205 + $0x10] sm:$0xff] %v418
        %435 = vst [vmem:[%s205 + $0x18] sm:$0xff] %v419
        %436 = vst [vmem:[%s205 + $0x20] sm:$0xff] %v420
        %437 = vst [vmem:[%s205 + $0x28] sm:$0xff] %v421
        %438 = vst [vmem:[%s205 + $0x30] sm:$0xff] %v422
        %439 = vst [vmem:[%s205 + $0x38] sm:$0xff] %v423
        %s440 = smul.u32 8, %s18
        %p441 = scmp.lt.s32.totalorder %s440, 15
        %s442 = scalar_select %p441, %s440, 15
        %s443 = smul.addr %s442, 8
        %s444 = scalar_lea.vmem %s2, %s443
        %s445 = sand.u32 %s104, 1
        %s446 = scalar_lea.sflag [#allocation3], %s445
        %s447 = sand.u32 %s104, 1
        %s448 = smul.addr %s447, 64
        %s449 = scalar_lea.vmem [#allocation2], %s448
        // Predicated region
        $region29: #{downsample_forward.6} parent=27 // pred_check
          %p450 = pneg %p88
        $region30: #{downsample_forward.6} parent=27 // pred_check_branch
          %452 = sbr.rel (%p450) target = $region32
        $region31: #{downsample_forward.6} parent=27 // pred_region
          %s453 = smul.u32 8, %s18
        $region32: #{downsample_forward.6} parent=27 // pred_fallthru
          _
        // Predicated region
        $region33: #{downsample_forward.6} parent=27 // pred_check
          %p454 = pneg %p114
        $region34: #{downsample_forward.6} parent=27 // pred_check_branch
          %456 = sbr.rel (%p454) target = $region36
        $region35: #{downsample_forward.6} parent=27 // pred_region
          %s457 = smul.u32 8, %s18
          %459 = vsyncadd %s446, 0
          %s460 = smul.addr %s457, 8
          %s461 = scalar_lea.hbm %s3, %s460
          %s462 = sshll.u32 %s449, 4
          %s463 = int_to_ptr.vmem [resolvable:$true] %s462
          %s464 = sshll.u32 %s461, 4
          %s465 = int_to_ptr.hbm [resolvable:$true] %s464
          %470 = dma.vmem_to_hbm [thread:$0]  %s463, 1024, %s465, %s446, 128, 128, 8
        $region36: #{downsample_forward.6} parent=27 // pred_fallthru
          _
      $region28: #{downsample_forward.6} parent=5 // pred_fallthru
        _
      %p471 = scmp.le.s32.totalorder 2, %s13
      // Predicated region
      $region37: #{downsample_forward.6} parent=5 // pred_check
        %p472 = pneg %p471
      $region38: #{downsample_forward.6} parent=5 // pred_check_branch
        %474 = sbr.rel (%p472) target = $region40
      $region39: #{downsample_forward.6} parent=5 // pred_region
        %s475 = ssub.s32 %s13, 2
        // Predicated region
        $region41: #{downsample_forward.6} parent=39 // pred_check
          %p476 = pneg %p94
        $region42: #{downsample_forward.6} parent=39 // pred_check_branch
          %478 = sbr.rel (%p476) target = $region44
        $region43: #{downsample_forward.6} parent=39 // pred_region
          %s479 = smul.u32 8, %s19
          %p480 = scmp.lt.s32.totalorder %s479, 15
          %s481 = scalar_select %p480, %s479, 15
          %s482 = smul.addr %s481, 8
          %s483 = scalar_lea.vmem %s2, %s482
        $region44: #{downsample_forward.6} parent=39 // pred_fallthru
          _
        // Predicated region
        $region45: #{downsample_forward.6} parent=39 // pred_check
          %p484 = pneg %p120
        $region46: #{downsample_forward.6} parent=39 // pred_check_branch
          %486 = sbr.rel (%p484) target = $region48
        $region47: #{downsample_forward.6} parent=39 // pred_region
          %s487 = sand.u32 %s105, 1
          %s488 = scalar_lea.sflag [#allocation3], %s487
          %s489 = sand.u32 %s105, 1
          %s490 = smul.addr %s489, 64
          %s491 = scalar_lea.vmem [#allocation2], %s490
          %493 = dma.done %s488, 1024
        $region48: #{downsample_forward.6} parent=39 // pred_fallthru
          _
      $region40: #{downsample_forward.6} parent=5 // pred_fallthru
        _
    $region6: #{downsample_forward.6} parent=1 // loop_footer
      %s17 = sadd.s32 1, %s13
    $region7: #{downsample_forward.6} parent=1 // loop_footer_branch
      %12 = sbr.rel target = $region3
    $region8: #{downsample_forward.6} parent=1 // loop_exit
      _
    %494 = vsyncpa [#allocation3], 1
    %s495 = scalar_lea.sflag [#allocation3], 1
    %496 = vsyncpa %s495, 1

// kernel: downsample_forward.8
$region0: #{downsample_forward.8}
  #allocation0 [shape = 'u32[]', space=smem, size = 0x4, offset = 0x4, fixed_abs, tag = 'smem constant byte address 0x4 - core index']
  #allocation1 [shape = 'u32[72,128]{1,0:T(1,128)}', space=vmem, size = 0x9000, scoped, tag = 'internal scratch']
  %s0 = inlined_call_operand.vmem [shape: bf16[32,256], index: 0, kind: input, shape index: {}]
  %s1 = inlined_call_operand.vmem [shape: f32[32,256], index: 1, kind: input, shape index: {}]
  %s2 = inlined_call_operand.vmem [shape: f32[32,256], index: 2, kind: output, shape index: {0}]
  %s3 = inlined_call_operand.hbm [shape: f32[32,256], index: 3, kind: output, shape index: {1}]
  %4 = xla_tuple %s2, %s3
  %s5 = sld [smem:[#allocation0]]
  $region49: #{downsample_forward.8} parent=0
    _
  %s7 = ssub.s32 1, %s5
  %s8 = scalar_select 0, %s7, %s5
  $region1: #{downsample_forward.8} parent=0
    #allocation2 [shape = 'u8[32768]{0}', space=vmem, size = 0x8000, scoped, tag = 'output window, operand 1']
    #allocation3 [shape = 's32[2]{0}', space=sflag, size = 0x8, scoped, tag = 'scoped memory for downsample_forward.8']
    %9 = vsyncpa [#allocation3], 0
    %s10 = scalar_lea.sflag [#allocation3], 1
    %11 = vsyncpa %s10, 0
    loop: start=0, step=1, limit=4
    $region2: #{downsample_forward.8} parent=1 // loop_pre_header
      _
    $region3: #{downsample_forward.8} parent=1 // loop_header
      %s13 = sphi 0, %s17
      %p14 = scmp.ge.s32.totalorder %s13, 4
      %s23 = sphi 0, %s25
      %s26 = sphi 0, %s23
      %s27 = sphi 0, %s26
      %s43 = sphi 0, %s27
      %s49 = sphi 0, %s51
      %s52 = sphi 0, %s49
      %s53 = sphi 0, %s52
      %s69 = sphi 0, %s53
      %s75 = sphi 0, %s77
      %s78 = sphi 0, %s75
      %s79 = sphi 0, %s78
      %s95 = sphi 0, %s79
      %s101 = sphi 0, %s103
      %s104 = sphi 0, %s101
      %s105 = sphi 0, %s104
      %s121 = sphi 0, %s105
    $region4: #{downsample_forward.8} parent=1 // loop_header_branch
      %16 = sbr.rel (%p14) target = $region8
    $region5: #{downsample_forward.8} parent=1 // loop_body
      %s18 = ssub.s32 %s13, 1
      %s19 = ssub.s32 %s13, 2
      %s20 = sadd.s32 %s13, 1
      %s21 = ssub.s32 %s13, %s20
      %p22 = scmp.eq.s32.totalorder %s21, 0
      %s24 = sadd.s32 %s23, 1
      %s25 = scalar_select %p22, %s23, %s24
      %p28 = pneg %p22
      %p29 = scmp.eq.s32.totalorder %s13, 1
      %p30 = por %p28, %p29
      %p31 = scmp.ne.s32.totalorder %s23, %s26
      %p32 = scmp.eq.s32.totalorder %s13, 0
      %p33 = por %p31, %p32
      %p34 = scmp.ne.s32.totalorder %s23, %s26
      %p35 = scmp.eq.s32.totalorder %s18, 1
      %p36 = por %p34, %p35
      %p37 = scmp.ne.s32.totalorder %s26, %s27
      %p38 = scmp.eq.s32.totalorder %s18, 0
      %p39 = por %p37, %p38
      %p40 = scmp.ne.s32.totalorder %s26, %s27
      %p41 = scmp.eq.s32.totalorder %s19, 1
      %p42 = por %p40, %p41
      %p44 = scmp.ne.s32.totalorder %s27, %s43
      %p45 = scmp.eq.s32.totalorder %s19, 0
      %p46 = por %p44, %p45
      %s47 = ssub.s32 %s13, %s20
      %p48 = scmp.eq.s32.totalorder %s47, 0
      %s50 = sadd.s32 %s49, 1
      %s51 = scalar_select %p48, %s49, %s50
      %p54 = pneg %p48
      %p55 = scmp.eq.s32.totalorder %s13, 1
      %p56 = por %p54, %p55
      %p57 = scmp.ne.s32.totalorder %s49, %s52
      %p58 = scmp.eq.s32.totalorder %s13, 0
      %p59 = por %p57, %p58
      %p60 = scmp.ne.s32.totalorder %s49, %s52
      %p61 = scmp.eq.s32.totalorder %s18, 1
      %p62 = por %p60, %p61
      %p63 = scmp.ne.s32.totalorder %s52, %s53
      %p64 = scmp.eq.s32.totalorder %s18, 0
      %p65 = por %p63, %p64
      %p66 = scmp.ne.s32.totalorder %s52, %s53
      %p67 = scmp.eq.s32.totalorder %s19, 1
      %p68 = por %p66, %p67
      %p70 = scmp.ne.s32.totalorder %s53, %s69
      %p71 = scmp.eq.s32.totalorder %s19, 0
      %p72 = por %p70, %p71
      %s73 = ssub.s32 %s13, %s20
      %p74 = scmp.eq.s32.totalorder %s73, 0
      %s76 = sadd.s32 %s75, 1
      %s77 = scalar_select %p74, %s75, %s76
      %p80 = pneg %p74
      %p81 = scmp.eq.s32.totalorder %s13, 1
      %p82 = por %p80, %p81
      %p83 = scmp.ne.s32.totalorder %s75, %s78
      %p84 = scmp.eq.s32.totalorder %s13, 0
      %p85 = por %p83, %p84
      %p86 = scmp.ne.s32.totalorder %s75, %s78
      %p87 = scmp.eq.s32.totalorder %s18, 1
      %p88 = por %p86, %p87
      %p89 = scmp.ne.s32.totalorder %s78, %s79
      %p90 = scmp.eq.s32.totalorder %s18, 0
      %p91 = por %p89, %p90
      %p92 = scmp.ne.s32.totalorder %s78, %s79
      %p93 = scmp.eq.s32.totalorder %s19, 1
      %p94 = por %p92, %p93
      %p96 = scmp.ne.s32.totalorder %s79, %s95
      %p97 = scmp.eq.s32.totalorder %s19, 0
      %p98 = por %p96, %p97
      %s99 = ssub.s32 %s13, %s20
      %p100 = scmp.eq.s32.totalorder %s99, 0
      %s102 = sadd.s32 %s101, 1
      %s103 = scalar_select %p100, %s101, %s102
      %p106 = pneg %p100
      %p107 = scmp.eq.s32.totalorder %s13, 1
      %p108 = por %p106, %p107
      %p109 = scmp.ne.s32.totalorder %s101, %s104
      %p110 = scmp.eq.s32.totalorder %s13, 0
      %p111 = por %p109, %p110
      %p112 = scmp.ne.s32.totalorder %s101, %s104
      %p113 = scmp.eq.s32.totalorder %s18, 1
      %p114 = por %p112, %p113
      %p115 = scmp.ne.s32.totalorder %s104, %s105
      %p116 = scmp.eq.s32.totalorder %s18, 0
      %p117 = por %p115, %p116
      %p118 = scmp.ne.s32.totalorder %s104, %s105
      %p119 = scmp.eq.s32.totalorder %s19, 1
      %p120 = por %p118, %p119
      %p122 = scmp.ne.s32.totalorder %s105, %s121
      %p123 = scmp.eq.s32.totalorder %s19, 0
      %p124 = por %p122, %p123
      %p125 = scmp.le.s32.totalorder 1, %s13
      %p126 = scmp.lt.s32.totalorder %s13, 3
      %p127 = pnand %p125, %p126
      %p128 = pneg %p127
      // Predicated region
      $region9: #{downsample_forward.8} parent=5 // pred_check
        _
      $region10: #{downsample_forward.8} parent=5 // pred_check_branch
        %130 = sbr.rel (%p127) target = $region12
      $region11: #{downsample_forward.8} parent=5 // pred_region
        %s131 = ssub.s32 %s13, 1
      $region12: #{downsample_forward.8} parent=5 // pred_fallthru
        _
      %p132 = scmp.lt.s32.totalorder %s13, 2
      // Predicated region
      $region13: #{downsample_forward.8} parent=5 // pred_check
        %p133 = pneg %p132
      $region14: #{downsample_forward.8} parent=5 // pred_check_branch
        %135 = sbr.rel (%p133) target = $region16
      $region15: #{downsample_forward.8} parent=5 // pred_region
        // Predicated region
        $region17: #{downsample_forward.8} parent=15 // pred_check
          %p136 = pneg %p33
        $region18: #{downsample_forward.8} parent=15 // pred_check_branch
          %138 = sbr.rel (%p136) target = $region20
        $region19: #{downsample_forward.8} parent=15 // pred_region
          %s139 = smul.u32 2, %s13
          %p140 = scmp.lt.s32.totalorder %s139, 3
          %s141 = scalar_select %p140, %s139, 3
          %s142 = smul.addr %s141, 2
          %s143 = smul.addr %s142, 4
          %s144 = scalar_lea.vmem %s0, %s143
          %s145 = smul.u32 2, %s13
        $region20: #{downsample_forward.8} parent=15 // pred_fallthru
          _
        // Predicated region
        $region21: #{downsample_forward.8} parent=15 // pred_check
          %p146 = pneg %p59
        $region22: #{downsample_forward.8} parent=15 // pred_check_branch
          %148 = sbr.rel (%p146) target = $region24
        $region23: #{downsample_forward.8} parent=15 // pred_region
          %s149 = smul.u32 2, %s13
          %p150 = scmp.lt.s32.totalorder %s149, 3
          %s151 = scalar_select %p150, %s149, 3
          %s152 = smul.addr %s151, 2
          %s153 = smul.addr %s152, 8
          %s154 = scalar_lea.vmem %s1, %s153
          %s155 = smul.u32 2, %s13
        $region24: #{downsample_forward.8} parent=15 // pred_fallthru
          _
      $region16: #{downsample_forward.8} parent=5 // pred_fallthru
        _
      %p156 = scmp.le.s32.totalorder 1, %s13
      %p157 = scmp.lt.s32.totalorder %s13, 3
      %p158 = pnand %p156, %p157
      %p159 = pneg %p158
      // Predicated region
      $region25: #{downsample_forward.8} parent=5 // pred_check
        _
      $region26: #{downsample_forward.8} parent=5 // pred_check_branch
        %161 = sbr.rel (%p158) target = $region28
      $region27: #{downsample_forward.8} parent=5 // pred_region
        %s162 = ssub.s32 %s13, 1
        %s163 = smul.u32 2, %s18
        %p164 = scmp.lt.s32.totalorder %s163, 3
        %s165 = scalar_select %p164, %s163, 3
        %s166 = smul.addr %s165, 2
        %s167 = smul.addr %s166, 4
        %s168 = scalar_lea.vmem %s0, %s167
        %p169 = pneg %p39
        %p170 = pneg %p36
        %s171 = smul.u32 2, %s18
        %p172 = scmp.lt.s32.totalorder %s171, 3
        %s173 = scalar_select %p172, %s171, 3
        %s174 = smul.addr %s173, 2
        %s175 = smul.addr %s174, 8
        %s176 = scalar_lea.vmem %s1, %s175
        %p177 = pneg %p65
        %p178 = pneg %p62
        %p179 = pneg %p91
        %p180 = pneg %p88
        %s181 = smul.u32 2, %s18
        %p182 = scmp.lt.s32.totalorder %s181, 3
        %s183 = scalar_select %p182, %s181, 3
        %s184 = smul.addr %s183, 2
        %s185 = smul.addr %s184, 8
        %s186 = scalar_lea.vmem %s2, %s185
        %p187 = pneg %p117
        %p188 = pneg %p114
        %s189 = sand.u32 %s104, 1
        %s190 = scalar_lea.sflag [#allocation3], %s189
        %s191 = sand.u32 %s104, 1
        %s192 = smul.addr %s191, 32
        %s193 = scalar_lea.vmem [#allocation2], %s192
        %s194 = smul.u32 2, %s18
        %p195 = scmp.lt.s32.totalorder %s194, 3
        %s196 = scalar_select %p195, %s194, 3
        %s197 = smul.addr %s196, 2
        %s198 = smul.addr %s197, 4
        %s199 = scalar_lea.vmem %s0, %s198
        %s200 = smul.u32 2, %s18
        %s201 = smul.u32 2, %s18
        %p202 = scmp.lt.s32.totalorder %s201, 3
        %s203 = scalar_select %p202, %s201, 3
        %s204 = smul.addr %s203, 2
        %s205 = smul.addr %s204, 8
        %s206 = scalar_lea.vmem %s1, %s205
        %s207 = smul.u32 2, %s18
        %s208 = smul.u32 2, %s18
        %p209 = scmp.lt.s32.totalorder %s208, 3
        %s210 = scalar_select %p209, %s208, 3
        %s211 = smul.addr %s210, 2
        %s212 = smul.addr %s211, 8
        %s213 = scalar_lea.vmem %s2, %s212
        %s214 = smul.u32 2, %s18
        %s215 = smul.u32 2, %s18
        %v216 = vld [vmem:[%s199] sm:$0xff]
        %v217 = vld [vmem:[%s199 + $0x8] sm:$0xff]
        %v218 = vunpack.c.l.bf16 %v216
        %v219 = vunpack.c.h.bf16 %v216
        %v220 = vunpack.c.l.bf16 %v217
        %v221 = vunpack.c.h.bf16 %v217
        %v222 = vld [vmem:[%s206] sm:$0xff]
        %v223 = vld [vmem:[%s206 + $0x8] sm:$0xff]
        %v224 = vld [vmem:[%s206 + $0x10] sm:$0xff]
        %v225 = vld [vmem:[%s206 + $0x18] sm:$0xff]
        %v226 = vxor.u32 %v218, 2147483648
        %v227 = vxor.u32 %v219, 2147483648
        %v228 = vxor.u32 %v220, 2147483648
        %v229 = vxor.u32 %v221, 2147483648
        %v230 = vmul.f32 %v226, 1.442695
        %v231 = vpow.pop %v230
        %v232 = vmul.f32 %v227, 1.442695
        %v233 = vpow.pop %v232
        %v234 = vmul.f32 %v228, 1.442695
        %v235 = vpow.pop %v234
        %v236 = vmul.f32 %v229, 1.442695
        %v237 = vpow.pop %v236
        %v238 = vadd.f32 %v231, 1.0
        %v239 = vadd.f32 %v233, 1.0
        %v240 = vadd.f32 %v235, 1.0
        %v241 = vadd.f32 %v237, 1.0
        %v242 = vrcp.pop %v238
        %v243 = vmul.f32 %v238, %v242
        %v244 = vsub.f32 1.0, %v243
        %v245 = vmul.f32 %v242, %v244
        %v246 = vadd.f32 %v242, %v245
        %vm247 = vweird.f32 %v238
        %vm248 = vweird.f32 %v242
        %vm249 = vmor %vm247, %vm248
        %v250 = vsel %vm249, %v242, %v246
        %v251 = vand.u32 2147483647, %v238
        %vm252 = vcmp.eq.f32.partialorder %v251, 8.507059e+37
        %v253 = vand.u32 %v238, 2147483648
        %v254 = vor.u32 1.1754944e-38, %v253
        %v255 = vsel %vm252, %v254, %v250
        %v256 = vmul.f32 1.0, %v255
        %v257 = vrcp.pop %v239
        %v258 = vmul.f32 %v239, %v257
        %v259 = vsub.f32 1.0, %v258
        %v260 = vmul.f32 %v257, %v259
        %v261 = vadd.f32 %v257, %v260
        %vm262 = vweird.f32 %v239
        %vm263 = vweird.f32 %v257
        %vm264 = vmor %vm262, %vm263
        %v265 = vsel %vm264, %v257, %v261
        %v266 = vand.u32 2147483647, %v239
        %vm267 = vcmp.eq.f32.partialorder %v266, 8.507059e+37
        %v268 = vand.u32 %v239, 2147483648
        %v269 = vor.u32 1.1754944e-38, %v268
        %v270 = vsel %vm267, %v269, %v265
        %v271 = vmul.f32 1.0, %v270
        %v272 = vrcp.pop %v240
        %v273 = vmul.f32 %v240, %v272
        %v274 = vsub.f32 1.0, %v273
        %v275 = vmul.f32 %v272, %v274
        %v276 = vadd.f32 %v272, %v275
        %vm277 = vweird.f32 %v240
        %vm278 = vweird.f32 %v272
        %vm279 = vmor %vm277, %vm278
        %v280 = vsel %vm279, %v272, %v276
        %v281 = vand.u32 2147483647, %v240
        %vm282 = vcmp.eq.f32.partialorder %v281, 8.507059e+37
        %v283 = vand.u32 %v240, 2147483648
        %v284 = vor.u32 1.1754944e-38, %v283
        %v285 = vsel %vm282, %v284, %v280
        %v286 = vmul.f32 1.0, %v285
        %v287 = vrcp.pop %v241
        %v288 = vmul.f32 %v241, %v287
        %v289 = vsub.f32 1.0, %v288
        %v290 = vmul.f32 %v287, %v289
        %v291 = vadd.f32 %v287, %v290
        %vm292 = vweird.f32 %v241
        %vm293 = vweird.f32 %v287
        %vm294 = vmor %vm292, %vm293
        %v295 = vsel %vm294, %v287, %v291
        %v296 = vand.u32 2147483647, %v241
        %vm297 = vcmp.eq.f32.partialorder %v296, 8.507059e+37
        %v298 = vand.u32 %v241, 2147483648
        %v299 = vor.u32 1.1754944e-38, %v298
        %v300 = vsel %vm297, %v299, %v295
        %v301 = vmul.f32 1.0, %v300
        %v302 = vtanh.pop %v218
        %v303 = vtanh.pop %v219
        %v304 = vtanh.pop %v220
        %v305 = vtanh.pop %v221
        %v306 = vadd.f32 %v222, %v302
        %v307 = vadd.f32 %v223, %v303
        %v308 = vadd.f32 %v224, %v304
        %v309 = vadd.f32 %v225, %v305
        %v310 = vmul.f32 %v256, %v306
        %v311 = vmul.f32 %v271, %v307
        %v312 = vmul.f32 %v286, %v308
        %v313 = vmul.f32 %v301, %v309
        %v314 = vtanh.pop %v310
        %v315 = vtanh.pop %v311
        %v316 = vtanh.pop %v312
        %v317 = vtanh.pop %v313
        %v318 = vmul.f32 %v256, %v314
        %v319 = vmul.f32 %v271, %v315
        %v320 = vmul.f32 %v286, %v316
        %v321 = vmul.f32 %v301, %v317
        %322 = vst [vmem:[%s193] sm:$0xff] %v310
        %323 = vst [vmem:[%s193 + $0x8] sm:$0xff] %v311
        %324 = vst [vmem:[%s193 + $0x10] sm:$0xff] %v312
        %325 = vst [vmem:[%s193 + $0x18] sm:$0xff] %v313
        %326 = vst [vmem:[%s213] sm:$0xff] %v318
        %327 = vst [vmem:[%s213 + $0x8] sm:$0xff] %v319
        %328 = vst [vmem:[%s213 + $0x10] sm:$0xff] %v320
        %329 = vst [vmem:[%s213 + $0x18] sm:$0xff] %v321
        %s330 = smul.u32 2, %s18
        %p331 = scmp.lt.s32.totalorder %s330, 3
        %s332 = scalar_select %p331, %s330, 3
        %s333 = smul.addr %s332, 2
        %s334 = smul.addr %s333, 8
        %s335 = scalar_lea.vmem %s2, %s334
        %s336 = sand.u32 %s104, 1
        %s337 = scalar_lea.sflag [#allocation3], %s336
        %s338 = sand.u32 %s104, 1
        %s339 = smul.addr %s338, 32
        %s340 = scalar_lea.vmem [#allocation2], %s339
        // Predicated region
        $region29: #{downsample_forward.8} parent=27 // pred_check
          %p341 = pneg %p88
        $region30: #{downsample_forward.8} parent=27 // pred_check_branch
          %343 = sbr.rel (%p341) target = $region32
        $region31: #{downsample_forward.8} parent=27 // pred_region
          %s344 = smul.u32 2, %s18
        $region32: #{downsample_forward.8} parent=27 // pred_fallthru
          _
        // Predicated region
        $region33: #{downsample_forward.8} parent=27 // pred_check
          %p345 = pneg %p114
        $region34: #{downsample_forward.8} parent=27 // pred_check_branch
          %347 = sbr.rel (%p345) target = $region36
        $region35: #{downsample_forward.8} parent=27 // pred_region
          %s348 = smul.u32 2, %s18
          %350 = vsyncadd %s337, 0
          %s351 = smul.addr %s348, 2
          %s352 = smul.addr %s351, 8
          %s353 = scalar_lea.hbm %s3, %s352
          %s354 = sshll.u32 %s340, 4
          %s355 = int_to_ptr.vmem [resolvable:$true] %s354
          %s356 = sshll.u32 %s353, 4
          %s357 = int_to_ptr.hbm [resolvable:$true] %s356
          %362 = dma.vmem_to_hbm [thread:$0]  %s355, 512, %s357, %s337, 256, 256, 16
        $region36: #{downsample_forward.8} parent=27 // pred_fallthru
          _
      $region28: #{downsample_forward.8} parent=5 // pred_fallthru
        _
      %p363 = scmp.le.s32.totalorder 2, %s13
      // Predicated region
      $region37: #{downsample_forward.8} parent=5 // pred_check
        %p364 = pneg %p363
      $region38: #{downsample_forward.8} parent=5 // pred_check_branch
        %366 = sbr.rel (%p364) target = $region40
      $region39: #{downsample_forward.8} parent=5 // pred_region
        %s367 = ssub.s32 %s13, 2
        // Predicated region
        $region41: #{downsample_forward.8} parent=39 // pred_check
          %p368 = pneg %p94
        $region42: #{downsample_forward.8} parent=39 // pred_check_branch
          %370 = sbr.rel (%p368) target = $region44
        $region43: #{downsample_forward.8} parent=39 // pred_region
          %s371 = smul.u32 2, %s19
          %p372 = scmp.lt.s32.totalorder %s371, 3
          %s373 = scalar_select %p372, %s371, 3
          %s374 = smul.addr %s373, 2
          %s375 = smul.addr %s374, 8
          %s376 = scalar_lea.vmem %s2, %s375
        $region44: #{downsample_forward.8} parent=39 // pred_fallthru
          _
        // Predicated region
        $region45: #{downsample_forward.8} parent=39 // pred_check
          %p377 = pneg %p120
        $region46: #{downsample_forward.8} parent=39 // pred_check_branch
          %379 = sbr.rel (%p377) target = $region48
        $region47: #{downsample_forward.8} parent=39 // pred_region
          %s380 = sand.u32 %s105, 1
          %s381 = scalar_lea.sflag [#allocation3], %s380
          %s382 = sand.u32 %s105, 1
          %s383 = smul.addr %s382, 32
          %s384 = scalar_lea.vmem [#allocation2], %s383
          %386 = dma.done %s381, 512
        $region48: #{downsample_forward.8} parent=39 // pred_fallthru
          _
      $region40: #{downsample_forward.8} parent=5 // pred_fallthru
        _
    $region6: #{downsample_forward.8} parent=1 // loop_footer
      %s17 = sadd.s32 1, %s13
    $region7: #{downsample_forward.8} parent=1 // loop_footer_branch
      %12 = sbr.rel target = $region3
    $region8: #{downsample_forward.8} parent=1 // loop_exit
      _
    %387 = vsyncpa [#allocation3], 1
    %s388 = scalar_lea.sflag [#allocation3], 1
    %389 = vsyncpa %s388, 1

// kernel: downsample_forward.7
$region0: #{downsample_forward.7}
  #allocation0 [shape = 'u32[]', space=smem, size = 0x4, offset = 0x4, fixed_abs, tag = 'smem constant byte address 0x4 - core index']
  #allocation1 [shape = 'u32[72,128]{1,0:T(1,128)}', space=vmem, size = 0x9000, scoped, tag = 'internal scratch']
  %s0 = inlined_call_operand.vmem [shape: bf16[32,512], index: 0, kind: input, shape index: {}]
  %s1 = inlined_call_operand.vmem [shape: f32[1,512], index: 1, kind: input, shape index: {}]
  %s2 = inlined_call_operand.vmem [shape: f32[1,512], index: 2, kind: input, shape index: {}]
  %s3 = inlined_call_operand.vmem [shape: bf16[512,256], index: 3, kind: input, shape index: {}]
  %s4 = inlined_call_operand.vmem [shape: bf16[32,256], index: 4, kind: output, shape index: {}]
  %s5 = sld [smem:[#allocation0]]
  $region49: #{downsample_forward.7} parent=0
    _
  %s7 = ssub.s32 1, %s5
  %s8 = scalar_select 0, %s7, %s5
  loop: start=0, step=1, limit=4
  $region2: #{downsample_forward.7} parent=0 // loop_pre_header
    _
  $region3: #{downsample_forward.7} parent=0 // loop_header
    %s10 = sphi 0, %s14
    %p11 = scmp.ge.s32.totalorder %s10, 4
    %s20 = sphi 0, %s22
    %s23 = sphi 0, %s20
    %s24 = sphi 0, %s23
    %s40 = sphi 0, %s24
    %s44 = sphi 0, %s44
    %s46 = sphi 0, %s44
    %s47 = sphi 0, %s46
    %s61 = sphi 0, %s47
    %s65 = sphi 0, %s65
    %s67 = sphi 0, %s65
    %s68 = sphi 0, %s67
    %s82 = sphi 0, %s68
    %s86 = sphi 0, %s86
    %s88 = sphi 0, %s86
    %s89 = sphi 0, %s88
    %s103 = sphi 0, %s89
    %s109 = sphi 0, %s111
    %s112 = sphi 0, %s109
    %s113 = sphi 0, %s112
    %s129 = sphi 0, %s113
  $region4: #{downsample_forward.7} parent=0 // loop_header_branch
    %13 = sbr.rel (%p11) target = $region8
  $region5: #{downsample_forward.7} parent=0 // loop_body
    %s15 = ssub.s32 %s10, 1
    %s16 = ssub.s32 %s10, 2
    %s17 = sadd.s32 %s10, 1
    %s18 = ssub.s32 %s10, %s17
    %p19 = scmp.eq.s32.totalorder %s18, 0
    %s21 = sadd.s32 %s20, 1
    %s22 = scalar_select %p19, %s20, %s21
    %p25 = pneg %p19
    %p26 = scmp.eq.s32.totalorder %s10, 1
    %p27 = por %p25, %p26
    %p28 = scmp.ne.s32.totalorder %s20, %s23
    %p29 = scmp.eq.s32.totalorder %s10, 0
    %p30 = por %p28, %p29
    %p31 = scmp.ne.s32.totalorder %s20, %s23
    %p32 = scmp.eq.s32.totalorder %s15, 1
    %p33 = por %p31, %p32
    %p34 = scmp.ne.s32.totalorder %s23, %s24
    %p35 = scmp.eq.s32.totalorder %s15, 0
    %p36 = por %p34, %p35
    %p37 = scmp.ne.s32.totalorder %s23, %s24
    %p38 = scmp.eq.s32.totalorder %s16, 1
    %p39 = por %p37, %p38
    %p41 = scmp.ne.s32.totalorder %s24, %s40
    %p42 = scmp.eq.s32.totalorder %s16, 0
    %p43 = por %p41, %p42
    %s45 = sadd.s32 %s44, 1
    %p48 = scmp.eq.s32.totalorder %s10, 1
    %p49 = scmp.ne.s32.totalorder %s44, %s46
    %p50 = scmp.eq.s32.totalorder %s10, 0
    %p51 = por %p49, %p50
    %p52 = scmp.ne.s32.totalorder %s44, %s46
    %p53 = scmp.eq.s32.totalorder %s15, 1
    %p54 = por %p52, %p53
    %p55 = scmp.ne.s32.totalorder %s46, %s47
    %p56 = scmp.eq.s32.totalorder %s15, 0
    %p57 = por %p55, %p56
    %p58 = scmp.ne.s32.totalorder %s46, %s47
    %p59 = scmp.eq.s32.totalorder %s16, 1
    %p60 = por %p58, %p59
    %p62 = scmp.ne.s32.totalorder %s47, %s61
    %p63 = scmp.eq.s32.totalorder %s16, 0
    %p64 = por %p62, %p63
    %s66 = sadd.s32 %s65, 1
    %p69 = scmp.eq.s32.totalorder %s10, 1
    %p70 = scmp.ne.s32.totalorder %s65, %s67
    %p71 = scmp.eq.s32.totalorder %s10, 0
    %p72 = por %p70, %p71
    %p73 = scmp.ne.s32.totalorder %s65, %s67
    %p74 = scmp.eq.s32.totalorder %s15, 1
    %p75 = por %p73, %p74
    %p76 = scmp.ne.s32.totalorder %s67, %s68
    %p77 = scmp.eq.s32.totalorder %s15, 0
    %p78 = por %p76, %p77
    %p79 = scmp.ne.s32.totalorder %s67, %s68
    %p80 = scmp.eq.s32.totalorder %s16, 1
    %p81 = por %p79, %p80
    %p83 = scmp.ne.s32.totalorder %s68, %s82
    %p84 = scmp.eq.s32.totalorder %s16, 0
    %p85 = por %p83, %p84
    %s87 = sadd.s32 %s86, 1
    %p90 = scmp.eq.s32.totalorder %s10, 1
    %p91 = scmp.ne.s32.totalorder %s86, %s88
    %p92 = scmp.eq.s32.totalorder %s10, 0
    %p93 = por %p91, %p92
    %p94 = scmp.ne.s32.totalorder %s86, %s88
    %p95 = scmp.eq.s32.totalorder %s15, 1
    %p96 = por %p94, %p95
    %p97 = scmp.ne.s32.totalorder %s88, %s89
    %p98 = scmp.eq.s32.totalorder %s15, 0
    %p99 = por %p97, %p98
    %p100 = scmp.ne.s32.totalorder %s88, %s89
    %p101 = scmp.eq.s32.totalorder %s16, 1
    %p102 = por %p100, %p101
    %p104 = scmp.ne.s32.totalorder %s89, %s103
    %p105 = scmp.eq.s32.totalorder %s16, 0
    %p106 = por %p104, %p105
    %s107 = ssub.s32 %s10, %s17
    %p108 = scmp.eq.s32.totalorder %s107, 0
    %s110 = sadd.s32 %s109, 1
    %s111 = scalar_select %p108, %s109, %s110
    %p114 = pneg %p108
    %p115 = scmp.eq.s32.totalorder %s10, 1
    %p116 = por %p114, %p115
    %p117 = scmp.ne.s32.totalorder %s109, %s112
    %p118 = scmp.eq.s32.totalorder %s10, 0
    %p119 = por %p117, %p118
    %p120 = scmp.ne.s32.totalorder %s109, %s112
    %p121 = scmp.eq.s32.totalorder %s15, 1
    %p122 = por %p120, %p121
    %p123 = scmp.ne.s32.totalorder %s112, %s113
    %p124 = scmp.eq.s32.totalorder %s15, 0
    %p125 = por %p123, %p124
    %p126 = scmp.ne.s32.totalorder %s112, %s113
    %p127 = scmp.eq.s32.totalorder %s16, 1
    %p128 = por %p126, %p127
    %p130 = scmp.ne.s32.totalorder %s113, %s129
    %p131 = scmp.eq.s32.totalorder %s16, 0
    %p132 = por %p130, %p131
    %p133 = scmp.le.s32.totalorder 1, %s10
    %p134 = scmp.lt.s32.totalorder %s10, 3
    %p135 = pnand %p133, %p134
    %p136 = pneg %p135
    // Predicated region
    $region9: #{downsample_forward.7} parent=5 // pred_check
      _
    $region10: #{downsample_forward.7} parent=5 // pred_check_branch
      %138 = sbr.rel (%p135) target = $region12
    $region11: #{downsample_forward.7} parent=5 // pred_region
      %s139 = ssub.s32 %s10, 1
      // Predicated region
      $region13: #{downsample_forward.7} parent=11 // pred_check
        %p140 = pneg %p57
      $region14: #{downsample_forward.7} parent=11 // pred_check_branch
        %142 = sbr.rel (%p140) target = $region16
      $region15: #{downsample_forward.7} parent=11 // pred_region
        _
      $region16: #{downsample_forward.7} parent=11 // pred_fallthru
        _
      // Predicated region
      $region17: #{downsample_forward.7} parent=11 // pred_check
        %p143 = pneg %p78
      $region18: #{downsample_forward.7} parent=11 // pred_check_branch
        %145 = sbr.rel (%p143) target = $region20
      $region19: #{downsample_forward.7} parent=11 // pred_region
        _
      $region20: #{downsample_forward.7} parent=11 // pred_fallthru
        _
      // Predicated region
      $region21: #{downsample_forward.7} parent=11 // pred_check
        %p146 = pneg %p99
      $region22: #{downsample_forward.7} parent=11 // pred_check_branch
        %148 = sbr.rel (%p146) target = $region24
      $region23: #{downsample_forward.7} parent=11 // pred_region
        _
      $region24: #{downsample_forward.7} parent=11 // pred_fallthru
        _
    $region12: #{downsample_forward.7} parent=5 // pred_fallthru
      _
    %p149 = scmp.lt.s32.totalorder %s10, 2
    // Predicated region
    $region25: #{downsample_forward.7} parent=5 // pred_check
      %p150 = pneg %p149
    $region26: #{downsample_forward.7} parent=5 // pred_check_branch
      %152 = sbr.rel (%p150) target = $region28
    $region27: #{downsample_forward.7} parent=5 // pred_region
      // Predicated region
      $region29: #{downsample_forward.7} parent=27 // pred_check
        %p153 = pneg %p30
      $region30: #{downsample_forward.7} parent=27 // pred_check_branch
        %155 = sbr.rel (%p153) target = $region32
      $region31: #{downsample_forward.7} parent=27 // pred_region
        %s156 = smul.u32 2, %s10
        %p157 = scmp.lt.s32.totalorder %s156, 3
        %s158 = scalar_select %p157, %s156, 3
        %s159 = smul.addr %s158, 4
        %s160 = smul.addr %s159, 4
        %s161 = scalar_lea.vmem %s0, %s160
        %s162 = smul.u32 2, %s10
      $region32: #{downsample_forward.7} parent=27 // pred_fallthru
        _
    $region28: #{downsample_forward.7} parent=5 // pred_fallthru
      _
    %p163 = scmp.le.s32.totalorder 1, %s10
    %p164 = scmp.lt.s32.totalorder %s10, 3
    %p165 = pnand %p163, %p164
    %p166 = pneg %p165
    // Predicated region
    $region33: #{downsample_forward.7} parent=5 // pred_check
      _
    $region34: #{downsample_forward.7} parent=5 // pred_check_branch
      %168 = sbr.rel (%p165) target = $region36
    $region35: #{downsample_forward.7} parent=5 // pred_region
      %s169 = ssub.s32 %s10, 1
      %s170 = smul.u32 2, %s15
      %p171 = scmp.lt.s32.totalorder %s170, 3
      %s172 = scalar_select %p171, %s170, 3
      %s173 = smul.addr %s172, 4
      %s174 = smul.addr %s173, 4
      %s175 = scalar_lea.vmem %s0, %s174
      %p176 = pneg %p36
      %p177 = pneg %p33
      %p178 = pneg %p57
      %p179 = pneg %p54
      %p180 = pneg %p78
      %p181 = pneg %p75
      %p182 = pneg %p99
      %p183 = pneg %p96
      %p184 = pneg %p125
      %p185 = pneg %p122
      %s186 = smul.u32 2, %s15
      %p187 = scmp.lt.s32.totalorder %s186, 3
      %s188 = scalar_select %p187, %s186, 3
      %s189 = smul.addr %s188, 2
      %s190 = smul.addr %s189, 4
      %s191 = scalar_lea.vmem %s4, %s190
      %s192 = smul.u32 2, %s15
      %p193 = scmp.lt.s32.totalorder %s192, 3
      %s194 = scalar_select %p193, %s192, 3
      %s195 = smul.addr %s194, 4
      %s196 = smul.addr %s195, 4
      %s197 = scalar_lea.vmem %s0, %s196
      %s198 = smul.u32 2, %s15
      %s199 = smul.u32 2, %s15
      %p200 = scmp.lt.s32.totalorder %s199, 3
      %s201 = scalar_select %p200, %s199, 3
      %s202 = smul.addr %s201, 2
      %s203 = smul.addr %s202, 4
      %s204 = scalar_lea.vmem %s4, %s203
      %s205 = smul.u32 2, %s15
      %v206 = vld [vmem:[%s197] sm:$0xff]
      %v207 = vld [vmem:[%s197 + $0x8] sm:$0xff]
      %v208 = vld [vmem:[%s197 + $0x10] sm:$0xff]
      %v209 = vld [vmem:[%s197 + $0x18] sm:$0xff]
      %v210 = vunpack.c.l.bf16 %v206
      %v211 = vunpack.c.h.bf16 %v206
      %v212 = vunpack.c.l.bf16 %v207
      %v213 = vunpack.c.h.bf16 %v207
      %v214 = vunpack.c.l.bf16 %v208
      %v215 = vunpack.c.h.bf16 %v208
      %v216 = vunpack.c.l.bf16 %v209
      %v217 = vunpack.c.h.bf16 %v209
      %v218 = vadd.f32 %v210, %v211
      %v219 = vadd.f32 %v218, %v212
      %v220 = vadd.f32 %v219, %v213
      %221 = vadd.xlane.f32.xlu0 %v220
      %v222 = vpop.xlane.xlu0 %221
      %v223 = vadd.f32 %v214, %v215
      %v224 = vadd.f32 %v223, %v216
      %v225 = vadd.f32 %v224, %v217
      %226 = vadd.xlane.f32.xlu0 %v225
      %v227 = vpop.xlane.xlu0 %226
      %v228 = vrcp.pop 512.0
      %v229 = vmul.f32 512.0, %v228
      %v230 = vsub.f32 1.0, %v229
      %v231 = vmul.f32 %v228, %v230
      %v232 = vadd.f32 %v228, %v231
      %vm233 = vweird.f32 %v228
      %v234 = vsel %vm233, %v228, %v232
      %v235 = vmul.f32 %v222, %v234
      %v236 = vmul.f32 %v227, %v234
      %v237 = vsub.f32 %v210, %v235
      %v238 = vsub.f32 %v211, %v235
      %v239 = vsub.f32 %v212, %v235
      %v240 = vsub.f32 %v213, %v235
      %v241 = vsub.f32 %v214, %v236
      %v242 = vsub.f32 %v215, %v236
      %v243 = vsub.f32 %v216, %v236
      %v244 = vsub.f32 %v217, %v236
      %v245 = vmul.f32 %v237, %v237
      %v246 = vmul.f32 %v238, %v238
      %v247 = vmul.f32 %v239, %v239
      %v248 = vmul.f32 %v240, %v240
      %v249 = vmul.f32 %v241, %v241
      %v250 = vmul.f32 %v242, %v242
      %v251 = vmul.f32 %v243, %v243
      %v252 = vmul.f32 %v244, %v244
      %v253 = vadd.f32 %v245, %v246
      %v254 = vadd.f32 %v253, %v247
      %v255 = vadd.f32 %v254, %v248
      %256 = vadd.xlane.f32.xlu0 %v255
      %v257 = vpop.xlane.xlu0 %256
      %v258 = vadd.f32 %v249, %v250
      %v259 = vadd.f32 %v258, %v251
      %v260 = vadd.f32 %v259, %v252
      %261 = vadd.xlane.f32.xlu0 %v260
      %v262 = vpop.xlane.xlu0 %261
      %v263 = vmul.f32 %v257, %v234
      %v264 = vmul.f32 %v262, %v234
      %v265 = vadd.f32 %v263, 1e-05
      %v266 = vadd.f32 %v264, 1e-05
      %v267 = vrsqrt.pop %v265
      %v268 = vmul.f32 %v267, %v265
      %v269 = vmul.f32 %v268, %v267
      %v270 = vmul.f32 0.5, %v269
      %v271 = vsub.f32 1.5, %v270
      %v272 = vmul.f32 %v267, %v271
      %vm273 = vweird.f32 %v265
      %vm274 = vweird.f32 %v267
      %vm275 = vmor %vm273, %vm274
      %v276 = vsel %vm275, %v267, %v272
      %v277 = vrsqrt.pop %v266
      %v278 = vmul.f32 %v277, %v266
      %v279 = vmul.f32 %v278, %v277
      %v280 = vmul.f32 0.5, %v279
      %v281 = vsub.f32 1.5, %v280
      %v282 = vmul.f32 %v277, %v281
      %vm283 = vweird.f32 %v266
      %vm284 = vweird.f32 %v277
      %vm285 = vmor %vm283, %vm284
      %v286 = vsel %vm285, %v277, %v282
      %v287 = vmul.f32 %v237, %v276
      %v288 = vmul.f32 %v238, %v276
      %v289 = vmul.f32 %v239, %v276
      %v290 = vmul.f32 %v240, %v276
      %v291 = vmul.f32 %v241, %v286
      %v292 = vmul.f32 %v242, %v286
      %v293 = vmul.f32 %v243, %v286
      %v294 = vmul.f32 %v244, %v286
      %v295 = vld [vmem:[%s1] sm:$0xf]
      %v297 = vperm.slane %v295, 0
      %v298 = vperm.slane %v295, 1
      %v299 = vperm.slane %v295, 2
      %v300 = vperm.slane %v295, 3
      %v305 = vmul.f32 %v287, %v297
      %v306 = vmul.f32 %v288, %v298
      %v307 = vmul.f32 %v289, %v299
      %v308 = vmul.f32 %v290, %v300
      %v309 = vmul.f32 %v291, %v297
      %v310 = vmul.f32 %v292, %v298
      %v311 = vmul.f32 %v293, %v299
      %v312 = vmul.f32 %v294, %v300
      %v313 = vld [vmem:[%s2] sm:$0xf]
      %v315 = vperm.slane %v313, 0
      %v316 = vperm.slane %v313, 1
      %v317 = vperm.slane %v313, 2
      %v318 = vperm.slane %v313, 3
      %v323 = vadd.f32 %v305, %v315
      %v324 = vadd.f32 %v306, %v316
      %v325 = vadd.f32 %v307, %v317
      %v326 = vadd.f32 %v308, %v318
      %v327 = vadd.f32 %v309, %v315
      %v328 = vadd.f32 %v310, %v316
      %v329 = vadd.f32 %v311, %v317
      %v330 = vadd.f32 %v312, %v318
      %v331 = vpack.c.bf16 %v327, %v323
      %v332 = vpack.c.bf16 %v328, %v324
      %v333 = vpack.c.bf16 %v329, %v325
      %v334 = vpack.c.bf16 %v330, %v326
      %v335 = vld [vmem:[%s3] sm:$0xff]
      %v336 = vld [vmem:[%s3 + $0x8] sm:$0xff]
      %v337 = vld [vmem:[%s3 + $0x10] sm:$0xff]
      %v338 = vld [vmem:[%s3 + $0x18] sm:$0xff]
      %v339 = vld [vmem:[%s3 + $0x20] sm:$0xff]
      %v340 = vld [vmem:[%s3 + $0x28] sm:$0xff]
      %v341 = vld [vmem:[%s3 + $0x30] sm:$0xff]
      %v342 = vld [vmem:[%s3 + $0x38] sm:$0xff]
      %v343 = vld [vmem:[%s3 + $0x40] sm:$0xff]
      %v344 = vld [vmem:[%s3 + $0x48] sm:$0xff]
      %v345 = vld [vmem:[%s3 + $0x50] sm:$0xff]
      %v346 = vld [vmem:[%s3 + $0x58] sm:$0xff]
      %v347 = vld [vmem:[%s3 + $0x60] sm:$0xff]
      %v348 = vld [vmem:[%s3 + $0x68] sm:$0xff]
      %v349 = vld [vmem:[%s3 + $0x70] sm:$0xff]
      %v350 = vld [vmem:[%s3 + $0x78] sm:$0xff]
      %v351 = vld [vmem:[%s3 + $0x80] sm:$0xff]
      %v352 = vld [vmem:[%s3 + $0x88] sm:$0xff]
      %v353 = vld [vmem:[%s3 + $0x90] sm:$0xff]
      %v354 = vld [vmem:[%s3 + $0x98] sm:$0xff]
      %v355 = vld [vmem:[%s3 + $0xa0] sm:$0xff]
      %v356 = vld [vmem:[%s3 + $0xa8] sm:$0xff]
      %v357 = vld [vmem:[%s3 + $0xb0] sm:$0xff]
      %v358 = vld [vmem:[%s3 + $0xb8] sm:$0xff]
      %v359 = vld [vmem:[%s3 + $0xc0] sm:$0xff]
      %v360 = vld [vmem:[%s3 + $0xc8] sm:$0xff]
      %v361 = vld [vmem:[%s3 + $0xd0] sm:$0xff]
      %v362 = vld [vmem:[%s3 + $0xd8] sm:$0xff]
      %v363 = vld [vmem:[%s3 + $0xe0] sm:$0xff]
      %v364 = vld [vmem:[%s3 + $0xe8] sm:$0xff]
      %v365 = vld [vmem:[%s3 + $0xf0] sm:$0xff]
      %v366 = vld [vmem:[%s3 + $0xf8] sm:$0xff]
      %v367 = vld [vmem:[%s3 + $0x100] sm:$0xff]
      %v368 = vld [vmem:[%s3 + $0x108] sm:$0xff]
      %v369 = vld [vmem:[%s3 + $0x110] sm:$0xff]
      %v370 = vld [vmem:[%s3 + $0x118] sm:$0xff]
      %v371 = vld [vmem:[%s3 + $0x120] sm:$0xff]
      %v372 = vld [vmem:[%s3 + $0x128] sm:$0xff]
      %v373 = vld [vmem:[%s3 + $0x130] sm:$0xff]
      %v374 = vld [vmem:[%s3 + $0x138] sm:$0xff]
      %v375 = vld [vmem:[%s3 + $0x140] sm:$0xff]
      %v376 = vld [vmem:[%s3 + $0x148] sm:$0xff]
      %v377 = vld [vmem:[%s3 + $0x150] sm:$0xff]
      %v378 = vld [vmem:[%s3 + $0x158] sm:$0xff]
      %v379 = vld [vmem:[%s3 + $0x160] sm:$0xff]
      %v380 = vld [vmem:[%s3 + $0x168] sm:$0xff]
      %v381 = vld [vmem:[%s3 + $0x170] sm:$0xff]
      %v382 = vld [vmem:[%s3 + $0x178] sm:$0xff]
      %v383 = vld [vmem:[%s3 + $0x180] sm:$0xff]
      %v384 = vld [vmem:[%s3 + $0x188] sm:$0xff]
      %v385 = vld [vmem:[%s3 + $0x190] sm:$0xff]
      %v386 = vld [vmem:[%s3 + $0x198] sm:$0xff]
      %v387 = vld [vmem:[%s3 + $0x1a0] sm:$0xff]
      %v388 = vld [vmem:[%s3 + $0x1a8] sm:$0xff]
      %v389 = vld [vmem:[%s3 + $0x1b0] sm:$0xff]
      %v390 = vld [vmem:[%s3 + $0x1b8] sm:$0xff]
      %v391 = vld [vmem:[%s3 + $0x1c0] sm:$0xff]
      %v392 = vld [vmem:[%s3 + $0x1c8] sm:$0xff]
      %v393 = vld [vmem:[%s3 + $0x1d0] sm:$0xff]
      %v394 = vld [vmem:[%s3 + $0x1d8] sm:$0xff]
      %v395 = vld [vmem:[%s3 + $0x1e0] sm:$0xff]
      %v396 = vld [vmem:[%s3 + $0x1e8] sm:$0xff]
      %v397 = vld [vmem:[%s3 + $0x1f0] sm:$0xff]
      %v398 = vld [vmem:[%s3 + $0x1f8] sm:$0xff]
      %v463 = vunpack.c.l.b16 %v335
      %v464 = vunpack.c.h.b16 %v335
      %v465 = vunpack.c.l.b16 %v336
      %v466 = vunpack.c.h.b16 %v336
      %v467 = vunpack.c.l.b16 %v337
      %v468 = vunpack.c.h.b16 %v337
      %v469 = vunpack.c.l.b16 %v338
      %v470 = vunpack.c.h.b16 %v338
      %v471 = vunpack.c.l.b16 %v339
      %v472 = vunpack.c.h.b16 %v339
      %v473 = vunpack.c.l.b16 %v340
      %v474 = vunpack.c.h.b16 %v340
      %v475 = vunpack.c.l.b16 %v341
      %v476 = vunpack.c.h.b16 %v341
      %v477 = vunpack.c.l.b16 %v342
      %v478 = vunpack.c.h.b16 %v342
      %v479 = vunpack.c.l.b16 %v343
      %v480 = vunpack.c.h.b16 %v343
      %v481 = vunpack.c.l.b16 %v344
      %v482 = vunpack.c.h.b16 %v344
      %v483 = vunpack.c.l.b16 %v345
      %v484 = vunpack.c.h.b16 %v345
      %v485 = vunpack.c.l.b16 %v346
      %v486 = vunpack.c.h.b16 %v346
      %v487 = vunpack.c.l.b16 %v347
      %v488 = vunpack.c.h.b16 %v347
      %v489 = vunpack.c.l.b16 %v348
      %v490 = vunpack.c.h.b16 %v348
      %v491 = vunpack.c.l.b16 %v349
      %v492 = vunpack.c.h.b16 %v349
      %v493 = vunpack.c.l.b16 %v350
      %v494 = vunpack.c.h.b16 %v350
      %v495 = vunpack.c.l.b16 %v351
      %v496 = vunpack.c.h.b16 %v351
      %v497 = vunpack.c.l.b16 %v352
      %v498 = vunpack.c.h.b16 %v352
      %v499 = vunpack.c.l.b16 %v353
      %v500 = vunpack.c.h.b16 %v353
      %v501 = vunpack.c.l.b16 %v354
      %v502 = vunpack.c.h.b16 %v354
      %v503 = vunpack.c.l.b16 %v355
      %v504 = vunpack.c.h.b16 %v355
      %v505 = vunpack.c.l.b16 %v356
      %v506 = vunpack.c.h.b16 %v356
      %v507 = vunpack.c.l.b16 %v357
      %v508 = vunpack.c.h.b16 %v357
      %v509 = vunpack.c.l.b16 %v358
      %v510 = vunpack.c.h.b16 %v358
      %v511 = vunpack.c.l.b16 %v359
      %v512 = vunpack.c.h.b16 %v359
      %v513 = vunpack.c.l.b16 %v360
      %v514 = vunpack.c.h.b16 %v360
      %v515 = vunpack.c.l.b16 %v361
      %v516 = vunpack.c.h.b16 %v361
      %v517 = vunpack.c.l.b16 %v362
      %v518 = vunpack.c.h.b16 %v362
      %v519 = vunpack.c.l.b16 %v363
      %v520 = vunpack.c.h.b16 %v363
      %v521 = vunpack.c.l.b16 %v364
      %v522 = vunpack.c.h.b16 %v364
      %v523 = vunpack.c.l.b16 %v365
      %v524 = vunpack.c.h.b16 %v365
      %v525 = vunpack.c.l.b16 %v366
      %v526 = vunpack.c.h.b16 %v366
      %v527 = vunpack.c.l.b16 %v367
      %v528 = vunpack.c.h.b16 %v367
      %v529 = vunpack.c.l.b16 %v368
      %v530 = vunpack.c.h.b16 %v368
      %v531 = vunpack.c.l.b16 %v369
      %v532 = vunpack.c.h.b16 %v369
      %v533 = vunpack.c.l.b16 %v370
      %v534 = vunpack.c.h.b16 %v370
      %v535 = vunpack.c.l.b16 %v371
      %v536 = vunpack.c.h.b16 %v371
      %v537 = vunpack.c.l.b16 %v372
      %v538 = vunpack.c.h.b16 %v372
      %v539 = vunpack.c.l.b16 %v373
      %v540 = vunpack.c.h.b16 %v373
      %v541 = vunpack.c.l.b16 %v374
      %v542 = vunpack.c.h.b16 %v374
      %v543 = vunpack.c.l.b16 %v375
      %v544 = vunpack.c.h.b16 %v375
      %v545 = vunpack.c.l.b16 %v376
      %v546 = vunpack.c.h.b16 %v376
      %v547 = vunpack.c.l.b16 %v377
      %v548 = vunpack.c.h.b16 %v377
      %v549 = vunpack.c.l.b16 %v378
      %v550 = vunpack.c.h.b16 %v378
      %v551 = vunpack.c.l.b16 %v379
      %v552 = vunpack.c.h.b16 %v379
      %v553 = vunpack.c.l.b16 %v380
      %v554 = vunpack.c.h.b16 %v380
      %v555 = vunpack.c.l.b16 %v381
      %v556 = vunpack.c.h.b16 %v381
      %v557 = vunpack.c.l.b16 %v382
      %v558 = vunpack.c.h.b16 %v382
      %v559 = vunpack.c.l.b16 %v383
      %v560 = vunpack.c.h.b16 %v383
      %v561 = vunpack.c.l.b16 %v384
      %v562 = vunpack.c.h.b16 %v384
      %v563 = vunpack.c.l.b16 %v385
      %v564 = vunpack.c.h.b16 %v385
      %v565 = vunpack.c.l.b16 %v386
      %v566 = vunpack.c.h.b16 %v386
      %v567 = vunpack.c.l.b16 %v387
      %v568 = vunpack.c.h.b16 %v387
      %v569 = vunpack.c.l.b16 %v388
      %v570 = vunpack.c.h.b16 %v388
      %v571 = vunpack.c.l.b16 %v389
      %v572 = vunpack.c.h.b16 %v389
      %v573 = vunpack.c.l.b16 %v390
      %v574 = vunpack.c.h.b16 %v390
      %v575 = vunpack.c.l.b16 %v391
      %v576 = vunpack.c.h.b16 %v391
      %v577 = vunpack.c.l.b16 %v392
      %v578 = vunpack.c.h.b16 %v392
      %v579 = vunpack.c.l.b16 %v393
      %v580 = vunpack.c.h.b16 %v393
      %v581 = vunpack.c.l.b16 %v394
      %v582 = vunpack.c.h.b16 %v394
      %v583 = vunpack.c.l.b16 %v395
      %v584 = vunpack.c.h.b16 %v395
      %v585 = vunpack.c.l.b16 %v396
      %v586 = vunpack.c.h.b16 %v396
      %v587 = vunpack.c.l.b16 %v397
      %v588 = vunpack.c.h.b16 %v397
      %v589 = vunpack.c.l.b16 %v398
      %v590 = vunpack.c.h.b16 %v398
      %v591 = vpack.c.b16 %v465, %v463
      %v592 = vpack.c.b16 %v466, %v464
      %v593 = vpack.c.b16 %v469, %v467
      %v594 = vpack.c.b16 %v470, %v468
      %v595 = vpack.c.b16 %v473, %v471
      %v596 = vpack.c.b16 %v474, %v472
      %v597 = vpack.c.b16 %v477, %v475
      %v598 = vpack.c.b16 %v478, %v476
      %v599 = vpack.c.b16 %v481, %v479
      %v600 = vpack.c.b16 %v482, %v480
      %v601 = vpack.c.b16 %v485, %v483
      %v602 = vpack.c.b16 %v486, %v484
      %v603 = vpack.c.b16 %v489, %v487
      %v604 = vpack.c.b16 %v490, %v488
      %v605 = vpack.c.b16 %v493, %v491
      %v606 = vpack.c.b16 %v494, %v492
      %v607 = vpack.c.b16 %v497, %v495
      %v608 = vpack.c.b16 %v498, %v496
      %v609 = vpack.c.b16 %v501, %v499
      %v610 = vpack.c.b16 %v502, %v500
      %v611 = vpack.c.b16 %v505, %v503
      %v612 = vpack.c.b16 %v506, %v504
      %v613 = vpack.c.b16 %v509, %v507
      %v614 = vpack.c.b16 %v510, %v508
      %v615 = vpack.c.b16 %v513, %v511
      %v616 = vpack.c.b16 %v514, %v512
      %v617 = vpack.c.b16 %v517, %v515
      %v618 = vpack.c.b16 %v518, %v516
      %v619 = vpack.c.b16 %v521, %v519
      %v620 = vpack.c.b16 %v522, %v520
      %v621 = vpack.c.b16 %v525, %v523
      %v622 = vpack.c.b16 %v526, %v524
      %v623 = vpack.c.b16 %v529, %v527
      %v624 = vpack.c.b16 %v530, %v528
      %v625 = vpack.c.b16 %v533, %v531
      %v626 = vpack.c.b16 %v534, %v532
      %v627 = vpack.c.b16 %v537, %v535
      %v628 = vpack.c.b16 %v538, %v536
      %v629 = vpack.c.b16 %v541, %v539
      %v630 = vpack.c.b16 %v542, %v540
      %v631 = vpack.c.b16 %v545, %v543
      %v632 = vpack.c.b16 %v546, %v544
      %v633 = vpack.c.b16 %v549, %v547
      %v634 = vpack.c.b16 %v550, %v548
      %v635 = vpack.c.b16 %v553, %v551
      %v636 = vpack.c.b16 %v554, %v552
      %v637 = vpack.c.b16 %v557, %v555
      %v638 = vpack.c.b16 %v558, %v556
      %v639 = vpack.c.b16 %v561, %v559
      %v640 = vpack.c.b16 %v562, %v560
      %v641 = vpack.c.b16 %v565, %v563
      %v642 = vpack.c.b16 %v566, %v564
      %v643 = vpack.c.b16 %v569, %v567
      %v644 = vpack.c.b16 %v570, %v568
      %v645 = vpack.c.b16 %v573, %v571
      %v646 = vpack.c.b16 %v574, %v572
      %v647 = vpack.c.b16 %v577, %v575
      %v648 = vpack.c.b16 %v578, %v576
      %v649 = vpack.c.b16 %v581, %v579
      %v650 = vpack.c.b16 %v582, %v580
      %v651 = vpack.c.b16 %v585, %v583
      %v652 = vpack.c.b16 %v586, %v584
      %v653 = vpack.c.b16 %v589, %v587
      %v654 = vpack.c.b16 %v590, %v588
      %719 = vmatpush.bf16.msra.mxu0 %v605
      %720 = vmatpush.bf16.msra.mxu0 %v603
      %721 = vmatpush.bf16.msra.mxu0 %v601
      %722 = vmatpush.bf16.msra.mxu0 %v599
      %723 = vmatpush.bf16.msra.mxu0 %v597
      %724 = vmatpush.bf16.msra.mxu0 %v595
      %725 = vmatpush.bf16.msra.mxu0 %v593
      %726 = vmatpush.bf16.msra.mxu0 %v591
      %727 = vmatmul.bf16.gmra.mxu0 %v331
      %v728 = vpop.f32.mrf.mxu0
      %v729 = vadd.f32 0.0, %v728
      %v730 = vpop.f32.mrf.mxu0
      %v731 = vadd.f32 0.0, %v730
      %732 = vdwg.mxu0
      %733 = vmatpush.bf16.msra.mxu0 %v621
      %734 = vmatpush.bf16.msra.mxu0 %v619
      %735 = vmatpush.bf16.msra.mxu0 %v617
      %736 = vmatpush.bf16.msra.mxu0 %v615
      %737 = vmatpush.bf16.msra.mxu0 %v613
      %738 = vmatpush.bf16.msra.mxu0 %v611
      %739 = vmatpush.bf16.msra.mxu0 %v609
      %740 = vmatpush.bf16.msra.mxu0 %v607
      %741 = vmatmul.bf16.gmra.mxu0 %v332
      %v742 = vpop.f32.mrf.mxu0
      %v743 = vadd.f32 %v729, %v742
      %v744 = vpop.f32.mrf.mxu0
      %v745 = vadd.f32 %v731, %v744
      %746 = vdwg.mxu0
      %747 = vmatpush.bf16.msra.mxu0 %v637
      %748 = vmatpush.bf16.msra.mxu0 %v635
      %749 = vmatpush.bf16.msra.mxu0 %v633
      %750 = vmatpush.bf16.msra.mxu0 %v631
      %751 = vmatpush.bf16.msra.mxu0 %v629
      %752 = vmatpush.bf16.msra.mxu0 %v627
      %753 = vmatpush.bf16.msra.mxu0 %v625
      %754 = vmatpush.bf16.msra.mxu0 %v623
      %755 = vmatmul.bf16.gmra.mxu0 %v333
      %v756 = vpop.f32.mrf.mxu0
      %v757 = vadd.f32 %v743, %v756
      %v758 = vpop.f32.mrf.mxu0
      %v759 = vadd.f32 %v745, %v758
      %760 = vdwg.mxu0
      %761 = vmatpush.bf16.msra.mxu0 %v653
      %762 = vmatpush.bf16.msra.mxu0 %v651
      %763 = vmatpush.bf16.msra.mxu0 %v649
      %764 = vmatpush.bf16.msra.mxu0 %v647
      %765 = vmatpush.bf16.msra.mxu0 %v645
      %766 = vmatpush.bf16.msra.mxu0 %v643
      %767 = vmatpush.bf16.msra.mxu0 %v641
      %768 = vmatpush.bf16.msra.mxu0 %v639
      %769 = vmatmul.bf16.gmra.mxu0 %v334
      %v770 = vpop.f32.mrf.mxu0
      %v771 = vadd.f32 %v757, %v770
      %v772 = vpop.f32.mrf.mxu0
      %v773 = vadd.f32 %v759, %v772
      %774 = vdwg.mxu0
      %775 = vmatpush.bf16.msra.mxu0 %v606
      %776 = vmatpush.bf16.msra.mxu0 %v604
      %777 = vmatpush.bf16.msra.mxu0 %v602
      %778 = vmatpush.bf16.msra.mxu0 %v600
      %779 = vmatpush.bf16.msra.mxu0 %v598
      %780 = vmatpush.bf16.msra.mxu0 %v596
      %781 = vmatpush.bf16.msra.mxu0 %v594
      %782 = vmatpush.bf16.msra.mxu0 %v592
      %783 = vmatmul.bf16.gmra.mxu0 %v331
      %v784 = vpop.f32.mrf.mxu0
      %v785 = vadd.f32 0.0, %v784
      %v786 = vpop.f32.mrf.mxu0
      %v787 = vadd.f32 0.0, %v786
      %788 = vdwg.mxu0
      %789 = vmatpush.bf16.msra.mxu0 %v622
      %790 = vmatpush.bf16.msra.mxu0 %v620
      %791 = vmatpush.bf16.msra.mxu0 %v618
      %792 = vmatpush.bf16.msra.mxu0 %v616
      %793 = vmatpush.bf16.msra.mxu0 %v614
      %794 = vmatpush.bf16.msra.mxu0 %v612
      %795 = vmatpush.bf16.msra.mxu0 %v610
      %796 = vmatpush.bf16.msra.mxu0 %v608
      %797 = vmatmul.bf16.gmra.mxu0 %v332
      %v798 = vpop.f32.mrf.mxu0
      %v799 = vadd.f32 %v785, %v798
      %v800 = vpop.f32.mrf.mxu0
      %v801 = vadd.f32 %v787, %v800
      %802 = vdwg.mxu0
      %803 = vmatpush.bf16.msra.mxu0 %v638
      %804 = vmatpush.bf16.msra.mxu0 %v636
      %805 = vmatpush.bf16.msra.mxu0 %v634
      %806 = vmatpush.bf16.msra.mxu0 %v632
      %807 = vmatpush.bf16.msra.mxu0 %v630
      %808 = vmatpush.bf16.msra.mxu0 %v628
      %809 = vmatpush.bf16.msra.mxu0 %v626
      %810 = vmatpush.bf16.msra.mxu0 %v624
      %811 = vmatmul.bf16.gmra.mxu0 %v333
      %v812 = vpop.f32.mrf.mxu0
      %v813 = vadd.f32 %v799, %v812
      %v814 = vpop.f32.mrf.mxu0
      %v815 = vadd.f32 %v801, %v814
      %816 = vdwg.mxu0
      %817 = vmatpush.bf16.msra.mxu0 %v654
      %818 = vmatpush.bf16.msra.mxu0 %v652
      %819 = vmatpush.bf16.msra.mxu0 %v650
      %820 = vmatpush.bf16.msra.mxu0 %v648
      %821 = vmatpush.bf16.msra.mxu0 %v646
      %822 = vmatpush.bf16.msra.mxu0 %v644
      %823 = vmatpush.bf16.msra.mxu0 %v642
      %824 = vmatpush.bf16.msra.mxu0 %v640
      %825 = vmatmul.bf16.gmra.mxu0 %v334
      %v826 = vpop.f32.mrf.mxu0
      %v827 = vadd.f32 %v813, %v826
      %v828 = vpop.f32.mrf.mxu0
      %v829 = vadd.f32 %v815, %v828
      %830 = vdwg.mxu0
      %v831 = vpack.c.bf16 %v827, %v771
      %v832 = vpack.c.bf16 %v829, %v773
      %833 = vst [vmem:[%s204] sm:$0xff] %v831
      %834 = vst [vmem:[%s204 + $0x8] sm:$0xff] %v832
      %s835 = smul.u32 2, %s15
      %p836 = scmp.lt.s32.totalorder %s835, 3
      %s837 = scalar_select %p836, %s835, 3
      %s838 = smul.addr %s837, 2
      %s839 = smul.addr %s838, 4
      %s840 = scalar_lea.vmem %s4, %s839
      // Predicated region
      $region37: #{downsample_forward.7} parent=35 // pred_check
        %p841 = pneg %p122
      $region38: #{downsample_forward.7} parent=35 // pred_check_branch
        %843 = sbr.rel (%p841) target = $region40
      $region39: #{downsample_forward.7} parent=35 // pred_region
        %s844 = smul.u32 2, %s15
      $region40: #{downsample_forward.7} parent=35 // pred_fallthru
        _
    $region36: #{downsample_forward.7} parent=5 // pred_fallthru
      _
    %p845 = scmp.le.s32.totalorder 2, %s10
    // Predicated region
    $region41: #{downsample_forward.7} parent=5 // pred_check
      %p846 = pneg %p845
    $region42: #{downsample_forward.7} parent=5 // pred_check_branch
      %848 = sbr.rel (%p846) target = $region44
    $region43: #{downsample_forward.7} parent=5 // pred_region
      %s849 = ssub.s32 %s10, 2
      // Predicated region
      $region45: #{downsample_forward.7} parent=43 // pred_check
        %p850 = pneg %p128
      $region46: #{downsample_forward.7} parent=43 // pred_check_branch
        %852 = sbr.rel (%p850) target = $region48
      $region47: #{downsample_forward.7} parent=43 // pred_region
        %s853 = smul.u32 2, %s16
        %p854 = scmp.lt.s32.totalorder %s853, 3
        %s855 = scalar_select %p854, %s853, 3
        %s856 = smul.addr %s855, 2
        %s857 = smul.addr %s856, 4
        %s858 = scalar_lea.vmem %s4, %s857
      $region48: #{downsample_forward.7} parent=43 // pred_fallthru
        _
    $region44: #{downsample_forward.7} parent=5 // pred_fallthru
      _
  $region6: #{downsample_forward.7} parent=0 // loop_footer
    %s14 = sadd.s32 1, %s10
  $region7: #{downsample_forward.7} parent=0 // loop_footer_branch
    %9 = sbr.rel target = $region3
  $region8: #{downsample_forward.7} parent=0 // loop_exit
    _

// kernel: downsample_forward.9
$region0: #{downsample_forward.9}
  #allocation0 [shape = 'u32[]', space=smem, size = 0x4, offset = 0x4, fixed_abs, tag = 'smem constant byte address 0x4 - core index']
  #allocation1 [shape = 'u32[72,128]{1,0:T(1,128)}', space=vmem, size = 0x9000, scoped, tag = 'internal scratch']
  %s0 = inlined_call_operand.vmem [shape: bf16[8,1024], index: 0, kind: input, shape index: {}]
  %s1 = inlined_call_operand.vmem [shape: f32[1,1024], index: 1, kind: input, shape index: {}]
  %s2 = inlined_call_operand.vmem [shape: f32[1,1024], index: 2, kind: input, shape index: {}]
  %s3 = inlined_call_operand.vmem [shape: bf16[1024,512], index: 3, kind: input, shape index: {}]
  %s4 = inlined_call_operand.vmem [shape: bf16[8,512], index: 4, kind: output, shape index: {}]
  %s5 = sld [smem:[#allocation0]]
  $region26: #{downsample_forward.9} parent=0
    _
  %s7 = ssub.s32 1, %s5
  %s8 = scalar_select 0, %s7, %s5
  // Predicated region
  $region2: #{downsample_forward.9} parent=0 // pred_check
    _
  $region3: #{downsample_forward.9} parent=0 // pred_check_branch
    %10 = sbr.rel (0) target = $region5
  $region4: #{downsample_forward.9} parent=0 // pred_region
    _
  $region5: #{downsample_forward.9} parent=0 // pred_fallthru
    _
  // Predicated region
  $region6: #{downsample_forward.9} parent=0 // pred_check
    _
  $region7: #{downsample_forward.9} parent=0 // pred_check_branch
    %12 = sbr.rel (0) target = $region9
  $region8: #{downsample_forward.9} parent=0 // pred_region
    _
  $region9: #{downsample_forward.9} parent=0 // pred_fallthru
    _
  // Predicated region
  $region10: #{downsample_forward.9} parent=0 // pred_check
    _
  $region11: #{downsample_forward.9} parent=0 // pred_check_branch
    %14 = sbr.rel (0) target = $region13
  $region12: #{downsample_forward.9} parent=0 // pred_region
    _
  $region13: #{downsample_forward.9} parent=0 // pred_fallthru
    _
  // Predicated region
  $region14: #{downsample_forward.9} parent=0 // pred_check
    _
  $region15: #{downsample_forward.9} parent=0 // pred_check_branch
    %16 = sbr.rel (0) target = $region17
  $region16: #{downsample_forward.9} parent=0 // pred_region
    _
  $region17: #{downsample_forward.9} parent=0 // pred_fallthru
    _
  %v17 = vld [vmem:[%s0] sm:$0xff]
  %v18 = vld [vmem:[%s0 + $0x8] sm:$0xff]
  %v19 = vld [vmem:[%s0 + $0x10] sm:$0xff]
  %v20 = vld [vmem:[%s0 + $0x18] sm:$0xff]
  %v21 = vunpack.c.l.bf16 %v17
  %v22 = vunpack.c.h.bf16 %v17
  %v23 = vunpack.c.l.bf16 %v18
  %v24 = vunpack.c.h.bf16 %v18
  %v25 = vunpack.c.l.bf16 %v19
  %v26 = vunpack.c.h.bf16 %v19
  %v27 = vunpack.c.l.bf16 %v20
  %v28 = vunpack.c.h.bf16 %v20
  %v29 = vadd.f32 %v21, %v22
  %v30 = vadd.f32 %v29, %v23
  %v31 = vadd.f32 %v30, %v24
  %v32 = vadd.f32 %v31, %v25
  %v33 = vadd.f32 %v32, %v26
  %v34 = vadd.f32 %v33, %v27
  %v35 = vadd.f32 %v34, %v28
  %36 = vadd.xlane.f32.xlu0 %v35
  %v37 = vpop.xlane.xlu0 %36
  %v38 = vrcp.pop 1024.0
  %v39 = vmul.f32 1024.0, %v38
  %v40 = vsub.f32 1.0, %v39
  %v41 = vmul.f32 %v38, %v40
  %v42 = vadd.f32 %v38, %v41
  %vm43 = vweird.f32 %v38
  %v44 = vsel %vm43, %v38, %v42
  %v45 = vmul.f32 %v37, %v44
  %v46 = vsub.f32 %v21, %v45
  %v47 = vsub.f32 %v22, %v45
  %v48 = vsub.f32 %v23, %v45
  %v49 = vsub.f32 %v24, %v45
  %v50 = vsub.f32 %v25, %v45
  %v51 = vsub.f32 %v26, %v45
  %v52 = vsub.f32 %v27, %v45
  %v53 = vsub.f32 %v28, %v45
  %v54 = vmul.f32 %v46, %v46
  %v55 = vmul.f32 %v47, %v47
  %v56 = vmul.f32 %v48, %v48
  %v57 = vmul.f32 %v49, %v49
  %v58 = vmul.f32 %v50, %v50
  %v59 = vmul.f32 %v51, %v51
  %v60 = vmul.f32 %v52, %v52
  %v61 = vmul.f32 %v53, %v53
  %v62 = vadd.f32 %v54, %v55
  %v63 = vadd.f32 %v62, %v56
  %v64 = vadd.f32 %v63, %v57
  %v65 = vadd.f32 %v64, %v58
  %v66 = vadd.f32 %v65, %v59
  %v67 = vadd.f32 %v66, %v60
  %v68 = vadd.f32 %v67, %v61
  %69 = vadd.xlane.f32.xlu0 %v68
  %v70 = vpop.xlane.xlu0 %69
  %v71 = vmul.f32 %v70, %v44
  %v72 = vadd.f32 %v71, 1e-05
  %v73 = vrsqrt.pop %v72
  %v74 = vmul.f32 %v73, %v72
  %v75 = vmul.f32 %v74, %v73
  %v76 = vmul.f32 0.5, %v75
  %v77 = vsub.f32 1.5, %v76
  %v78 = vmul.f32 %v73, %v77
  %vm79 = vweird.f32 %v72
  %vm80 = vweird.f32 %v73
  %vm81 = vmor %vm79, %vm80
  %v82 = vsel %vm81, %v73, %v78
  %v83 = vmul.f32 %v46, %v82
  %v84 = vmul.f32 %v47, %v82
  %v85 = vmul.f32 %v48, %v82
  %v86 = vmul.f32 %v49, %v82
  %v87 = vmul.f32 %v50, %v82
  %v88 = vmul.f32 %v51, %v82
  %v89 = vmul.f32 %v52, %v82
  %v90 = vmul.f32 %v53, %v82
  %v91 = vld [vmem:[%s1] sm:$0xff]
  %v93 = vperm.slane %v91, 0
  %v94 = vperm.slane %v91, 1
  %v95 = vperm.slane %v91, 2
  %v96 = vperm.slane %v91, 3
  %v97 = vperm.slane %v91, 4
  %v98 = vperm.slane %v91, 5
  %v99 = vperm.slane %v91, 6
  %v100 = vperm.slane %v91, 7
  %v109 = vmul.f32 %v83, %v93
  %v110 = vmul.f32 %v84, %v94
  %v111 = vmul.f32 %v85, %v95
  %v112 = vmul.f32 %v86, %v96
  %v113 = vmul.f32 %v87, %v97
  %v114 = vmul.f32 %v88, %v98
  %v115 = vmul.f32 %v89, %v99
  %v116 = vmul.f32 %v90, %v100
  %v117 = vld [vmem:[%s2] sm:$0xff]
  %v119 = vperm.slane %v117, 0
  %v120 = vperm.slane %v117, 1
  %v121 = vperm.slane %v117, 2
  %v122 = vperm.slane %v117, 3
  %v123 = vperm.slane %v117, 4
  %v124 = vperm.slane %v117, 5
  %v125 = vperm.slane %v117, 6
  %v126 = vperm.slane %v117, 7
  %v135 = vadd.f32 %v109, %v119
  %v136 = vadd.f32 %v110, %v120
  %v137 = vadd.f32 %v111, %v121
  %v138 = vadd.f32 %v112, %v122
  %v139 = vadd.f32 %v113, %v123
  %v140 = vadd.f32 %v114, %v124
  %v141 = vadd.f32 %v115, %v125
  %v142 = vadd.f32 %v116, %v126
  %v143 = vpack.c.bf16 %v135, %v135
  %v144 = vpack.c.bf16 %v136, %v136
  %v145 = vpack.c.bf16 %v137, %v137
  %v146 = vpack.c.bf16 %v138, %v138
  %v147 = vpack.c.bf16 %v139, %v139
  %v148 = vpack.c.bf16 %v140, %v140
  %v149 = vpack.c.bf16 %v141, %v141
  %v150 = vpack.c.bf16 %v142, %v142
  %v151 = vld [vmem:[%s3] sm:$0xff]
  %v152 = vld [vmem:[%s3 + $0x8] sm:$0xff]
  %v153 = vld [vmem:[%s3 + $0x10] sm:$0xff]
  %v154 = vld [vmem:[%s3 + $0x18] sm:$0xff]
  %v155 = vld [vmem:[%s3 + $0x20] sm:$0xff]
  %v156 = vld [vmem:[%s3 + $0x28] sm:$0xff]
  %v157 = vld [vmem:[%s3 + $0x30] sm:$0xff]
  %v158 = vld [vmem:[%s3 + $0x38] sm:$0xff]
  %v159 = vld [vmem:[%s3 + $0x40] sm:$0xff]
  %v160 = vld [vmem:[%s3 + $0x48] sm:$0xff]
  %v161 = vld [vmem:[%s3 + $0x50] sm:$0xff]
  %v162 = vld [vmem:[%s3 + $0x58] sm:$0xff]
  %v163 = vld [vmem:[%s3 + $0x60] sm:$0xff]
  %v164 = vld [vmem:[%s3 + $0x68] sm:$0xff]
  %v165 = vld [vmem:[%s3 + $0x70] sm:$0xff]
  %v166 = vld [vmem:[%s3 + $0x78] sm:$0xff]
  %v167 = vld [vmem:[%s3 + $0x80] sm:$0xff]
  %v168 = vld [vmem:[%s3 + $0x88] sm:$0xff]
  %v169 = vld [vmem:[%s3 + $0x90] sm:$0xff]
  %v170 = vld [vmem:[%s3 + $0x98] sm:$0xff]
  %v171 = vld [vmem:[%s3 + $0xa0] sm:$0xff]
  %v172 = vld [vmem:[%s3 + $0xa8] sm:$0xff]
  %v173 = vld [vmem:[%s3 + $0xb0] sm:$0xff]
  %v174 = vld [vmem:[%s3 + $0xb8] sm:$0xff]
  %v175 = vld [vmem:[%s3 + $0xc0] sm:$0xff]
  %v176 = vld [vmem:[%s3 + $0xc8] sm:$0xff]
  %v177 = vld [vmem:[%s3 + $0xd0] sm:$0xff]
  %v178 = vld [vmem:[%s3 + $0xd8] sm:$0xff]
  %v179 = vld [vmem:[%s3 + $0xe0] sm:$0xff]
  %v180 = vld [vmem:[%s3 + $0xe8] sm:$0xff]
  %v181 = vld [vmem:[%s3 + $0xf0] sm:$0xff]
  %v182 = vld [vmem:[%s3 + $0xf8] sm:$0xff]
  %v183 = vld [vmem:[%s3 + $0x100] sm:$0xff]
  %v184 = vld [vmem:[%s3 + $0x108] sm:$0xff]
  %v185 = vld [vmem:[%s3 + $0x110] sm:$0xff]
  %v186 = vld [vmem:[%s3 + $0x118] sm:$0xff]
  %v187 = vld [vmem:[%s3 + $0x120] sm:$0xff]
  %v188 = vld [vmem:[%s3 + $0x128] sm:$0xff]
  %v189 = vld [vmem:[%s3 + $0x130] sm:$0xff]
  %v190 = vld [vmem:[%s3 + $0x138] sm:$0xff]
  %v191 = vld [vmem:[%s3 + $0x140] sm:$0xff]
  %v192 = vld [vmem:[%s3 + $0x148] sm:$0xff]
  %v193 = vld [vmem:[%s3 + $0x150] sm:$0xff]
  %v194 = vld [vmem:[%s3 + $0x158] sm:$0xff]
  %v195 = vld [vmem:[%s3 + $0x160] sm:$0xff]
  %v196 = vld [vmem:[%s3 + $0x168] sm:$0xff]
  %v197 = vld [vmem:[%s3 + $0x170] sm:$0xff]
  %v198 = vld [vmem:[%s3 + $0x178] sm:$0xff]
  %v199 = vld [vmem:[%s3 + $0x180] sm:$0xff]
  %v200 = vld [vmem:[%s3 + $0x188] sm:$0xff]
  %v201 = vld [vmem:[%s3 + $0x190] sm:$0xff]
  %v202 = vld [vmem:[%s3 + $0x198] sm:$0xff]
  %v203 = vld [vmem:[%s3 + $0x1a0] sm:$0xff]
  %v204 = vld [vmem:[%s3 + $0x1a8] sm:$0xff]
  %v205 = vld [vmem:[%s3 + $0x1b0] sm:$0xff]
  %v206 = vld [vmem:[%s3 + $0x1b8] sm:$0xff]
  %v207 = vld [vmem:[%s3 + $0x1c0] sm:$0xff]
  %v208 = vld [vmem:[%s3 + $0x1c8] sm:$0xff]
  %v209 = vld [vmem:[%s3 + $0x1d0] sm:$0xff]
  %v210 = vld [vmem:[%s3 + $0x1d8] sm:$0xff]
  %v211 = vld [vmem:[%s3 + $0x1e0] sm:$0xff]
  %v212 = vld [vmem:[%s3 + $0x1e8] sm:$0xff]
  %v213 = vld [vmem:[%s3 + $0x1f0] sm:$0xff]
  %v214 = vld [vmem:[%s3 + $0x1f8] sm:$0xff]
  %v215 = vld [vmem:[%s3 + $0x200] sm:$0xff]
  %v216 = vld [vmem:[%s3 + $0x208] sm:$0xff]
  %v217 = vld [vmem:[%s3 + $0x210] sm:$0xff]
  %v218 = vld [vmem:[%s3 + $0x218] sm:$0xff]
  %v219 = vld [vmem:[%s3 + $0x220] sm:$0xff]
  %v220 = vld [vmem:[%s3 + $0x228] sm:$0xff]
  %v221 = vld [vmem:[%s3 + $0x230] sm:$0xff]
  %v222 = vld [vmem:[%s3 + $0x238] sm:$0xff]
  %v223 = vld [vmem:[%s3 + $0x240] sm:$0xff]
  %v224 = vld [vmem:[%s3 + $0x248] sm:$0xff]
  %v225 = vld [vmem:[%s3 + $0x250] sm:$0xff]
  %v226 = vld [vmem:[%s3 + $0x258] sm:$0xff]
  %v227 = vld [vmem:[%s3 + $0x260] sm:$0xff]
  %v228 = vld [vmem:[%s3 + $0x268] sm:$0xff]
  %v229 = vld [vmem:[%s3 + $0x270] sm:$0xff]
  %v230 = vld [vmem:[%s3 + $0x278] sm:$0xff]
  %v231 = vld [vmem:[%s3 + $0x280] sm:$0xff]
  %v232 = vld [vmem:[%s3 + $0x288] sm:$0xff]
  %v233 = vld [vmem:[%s3 + $0x290] sm:$0xff]
  %v234 = vld [vmem:[%s3 + $0x298] sm:$0xff]
  %v235 = vld [vmem:[%s3 + $0x2a0] sm:$0xff]
  %v236 = vld [vmem:[%s3 + $0x2a8] sm:$0xff]
  %v237 = vld [vmem:[%s3 + $0x2b0] sm:$0xff]
  %v238 = vld [vmem:[%s3 + $0x2b8] sm:$0xff]
  %v239 = vld [vmem:[%s3 + $0x2c0] sm:$0xff]
  %v240 = vld [vmem:[%s3 + $0x2c8] sm:$0xff]
  %v241 = vld [vmem:[%s3 + $0x2d0] sm:$0xff]
  %v242 = vld [vmem:[%s3 + $0x2d8] sm:$0xff]
  %v243 = vld [vmem:[%s3 + $0x2e0] sm:$0xff]
  %v244 = vld [vmem:[%s3 + $0x2e8] sm:$0xff]
  %v245 = vld [vmem:[%s3 + $0x2f0] sm:$0xff]
  %v246 = vld [vmem:[%s3 + $0x2f8] sm:$0xff]
  %v247 = vld [vmem:[%s3 + $0x300] sm:$0xff]
  %v248 = vld [vmem:[%s3 + $0x308] sm:$0xff]
  %v249 = vld [vmem:[%s3 + $0x310] sm:$0xff]
  %v250 = vld [vmem:[%s3 + $0x318] sm:$0xff]
  %v251 = vld [vmem:[%s3 + $0x320] sm:$0xff]
  %v252 = vld [vmem:[%s3 + $0x328] sm:$0xff]
  %v253 = vld [vmem:[%s3 + $0x330] sm:$0xff]
  %v254 = vld [vmem:[%s3 + $0x338] sm:$0xff]
  %v255 = vld [vmem:[%s3 + $0x340] sm:$0xff]
  %v256 = vld [vmem:[%s3 + $0x348] sm:$0xff]
  %v257 = vld [vmem:[%s3 + $0x350] sm:$0xff]
  %v258 = vld [vmem:[%s3 + $0x358] sm:$0xff]
  %v259 = vld [vmem:[%s3 + $0x360] sm:$0xff]
  %v260 = vld [vmem:[%s3 + $0x368] sm:$0xff]
  %v261 = vld [vmem:[%s3 + $0x370] sm:$0xff]
  %v262 = vld [vmem:[%s3 + $0x378] sm:$0xff]
  %v263 = vld [vmem:[%s3 + $0x380] sm:$0xff]
  %v264 = vld [vmem:[%s3 + $0x388] sm:$0xff]
  %v265 = vld [vmem:[%s3 + $0x390] sm:$0xff]
  %v266 = vld [vmem:[%s3 + $0x398] sm:$0xff]
  %v267 = vld [vmem:[%s3 + $0x3a0] sm:$0xff]
  %v268 = vld [vmem:[%s3 + $0x3a8] sm:$0xff]
  %v269 = vld [vmem:[%s3 + $0x3b0] sm:$0xff]
  %v270 = vld [vmem:[%s3 + $0x3b8] sm:$0xff]
  %v271 = vld [vmem:[%s3 + $0x3c0] sm:$0xff]
  %v272 = vld [vmem:[%s3 + $0x3c8] sm:$0xff]
  %v273 = vld [vmem:[%s3 + $0x3d0] sm:$0xff]
  %v274 = vld [vmem:[%s3 + $0x3d8] sm:$0xff]
  %v275 = vld [vmem:[%s3 + $0x3e0] sm:$0xff]
  %v276 = vld [vmem:[%s3 + $0x3e8] sm:$0xff]
  %v277 = vld [vmem:[%s3 + $0x3f0] sm:$0xff]
  %v278 = vld [vmem:[%s3 + $0x3f8] sm:$0xff]
  %v279 = vld [vmem:[%s3 + $0x400] sm:$0xff]
  %v280 = vld [vmem:[%s3 + $0x408] sm:$0xff]
  %v281 = vld [vmem:[%s3 + $0x410] sm:$0xff]
  %v282 = vld [vmem:[%s3 + $0x418] sm:$0xff]
  %v283 = vld [vmem:[%s3 + $0x420] sm:$0xff]
  %v284 = vld [vmem:[%s3 + $0x428] sm:$0xff]
  %v285 = vld [vmem:[%s3 + $0x430] sm:$0xff]
  %v286 = vld [vmem:[%s3 + $0x438] sm:$0xff]
  %v287 = vld [vmem:[%s3 + $0x440] sm:$0xff]
  %v288 = vld [vmem:[%s3 + $0x448] sm:$0xff]
  %v289 = vld [vmem:[%s3 + $0x450] sm:$0xff]
  %v290 = vld [vmem:[%s3 + $0x458] sm:$0xff]
  %v291 = vld [vmem:[%s3 + $0x460] sm:$0xff]
  %v292 = vld [vmem:[%s3 + $0x468] sm:$0xff]
  %v293 = vld [vmem:[%s3 + $0x470] sm:$0xff]
  %v294 = vld [vmem:[%s3 + $0x478] sm:$0xff]
  %v295 = vld [vmem:[%s3 + $0x480] sm:$0xff]
  %v296 = vld [vmem:[%s3 + $0x488] sm:$0xff]
  %v297 = vld [vmem:[%s3 + $0x490] sm:$0xff]
  %v298 = vld [vmem:[%s3 + $0x498] sm:$0xff]
  %v299 = vld [vmem:[%s3 + $0x4a0] sm:$0xff]
  %v300 = vld [vmem:[%s3 + $0x4a8] sm:$0xff]
  %v301 = vld [vmem:[%s3 + $0x4b0] sm:$0xff]
  %v302 = vld [vmem:[%s3 + $0x4b8] sm:$0xff]
  %v303 = vld [vmem:[%s3 + $0x4c0] sm:$0xff]
  %v304 = vld [vmem:[%s3 + $0x4c8] sm:$0xff]
  %v305 = vld [vmem:[%s3 + $0x4d0] sm:$0xff]
  %v306 = vld [vmem:[%s3 + $0x4d8] sm:$0xff]
  %v307 = vld [vmem:[%s3 + $0x4e0] sm:$0xff]
  %v308 = vld [vmem:[%s3 + $0x4e8] sm:$0xff]
  %v309 = vld [vmem:[%s3 + $0x4f0] sm:$0xff]
  %v310 = vld [vmem:[%s3 + $0x4f8] sm:$0xff]
  %v311 = vld [vmem:[%s3 + $0x500] sm:$0xff]
  %v312 = vld [vmem:[%s3 + $0x508] sm:$0xff]
  %v313 = vld [vmem:[%s3 + $0x510] sm:$0xff]
  %v314 = vld [vmem:[%s3 + $0x518] sm:$0xff]
  %v315 = vld [vmem:[%s3 + $0x520] sm:$0xff]
  %v316 = vld [vmem:[%s3 + $0x528] sm:$0xff]
  %v317 = vld [vmem:[%s3 + $0x530] sm:$0xff]
  %v318 = vld [vmem:[%s3 + $0x538] sm:$0xff]
  %v319 = vld [vmem:[%s3 + $0x540] sm:$0xff]
  %v320 = vld [vmem:[%s3 + $0x548] sm:$0xff]
  %v321 = vld [vmem:[%s3 + $0x550] sm:$0xff]
  %v322 = vld [vmem:[%s3 + $0x558] sm:$0xff]
  %v323 = vld [vmem:[%s3 + $0x560] sm:$0xff]
  %v324 = vld [vmem:[%s3 + $0x568] sm:$0xff]
  %v325 = vld [vmem:[%s3 + $0x570] sm:$0xff]
  %v326 = vld [vmem:[%s3 + $0x578] sm:$0xff]
  %v327 = vld [vmem:[%s3 + $0x580] sm:$0xff]
  %v328 = vld [vmem:[%s3 + $0x588] sm:$0xff]
  %v329 = vld [vmem:[%s3 + $0x590] sm:$0xff]
  %v330 = vld [vmem:[%s3 + $0x598] sm:$0xff]
  %v331 = vld [vmem:[%s3 + $0x5a0] sm:$0xff]
  %v332 = vld [vmem:[%s3 + $0x5a8] sm:$0xff]
  %v333 = vld [vmem:[%s3 + $0x5b0] sm:$0xff]
  %v334 = vld [vmem:[%s3 + $0x5b8] sm:$0xff]
  %v335 = vld [vmem:[%s3 + $0x5c0] sm:$0xff]
  %v336 = vld [vmem:[%s3 + $0x5c8] sm:$0xff]
  %v337 = vld [vmem:[%s3 + $0x5d0] sm:$0xff]
  %v338 = vld [vmem:[%s3 + $0x5d8] sm:$0xff]
  %v339 = vld [vmem:[%s3 + $0x5e0] sm:$0xff]
  %v340 = vld [vmem:[%s3 + $0x5e8] sm:$0xff]
  %v341 = vld [vmem:[%s3 + $0x5f0] sm:$0xff]
  %v342 = vld [vmem:[%s3 + $0x5f8] sm:$0xff]
  %v343 = vld [vmem:[%s3 + $0x600] sm:$0xff]
  %v344 = vld [vmem:[%s3 + $0x608] sm:$0xff]
  %v345 = vld [vmem:[%s3 + $0x610] sm:$0xff]
  %v346 = vld [vmem:[%s3 + $0x618] sm:$0xff]
  %v347 = vld [vmem:[%s3 + $0x620] sm:$0xff]
  %v348 = vld [vmem:[%s3 + $0x628] sm:$0xff]
  %v349 = vld [vmem:[%s3 + $0x630] sm:$0xff]
  %v350 = vld [vmem:[%s3 + $0x638] sm:$0xff]
  %v351 = vld [vmem:[%s3 + $0x640] sm:$0xff]
  %v352 = vld [vmem:[%s3 + $0x648] sm:$0xff]
  %v353 = vld [vmem:[%s3 + $0x650] sm:$0xff]
  %v354 = vld [vmem:[%s3 + $0x658] sm:$0xff]
  %v355 = vld [vmem:[%s3 + $0x660] sm:$0xff]
  %v356 = vld [vmem:[%s3 + $0x668] sm:$0xff]
  %v357 = vld [vmem:[%s3 + $0x670] sm:$0xff]
  %v358 = vld [vmem:[%s3 + $0x678] sm:$0xff]
  %v359 = vld [vmem:[%s3 + $0x680] sm:$0xff]
  %v360 = vld [vmem:[%s3 + $0x688] sm:$0xff]
  %v361 = vld [vmem:[%s3 + $0x690] sm:$0xff]
  %v362 = vld [vmem:[%s3 + $0x698] sm:$0xff]
  %v363 = vld [vmem:[%s3 + $0x6a0] sm:$0xff]
  %v364 = vld [vmem:[%s3 + $0x6a8] sm:$0xff]
  %v365 = vld [vmem:[%s3 + $0x6b0] sm:$0xff]
  %v366 = vld [vmem:[%s3 + $0x6b8] sm:$0xff]
  %v367 = vld [vmem:[%s3 + $0x6c0] sm:$0xff]
  %v368 = vld [vmem:[%s3 + $0x6c8] sm:$0xff]
  %v369 = vld [vmem:[%s3 + $0x6d0] sm:$0xff]
  %v370 = vld [vmem:[%s3 + $0x6d8] sm:$0xff]
  %v371 = vld [vmem:[%s3 + $0x6e0] sm:$0xff]
  %v372 = vld [vmem:[%s3 + $0x6e8] sm:$0xff]
  %v373 = vld [vmem:[%s3 + $0x6f0] sm:$0xff]
  %v374 = vld [vmem:[%s3 + $0x6f8] sm:$0xff]
  %v375 = vld [vmem:[%s3 + $0x700] sm:$0xff]
  %v376 = vld [vmem:[%s3 + $0x708] sm:$0xff]
  %v377 = vld [vmem:[%s3 + $0x710] sm:$0xff]
  %v378 = vld [vmem:[%s3 + $0x718] sm:$0xff]
  %v379 = vld [vmem:[%s3 + $0x720] sm:$0xff]
  %v380 = vld [vmem:[%s3 + $0x728] sm:$0xff]
  %v381 = vld [vmem:[%s3 + $0x730] sm:$0xff]
  %v382 = vld [vmem:[%s3 + $0x738] sm:$0xff]
  %v383 = vld [vmem:[%s3 + $0x740] sm:$0xff]
  %v384 = vld [vmem:[%s3 + $0x748] sm:$0xff]
  %v385 = vld [vmem:[%s3 + $0x750] sm:$0xff]
  %v386 = vld [vmem:[%s3 + $0x758] sm:$0xff]
  %v387 = vld [vmem:[%s3 + $0x760] sm:$0xff]
  %v388 = vld [vmem:[%s3 + $0x768] sm:$0xff]
  %v389 = vld [vmem:[%s3 + $0x770] sm:$0xff]
  %v390 = vld [vmem:[%s3 + $0x778] sm:$0xff]
  %v391 = vld [vmem:[%s3 + $0x780] sm:$0xff]
  %v392 = vld [vmem:[%s3 + $0x788] sm:$0xff]
  %v393 = vld [vmem:[%s3 + $0x790] sm:$0xff]
  %v394 = vld [vmem:[%s3 + $0x798] sm:$0xff]
  %v395 = vld [vmem:[%s3 + $0x7a0] sm:$0xff]
  %v396 = vld [vmem:[%s3 + $0x7a8] sm:$0xff]
  %v397 = vld [vmem:[%s3 + $0x7b0] sm:$0xff]
  %v398 = vld [vmem:[%s3 + $0x7b8] sm:$0xff]
  %v399 = vld [vmem:[%s3 + $0x7c0] sm:$0xff]
  %v400 = vld [vmem:[%s3 + $0x7c8] sm:$0xff]
  %v401 = vld [vmem:[%s3 + $0x7d0] sm:$0xff]
  %v402 = vld [vmem:[%s3 + $0x7d8] sm:$0xff]
  %v403 = vld [vmem:[%s3 + $0x7e0] sm:$0xff]
  %v404 = vld [vmem:[%s3 + $0x7e8] sm:$0xff]
  %v405 = vld [vmem:[%s3 + $0x7f0] sm:$0xff]
  %v406 = vld [vmem:[%s3 + $0x7f8] sm:$0xff]
  %v663 = vunpack.c.l.b16 %v151
  %v664 = vunpack.c.h.b16 %v151
  %v665 = vunpack.c.l.b16 %v152
  %v666 = vunpack.c.h.b16 %v152
  %v667 = vunpack.c.l.b16 %v153
  %v668 = vunpack.c.h.b16 %v153
  %v669 = vunpack.c.l.b16 %v154
  %v670 = vunpack.c.h.b16 %v154
  %v671 = vunpack.c.l.b16 %v155
  %v672 = vunpack.c.h.b16 %v155
  %v673 = vunpack.c.l.b16 %v156
  %v674 = vunpack.c.h.b16 %v156
  %v675 = vunpack.c.l.b16 %v157
  %v676 = vunpack.c.h.b16 %v157
  %v677 = vunpack.c.l.b16 %v158
  %v678 = vunpack.c.h.b16 %v158
  %v679 = vunpack.c.l.b16 %v159
  %v680 = vunpack.c.h.b16 %v159
  %v681 = vunpack.c.l.b16 %v160
  %v682 = vunpack.c.h.b16 %v160
  %v683 = vunpack.c.l.b16 %v161
  %v684 = vunpack.c.h.b16 %v161
  %v685 = vunpack.c.l.b16 %v162
  %v686 = vunpack.c.h.b16 %v162
  %v687 = vunpack.c.l.b16 %v163
  %v688 = vunpack.c.h.b16 %v163
  %v689 = vunpack.c.l.b16 %v164
  %v690 = vunpack.c.h.b16 %v164
  %v691 = vunpack.c.l.b16 %v165
  %v692 = vunpack.c.h.b16 %v165
  %v693 = vunpack.c.l.b16 %v166
  %v694 = vunpack.c.h.b16 %v166
  %v695 = vunpack.c.l.b16 %v167
  %v696 = vunpack.c.h.b16 %v167
  %v697 = vunpack.c.l.b16 %v168
  %v698 = vunpack.c.h.b16 %v168
  %v699 = vunpack.c.l.b16 %v169
  %v700 = vunpack.c.h.b16 %v169
  %v701 = vunpack.c.l.b16 %v170
  %v702 = vunpack.c.h.b16 %v170
  %v703 = vunpack.c.l.b16 %v171
  %v704 = vunpack.c.h.b16 %v171
  %v705 = vunpack.c.l.b16 %v172
  %v706 = vunpack.c.h.b16 %v172
  %v707 = vunpack.c.l.b16 %v173
  %v708 = vunpack.c.h.b16 %v173
  %v709 = vunpack.c.l.b16 %v174
  %v710 = vunpack.c.h.b16 %v174
  %v711 = vunpack.c.l.b16 %v175
  %v712 = vunpack.c.h.b16 %v175
  %v713 = vunpack.c.l.b16 %v176
  %v714 = vunpack.c.h.b16 %v176
  %v715 = vunpack.c.l.b16 %v177
  %v716 = vunpack.c.h.b16 %v177
  %v717 = vunpack.c.l.b16 %v178
  %v718 = vunpack.c.h.b16 %v178
  %v719 = vunpack.c.l.b16 %v179
  %v720 = vunpack.c.h.b16 %v179
  %v721 = vunpack.c.l.b16 %v180
  %v722 = vunpack.c.h.b16 %v180
  %v723 = vunpack.c.l.b16 %v181
  %v724 = vunpack.c.h.b16 %v181
  %v725 = vunpack.c.l.b16 %v182
  %v726 = vunpack.c.h.b16 %v182
  %v727 = vunpack.c.l.b16 %v183
  %v728 = vunpack.c.h.b16 %v183
  %v729 = vunpack.c.l.b16 %v184
  %v730 = vunpack.c.h.b16 %v184
  %v731 = vunpack.c.l.b16 %v185
  %v732 = vunpack.c.h.b16 %v185
  %v733 = vunpack.c.l.b16 %v186
  %v734 = vunpack.c.h.b16 %v186
  %v735 = vunpack.c.l.b16 %v187
  %v736 = vunpack.c.h.b16 %v187
  %v737 = vunpack.c.l.b16 %v188
  %v738 = vunpack.c.h.b16 %v188
  %v739 = vunpack.c.l.b16 %v189
  %v740 = vunpack.c.h.b16 %v189
  %v741 = vunpack.c.l.b16 %v190
  %v742 = vunpack.c.h.b16 %v190
  %v743 = vunpack.c.l.b16 %v191
  %v744 = vunpack.c.h.b16 %v191
  %v745 = vunpack.c.l.b16 %v192
  %v746 = vunpack.c.h.b16 %v192
  %v747 = vunpack.c.l.b16 %v193
  %v748 = vunpack.c.h.b16 %v193
  %v749 = vunpack.c.l.b16 %v194
  %v750 = vunpack.c.h.b16 %v194
  %v751 = vunpack.c.l.b16 %v195
  %v752 = vunpack.c.h.b16 %v195
  %v753 = vunpack.c.l.b16 %v196
  %v754 = vunpack.c.h.b16 %v196
  %v755 = vunpack.c.l.b16 %v197
  %v756 = vunpack.c.h.b16 %v197
  %v757 = vunpack.c.l.b16 %v198
  %v758 = vunpack.c.h.b16 %v198
  %v759 = vunpack.c.l.b16 %v199
  %v760 = vunpack.c.h.b16 %v199
  %v761 = vunpack.c.l.b16 %v200
  %v762 = vunpack.c.h.b16 %v200
  %v763 = vunpack.c.l.b16 %v201
  %v764 = vunpack.c.h.b16 %v201
  %v765 = vunpack.c.l.b16 %v202
  %v766 = vunpack.c.h.b16 %v202
  %v767 = vunpack.c.l.b16 %v203
  %v768 = vunpack.c.h.b16 %v203
  %v769 = vunpack.c.l.b16 %v204
  %v770 = vunpack.c.h.b16 %v204
  %v771 = vunpack.c.l.b16 %v205
  %v772 = vunpack.c.h.b16 %v205
  %v773 = vunpack.c.l.b16 %v206
  %v774 = vunpack.c.h.b16 %v206
  %v775 = vunpack.c.l.b16 %v207
  %v776 = vunpack.c.h.b16 %v207
  %v777 = vunpack.c.l.b16 %v208
  %v778 = vunpack.c.h.b16 %v208
  %v779 = vunpack.c.l.b16 %v209
  %v780 = vunpack.c.h.b16 %v209
  %v781 = vunpack.c.l.b16 %v210
  %v782 = vunpack.c.h.b16 %v210
  %v783 = vunpack.c.l.b16 %v211
  %v784 = vunpack.c.h.b16 %v211
  %v785 = vunpack.c.l.b16 %v212
  %v786 = vunpack.c.h.b16 %v212
  %v787 = vunpack.c.l.b16 %v213
  %v788 = vunpack.c.h.b16 %v213
  %v789 = vunpack.c.l.b16 %v214
  %v790 = vunpack.c.h.b16 %v214
  %v791 = vunpack.c.l.b16 %v215
  %v792 = vunpack.c.h.b16 %v215
  %v793 = vunpack.c.l.b16 %v216
  %v794 = vunpack.c.h.b16 %v216
  %v795 = vunpack.c.l.b16 %v217
  %v796 = vunpack.c.h.b16 %v217
  %v797 = vunpack.c.l.b16 %v218
  %v798 = vunpack.c.h.b16 %v218
  %v799 = vunpack.c.l.b16 %v219
  %v800 = vunpack.c.h.b16 %v219
  %v801 = vunpack.c.l.b16 %v220
  %v802 = vunpack.c.h.b16 %v220
  %v803 = vunpack.c.l.b16 %v221
  %v804 = vunpack.c.h.b16 %v221
  %v805 = vunpack.c.l.b16 %v222
  %v806 = vunpack.c.h.b16 %v222
  %v807 = vunpack.c.l.b16 %v223
  %v808 = vunpack.c.h.b16 %v223
  %v809 = vunpack.c.l.b16 %v224
  %v810 = vunpack.c.h.b16 %v224
  %v811 = vunpack.c.l.b16 %v225
  %v812 = vunpack.c.h.b16 %v225
  %v813 = vunpack.c.l.b16 %v226
  %v814 = vunpack.c.h.b16 %v226
  %v815 = vunpack.c.l.b16 %v227
  %v816 = vunpack.c.h.b16 %v227
  %v817 = vunpack.c.l.b16 %v228
  %v818 = vunpack.c.h.b16 %v228
  %v819 = vunpack.c.l.b16 %v229
  %v820 = vunpack.c.h.b16 %v229
  %v821 = vunpack.c.l.b16 %v230
  %v822 = vunpack.c.h.b16 %v230
  %v823 = vunpack.c.l.b16 %v231
  %v824 = vunpack.c.h.b16 %v231
  %v825 = vunpack.c.l.b16 %v232
  %v826 = vunpack.c.h.b16 %v232
  %v827 = vunpack.c.l.b16 %v233
  %v828 = vunpack.c.h.b16 %v233
  %v829 = vunpack.c.l.b16 %v234
  %v830 = vunpack.c.h.b16 %v234
  %v831 = vunpack.c.l.b16 %v235
  %v832 = vunpack.c.h.b16 %v235
  %v833 = vunpack.c.l.b16 %v236
  %v834 = vunpack.c.h.b16 %v236
  %v835 = vunpack.c.l.b16 %v237
  %v836 = vunpack.c.h.b16 %v237
  %v837 = vunpack.c.l.b16 %v238
  %v838 = vunpack.c.h.b16 %v238
  %v839 = vunpack.c.l.b16 %v239
  %v840 = vunpack.c.h.b16 %v239
  %v841 = vunpack.c.l.b16 %v240
  %v842 = vunpack.c.h.b16 %v240
  %v843 = vunpack.c.l.b16 %v241
  %v844 = vunpack.c.h.b16 %v241
  %v845 = vunpack.c.l.b16 %v242
  %v846 = vunpack.c.h.b16 %v242
  %v847 = vunpack.c.l.b16 %v243
  %v848 = vunpack.c.h.b16 %v243
  %v849 = vunpack.c.l.b16 %v244
  %v850 = vunpack.c.h.b16 %v244
  %v851 = vunpack.c.l.b16 %v245
  %v852 = vunpack.c.h.b16 %v245
  %v853 = vunpack.c.l.b16 %v246
  %v854 = vunpack.c.h.b16 %v246
  %v855 = vunpack.c.l.b16 %v247
  %v856 = vunpack.c.h.b16 %v247
  %v857 = vunpack.c.l.b16 %v248
  %v858 = vunpack.c.h.b16 %v248
  %v859 = vunpack.c.l.b16 %v249
  %v860 = vunpack.c.h.b16 %v249
  %v861 = vunpack.c.l.b16 %v250
  %v862 = vunpack.c.h.b16 %v250
  %v863 = vunpack.c.l.b16 %v251
  %v864 = vunpack.c.h.b16 %v251
  %v865 = vunpack.c.l.b16 %v252
  %v866 = vunpack.c.h.b16 %v252
  %v867 = vunpack.c.l.b16 %v253
  %v868 = vunpack.c.h.b16 %v253
  %v869 = vunpack.c.l.b16 %v254
  %v870 = vunpack.c.h.b16 %v254
  %v871 = vunpack.c.l.b16 %v255
  %v872 = vunpack.c.h.b16 %v255
  %v873 = vunpack.c.l.b16 %v256
  %v874 = vunpack.c.h.b16 %v256
  %v875 = vunpack.c.l.b16 %v257
  %v876 = vunpack.c.h.b16 %v257
  %v877 = vunpack.c.l.b16 %v258
  %v878 = vunpack.c.h.b16 %v258
  %v879 = vunpack.c.l.b16 %v259
  %v880 = vunpack.c.h.b16 %v259
  %v881 = vunpack.c.l.b16 %v260
  %v882 = vunpack.c.h.b16 %v260
  %v883 = vunpack.c.l.b16 %v261
  %v884 = vunpack.c.h.b16 %v261
  %v885 = vunpack.c.l.b16 %v262
  %v886 = vunpack.c.h.b16 %v262
  %v887 = vunpack.c.l.b16 %v263
  %v888 = vunpack.c.h.b16 %v263
  %v889 = vunpack.c.l.b16 %v264
  %v890 = vunpack.c.h.b16 %v264
  %v891 = vunpack.c.l.b16 %v265
  %v892 = vunpack.c.h.b16 %v265
  %v893 = vunpack.c.l.b16 %v266
  %v894 = vunpack.c.h.b16 %v266
  %v895 = vunpack.c.l.b16 %v267
  %v896 = vunpack.c.h.b16 %v267
  %v897 = vunpack.c.l.b16 %v268
  %v898 = vunpack.c.h.b16 %v268
  %v899 = vunpack.c.l.b16 %v269
  %v900 = vunpack.c.h.b16 %v269
  %v901 = vunpack.c.l.b16 %v270
  %v902 = vunpack.c.h.b16 %v270
  %v903 = vunpack.c.l.b16 %v271
  %v904 = vunpack.c.h.b16 %v271
  %v905 = vunpack.c.l.b16 %v272
  %v906 = vunpack.c.h.b16 %v272
  %v907 = vunpack.c.l.b16 %v273
  %v908 = vunpack.c.h.b16 %v273
  %v909 = vunpack.c.l.b16 %v274
  %v910 = vunpack.c.h.b16 %v274
  %v911 = vunpack.c.l.b16 %v275
  %v912 = vunpack.c.h.b16 %v275
  %v913 = vunpack.c.l.b16 %v276
  %v914 = vunpack.c.h.b16 %v276
  %v915 = vunpack.c.l.b16 %v277
  %v916 = vunpack.c.h.b16 %v277
  %v917 = vunpack.c.l.b16 %v278
  %v918 = vunpack.c.h.b16 %v278
  %v919 = vunpack.c.l.b16 %v279
  %v920 = vunpack.c.h.b16 %v279
  %v921 = vunpack.c.l.b16 %v280
  %v922 = vunpack.c.h.b16 %v280
  %v923 = vunpack.c.l.b16 %v281
  %v924 = vunpack.c.h.b16 %v281
  %v925 = vunpack.c.l.b16 %v282
  %v926 = vunpack.c.h.b16 %v282
  %v927 = vunpack.c.l.b16 %v283
  %v928 = vunpack.c.h.b16 %v283
  %v929 = vunpack.c.l.b16 %v284
  %v930 = vunpack.c.h.b16 %v284
  %v931 = vunpack.c.l.b16 %v285
  %v932 = vunpack.c.h.b16 %v285
  %v933 = vunpack.c.l.b16 %v286
  %v934 = vunpack.c.h.b16 %v286
  %v935 = vunpack.c.l.b16 %v287
  %v936 = vunpack.c.h.b16 %v287
  %v937 = vunpack.c.l.b16 %v288
  %v938 = vunpack.c.h.b16 %v288
  %v939 = vunpack.c.l.b16 %v289
  %v940 = vunpack.c.h.b16 %v289
  %v941 = vunpack.c.l.b16 %v290
  %v942 = vunpack.c.h.b16 %v290
  %v943 = vunpack.c.l.b16 %v291
  %v944 = vunpack.c.h.b16 %v291
  %v945 = vunpack.c.l.b16 %v292
  %v946 = vunpack.c.h.b16 %v292
  %v947 = vunpack.c.l.b16 %v293
  %v948 = vunpack.c.h.b16 %v293
  %v949 = vunpack.c.l.b16 %v294
  %v950 = vunpack.c.h.b16 %v294
  %v951 = vunpack.c.l.b16 %v295
  %v952 = vunpack.c.h.b16 %v295
  %v953 = vunpack.c.l.b16 %v296
  %v954 = vunpack.c.h.b16 %v296
  %v955 = vunpack.c.l.b16 %v297
  %v956 = vunpack.c.h.b16 %v297
  %v957 = vunpack.c.l.b16 %v298
  %v958 = vunpack.c.h.b16 %v298
  %v959 = vunpack.c.l.b16 %v299
  %v960 = vunpack.c.h.b16 %v299
  %v961 = vunpack.c.l.b16 %v300
  %v962 = vunpack.c.h.b16 %v300
  %v963 = vunpack.c.l.b16 %v301
  %v964 = vunpack.c.h.b16 %v301
  %v965 = vunpack.c.l.b16 %v302
  %v966 = vunpack.c.h.b16 %v302
  %v967 = vunpack.c.l.b16 %v303
  %v968 = vunpack.c.h.b16 %v303
  %v969 = vunpack.c.l.b16 %v304
  %v970 = vunpack.c.h.b16 %v304
  %v971 = vunpack.c.l.b16 %v305
  %v972 = vunpack.c.h.b16 %v305
  %v973 = vunpack.c.l.b16 %v306
  %v974 = vunpack.c.h.b16 %v306
  %v975 = vunpack.c.l.b16 %v307
  %v976 = vunpack.c.h.b16 %v307
  %v977 = vunpack.c.l.b16 %v308
  %v978 = vunpack.c.h.b16 %v308
  %v979 = vunpack.c.l.b16 %v309
  %v980 = vunpack.c.h.b16 %v309
  %v981 = vunpack.c.l.b16 %v310
  %v982 = vunpack.c.h.b16 %v310
  %v983 = vunpack.c.l.b16 %v311
  %v984 = vunpack.c.h.b16 %v311
  %v985 = vunpack.c.l.b16 %v312
  %v986 = vunpack.c.h.b16 %v312
  %v987 = vunpack.c.l.b16 %v313
  %v988 = vunpack.c.h.b16 %v313
  %v989 = vunpack.c.l.b16 %v314
  %v990 = vunpack.c.h.b16 %v314
  %v991 = vunpack.c.l.b16 %v315
  %v992 = vunpack.c.h.b16 %v315
  %v993 = vunpack.c.l.b16 %v316
  %v994 = vunpack.c.h.b16 %v316
  %v995 = vunpack.c.l.b16 %v317
  %v996 = vunpack.c.h.b16 %v317
  %v997 = vunpack.c.l.b16 %v318
  %v998 = vunpack.c.h.b16 %v318
  %v999 = vunpack.c.l.b16 %v319
  %v1000 = vunpack.c.h.b16 %v319
  %v1001 = vunpack.c.l.b16 %v320
  %v1002 = vunpack.c.h.b16 %v320
  %v1003 = vunpack.c.l.b16 %v321
  %v1004 = vunpack.c.h.b16 %v321
  %v1005 = vunpack.c.l.b16 %v322
  %v1006 = vunpack.c.h.b16 %v322
  %v1007 = vunpack.c.l.b16 %v323
  %v1008 = vunpack.c.h.b16 %v323
  %v1009 = vunpack.c.l.b16 %v324
  %v1010 = vunpack.c.h.b16 %v324
  %v1011 = vunpack.c.l.b16 %v325
  %v1012 = vunpack.c.h.b16 %v325
  %v1013 = vunpack.c.l.b16 %v326
  %v1014 = vunpack.c.h.b16 %v326
  %v1015 = vunpack.c.l.b16 %v327
  %v1016 = vunpack.c.h.b16 %v327
  %v1017 = vunpack.c.l.b16 %v328
  %v1018 = vunpack.c.h.b16 %v328
  %v1019 = vunpack.c.l.b16 %v329
  %v1020 = vunpack.c.h.b16 %v329
  %v1021 = vunpack.c.l.b16 %v330
  %v1022 = vunpack.c.h.b16 %v330
  %v1023 = vunpack.c.l.b16 %v331
  %v1024 = vunpack.c.h.b16 %v331
  %v1025 = vunpack.c.l.b16 %v332
  %v1026 = vunpack.c.h.b16 %v332
  %v1027 = vunpack.c.l.b16 %v333
  %v1028 = vunpack.c.h.b16 %v333
  %v1029 = vunpack.c.l.b16 %v334
  %v1030 = vunpack.c.h.b16 %v334
  %v1031 = vunpack.c.l.b16 %v335
  %v1032 = vunpack.c.h.b16 %v335
  %v1033 = vunpack.c.l.b16 %v336
  %v1034 = vunpack.c.h.b16 %v336
  %v1035 = vunpack.c.l.b16 %v337
  %v1036 = vunpack.c.h.b16 %v337
  %v1037 = vunpack.c.l.b16 %v338
  %v1038 = vunpack.c.h.b16 %v338
  %v1039 = vunpack.c.l.b16 %v339
  %v1040 = vunpack.c.h.b16 %v339
  %v1041 = vunpack.c.l.b16 %v340
  %v1042 = vunpack.c.h.b16 %v340
  %v1043 = vunpack.c.l.b16 %v341
  %v1044 = vunpack.c.h.b16 %v341
  %v1045 = vunpack.c.l.b16 %v342
  %v1046 = vunpack.c.h.b16 %v342
  %v1047 = vunpack.c.l.b16 %v343
  %v1048 = vunpack.c.h.b16 %v343
  %v1049 = vunpack.c.l.b16 %v344
  %v1050 = vunpack.c.h.b16 %v344
  %v1051 = vunpack.c.l.b16 %v345
  %v1052 = vunpack.c.h.b16 %v345
  %v1053 = vunpack.c.l.b16 %v346
  %v1054 = vunpack.c.h.b16 %v346
  %v1055 = vunpack.c.l.b16 %v347
  %v1056 = vunpack.c.h.b16 %v347
  %v1057 = vunpack.c.l.b16 %v348
  %v1058 = vunpack.c.h.b16 %v348
  %v1059 = vunpack.c.l.b16 %v349
  %v1060 = vunpack.c.h.b16 %v349
  %v1061 = vunpack.c.l.b16 %v350
  %v1062 = vunpack.c.h.b16 %v350
  %v1063 = vunpack.c.l.b16 %v351
  %v1064 = vunpack.c.h.b16 %v351
  %v1065 = vunpack.c.l.b16 %v352
  %v1066 = vunpack.c.h.b16 %v352
  %v1067 = vunpack.c.l.b16 %v353
  %v1068 = vunpack.c.h.b16 %v353
  %v1069 = vunpack.c.l.b16 %v354
  %v1070 = vunpack.c.h.b16 %v354
  %v1071 = vunpack.c.l.b16 %v355
  %v1072 = vunpack.c.h.b16 %v355
  %v1073 = vunpack.c.l.b16 %v356
  %v1074 = vunpack.c.h.b16 %v356
  %v1075 = vunpack.c.l.b16 %v357
  %v1076 = vunpack.c.h.b16 %v357
  %v1077 = vunpack.c.l.b16 %v358
  %v1078 = vunpack.c.h.b16 %v358
  %v1079 = vunpack.c.l.b16 %v359
  %v1080 = vunpack.c.h.b16 %v359
  %v1081 = vunpack.c.l.b16 %v360
  %v1082 = vunpack.c.h.b16 %v360
  %v1083 = vunpack.c.l.b16 %v361
  %v1084 = vunpack.c.h.b16 %v361
  %v1085 = vunpack.c.l.b16 %v362
  %v1086 = vunpack.c.h.b16 %v362
  %v1087 = vunpack.c.l.b16 %v363
  %v1088 = vunpack.c.h.b16 %v363
  %v1089 = vunpack.c.l.b16 %v364
  %v1090 = vunpack.c.h.b16 %v364
  %v1091 = vunpack.c.l.b16 %v365
  %v1092 = vunpack.c.h.b16 %v365
  %v1093 = vunpack.c.l.b16 %v366
  %v1094 = vunpack.c.h.b16 %v366
  %v1095 = vunpack.c.l.b16 %v367
  %v1096 = vunpack.c.h.b16 %v367
  %v1097 = vunpack.c.l.b16 %v368
  %v1098 = vunpack.c.h.b16 %v368
  %v1099 = vunpack.c.l.b16 %v369
  %v1100 = vunpack.c.h.b16 %v369
  %v1101 = vunpack.c.l.b16 %v370
  %v1102 = vunpack.c.h.b16 %v370
  %v1103 = vunpack.c.l.b16 %v371
  %v1104 = vunpack.c.h.b16 %v371
  %v1105 = vunpack.c.l.b16 %v372
  %v1106 = vunpack.c.h.b16 %v372
  %v1107 = vunpack.c.l.b16 %v373
  %v1108 = vunpack.c.h.b16 %v373
  %v1109 = vunpack.c.l.b16 %v374
  %v1110 = vunpack.c.h.b16 %v374
  %v1111 = vunpack.c.l.b16 %v375
  %v1112 = vunpack.c.h.b16 %v375
  %v1113 = vunpack.c.l.b16 %v376
  %v1114 = vunpack.c.h.b16 %v376
  %v1115 = vunpack.c.l.b16 %v377
  %v1116 = vunpack.c.h.b16 %v377
  %v1117 = vunpack.c.l.b16 %v378
  %v1118 = vunpack.c.h.b16 %v378
  %v1119 = vunpack.c.l.b16 %v379
  %v1120 = vunpack.c.h.b16 %v379
  %v1121 = vunpack.c.l.b16 %v380
  %v1122 = vunpack.c.h.b16 %v380
  %v1123 = vunpack.c.l.b16 %v381
  %v1124 = vunpack.c.h.b16 %v381
  %v1125 = vunpack.c.l.b16 %v382
  %v1126 = vunpack.c.h.b16 %v382
  %v1127 = vunpack.c.l.b16 %v383
  %v1128 = vunpack.c.h.b16 %v383
  %v1129 = vunpack.c.l.b16 %v384
  %v1130 = vunpack.c.h.b16 %v384
  %v1131 = vunpack.c.l.b16 %v385
  %v1132 = vunpack.c.h.b16 %v385
  %v1133 = vunpack.c.l.b16 %v386
  %v1134 = vunpack.c.h.b16 %v386
  %v1135 = vunpack.c.l.b16 %v387
  %v1136 = vunpack.c.h.b16 %v387
  %v1137 = vunpack.c.l.b16 %v388
  %v1138 = vunpack.c.h.b16 %v388
  %v1139 = vunpack.c.l.b16 %v389
  %v1140 = vunpack.c.h.b16 %v389
  %v1141 = vunpack.c.l.b16 %v390
  %v1142 = vunpack.c.h.b16 %v390
  %v1143 = vunpack.c.l.b16 %v391
  %v1144 = vunpack.c.h.b16 %v391
  %v1145 = vunpack.c.l.b16 %v392
  %v1146 = vunpack.c.h.b16 %v392
  %v1147 = vunpack.c.l.b16 %v393
  %v1148 = vunpack.c.h.b16 %v393
  %v1149 = vunpack.c.l.b16 %v394
  %v1150 = vunpack.c.h.b16 %v394
  %v1151 = vunpack.c.l.b16 %v395
  %v1152 = vunpack.c.h.b16 %v395
  %v1153 = vunpack.c.l.b16 %v396
  %v1154 = vunpack.c.h.b16 %v396
  %v1155 = vunpack.c.l.b16 %v397
  %v1156 = vunpack.c.h.b16 %v397
  %v1157 = vunpack.c.l.b16 %v398
  %v1158 = vunpack.c.h.b16 %v398
  %v1159 = vunpack.c.l.b16 %v399
  %v1160 = vunpack.c.h.b16 %v399
  %v1161 = vunpack.c.l.b16 %v400
  %v1162 = vunpack.c.h.b16 %v400
  %v1163 = vunpack.c.l.b16 %v401
  %v1164 = vunpack.c.h.b16 %v401
  %v1165 = vunpack.c.l.b16 %v402
  %v1166 = vunpack.c.h.b16 %v402
  %v1167 = vunpack.c.l.b16 %v403
  %v1168 = vunpack.c.h.b16 %v403
  %v1169 = vunpack.c.l.b16 %v404
  %v1170 = vunpack.c.h.b16 %v404
  %v1171 = vunpack.c.l.b16 %v405
  %v1172 = vunpack.c.h.b16 %v405
  %v1173 = vunpack.c.l.b16 %v406
  %v1174 = vunpack.c.h.b16 %v406
  %v1175 = vpack.c.b16 %v667, %v663
  %v1176 = vpack.c.b16 %v668, %v664
  %v1177 = vpack.c.b16 %v669, %v665
  %v1178 = vpack.c.b16 %v670, %v666
  %v1179 = vpack.c.b16 %v675, %v671
  %v1180 = vpack.c.b16 %v676, %v672
  %v1181 = vpack.c.b16 %v677, %v673
  %v1182 = vpack.c.b16 %v678, %v674
  %v1183 = vpack.c.b16 %v683, %v679
  %v1184 = vpack.c.b16 %v684, %v680
  %v1185 = vpack.c.b16 %v685, %v681
  %v1186 = vpack.c.b16 %v686, %v682
  %v1187 = vpack.c.b16 %v691, %v687
  %v1188 = vpack.c.b16 %v692, %v688
  %v1189 = vpack.c.b16 %v693, %v689
  %v1190 = vpack.c.b16 %v694, %v690
  %v1191 = vpack.c.b16 %v699, %v695
  %v1192 = vpack.c.b16 %v700, %v696
  %v1193 = vpack.c.b16 %v701, %v697
  %v1194 = vpack.c.b16 %v702, %v698
  %v1195 = vpack.c.b16 %v707, %v703
  %v1196 = vpack.c.b16 %v708, %v704
  %v1197 = vpack.c.b16 %v709, %v705
  %v1198 = vpack.c.b16 %v710, %v706
  %v1199 = vpack.c.b16 %v715, %v711
  %v1200 = vpack.c.b16 %v716, %v712
  %v1201 = vpack.c.b16 %v717, %v713
  %v1202 = vpack.c.b16 %v718, %v714
  %v1203 = vpack.c.b16 %v723, %v719
  %v1204 = vpack.c.b16 %v724, %v720
  %v1205 = vpack.c.b16 %v725, %v721
  %v1206 = vpack.c.b16 %v726, %v722
  %v1207 = vpack.c.b16 %v731, %v727
  %v1208 = vpack.c.b16 %v732, %v728
  %v1209 = vpack.c.b16 %v733, %v729
  %v1210 = vpack.c.b16 %v734, %v730
  %v1211 = vpack.c.b16 %v739, %v735
  %v1212 = vpack.c.b16 %v740, %v736
  %v1213 = vpack.c.b16 %v741, %v737
  %v1214 = vpack.c.b16 %v742, %v738
  %v1215 = vpack.c.b16 %v747, %v743
  %v1216 = vpack.c.b16 %v748, %v744
  %v1217 = vpack.c.b16 %v749, %v745
  %v1218 = vpack.c.b16 %v750, %v746
  %v1219 = vpack.c.b16 %v755, %v751
  %v1220 = vpack.c.b16 %v756, %v752
  %v1221 = vpack.c.b16 %v757, %v753
  %v1222 = vpack.c.b16 %v758, %v754
  %v1223 = vpack.c.b16 %v763, %v759
  %v1224 = vpack.c.b16 %v764, %v760
  %v1225 = vpack.c.b16 %v765, %v761
  %v1226 = vpack.c.b16 %v766, %v762
  %v1227 = vpack.c.b16 %v771, %v767
  %v1228 = vpack.c.b16 %v772, %v768
  %v1229 = vpack.c.b16 %v773, %v769
  %v1230 = vpack.c.b16 %v774, %v770
  %v1231 = vpack.c.b16 %v779, %v775
  %v1232 = vpack.c.b16 %v780, %v776
  %v1233 = vpack.c.b16 %v781, %v777
  %v1234 = vpack.c.b16 %v782, %v778
  %v1235 = vpack.c.b16 %v787, %v783
  %v1236 = vpack.c.b16 %v788, %v784
  %v1237 = vpack.c.b16 %v789, %v785
  %v1238 = vpack.c.b16 %v790, %v786
  %v1239 = vpack.c.b16 %v795, %v791
  %v1240 = vpack.c.b16 %v796, %v792
  %v1241 = vpack.c.b16 %v797, %v793
  %v1242 = vpack.c.b16 %v798, %v794
  %v1243 = vpack.c.b16 %v803, %v799
  %v1244 = vpack.c.b16 %v804, %v800
  %v1245 = vpack.c.b16 %v805, %v801
  %v1246 = vpack.c.b16 %v806, %v802
  %v1247 = vpack.c.b16 %v811, %v807
  %v1248 = vpack.c.b16 %v812, %v808
  %v1249 = vpack.c.b16 %v813, %v809
  %v1250 = vpack.c.b16 %v814, %v810
  %v1251 = vpack.c.b16 %v819, %v815
  %v1252 = vpack.c.b16 %v820, %v816
  %v1253 = vpack.c.b16 %v821, %v817
  %v1254 = vpack.c.b16 %v822, %v818
  %v1255 = vpack.c.b16 %v827, %v823
  %v1256 = vpack.c.b16 %v828, %v824
  %v1257 = vpack.c.b16 %v829, %v825
  %v1258 = vpack.c.b16 %v830, %v826
  %v1259 = vpack.c.b16 %v835, %v831
  %v1260 = vpack.c.b16 %v836, %v832
  %v1261 = vpack.c.b16 %v837, %v833
  %v1262 = vpack.c.b16 %v838, %v834
  %v1263 = vpack.c.b16 %v843, %v839
  %v1264 = vpack.c.b16 %v844, %v840
  %v1265 = vpack.c.b16 %v845, %v841
  %v1266 = vpack.c.b16 %v846, %v842
  %v1267 = vpack.c.b16 %v851, %v847
  %v1268 = vpack.c.b16 %v852, %v848
  %v1269 = vpack.c.b16 %v853, %v849
  %v1270 = vpack.c.b16 %v854, %v850
  %v1271 = vpack.c.b16 %v859, %v855
  %v1272 = vpack.c.b16 %v860, %v856
  %v1273 = vpack.c.b16 %v861, %v857
  %v1274 = vpack.c.b16 %v862, %v858
  %v1275 = vpack.c.b16 %v867, %v863
  %v1276 = vpack.c.b16 %v868, %v864
  %v1277 = vpack.c.b16 %v869, %v865
  %v1278 = vpack.c.b16 %v870, %v866
  %v1279 = vpack.c.b16 %v875, %v871
  %v1280 = vpack.c.b16 %v876, %v872
  %v1281 = vpack.c.b16 %v877, %v873
  %v1282 = vpack.c.b16 %v878, %v874
  %v1283 = vpack.c.b16 %v883, %v879
  %v1284 = vpack.c.b16 %v884, %v880
  %v1285 = vpack.c.b16 %v885, %v881
  %v1286 = vpack.c.b16 %v886, %v882
  %v1287 = vpack.c.b16 %v891, %v887
  %v1288 = vpack.c.b16 %v892, %v888
  %v1289 = vpack.c.b16 %v893, %v889
  %v1290 = vpack.c.b16 %v894, %v890
  %v1291 = vpack.c.b16 %v899, %v895
  %v1292 = vpack.c.b16 %v900, %v896
  %v1293 = vpack.c.b16 %v901, %v897
  %v1294 = vpack.c.b16 %v902, %v898
  %v1295 = vpack.c.b16 %v907, %v903
  %v1296 = vpack.c.b16 %v908, %v904
  %v1297 = vpack.c.b16 %v909, %v905
  %v1298 = vpack.c.b16 %v910, %v906
  %v1299 = vpack.c.b16 %v915, %v911
  %v1300 = vpack.c.b16 %v916, %v912
  %v1301 = vpack.c.b16 %v917, %v913
  %v1302 = vpack.c.b16 %v918, %v914
  %v1303 = vpack.c.b16 %v923, %v919
  %v1304 = vpack.c.b16 %v924, %v920
  %v1305 = vpack.c.b16 %v925, %v921
  %v1306 = vpack.c.b16 %v926, %v922
  %v1307 = vpack.c.b16 %v931, %v927
  %v1308 = vpack.c.b16 %v932, %v928
  %v1309 = vpack.c.b16 %v933, %v929
  %v1310 = vpack.c.b16 %v934, %v930
  %v1311 = vpack.c.b16 %v939, %v935
  %v1312 = vpack.c.b16 %v940, %v936
  %v1313 = vpack.c.b16 %v941, %v937
  %v1314 = vpack.c.b16 %v942, %v938
  %v1315 = vpack.c.b16 %v947, %v943
  %v1316 = vpack.c.b16 %v948, %v944
  %v1317 = vpack.c.b16 %v949, %v945
  %v1318 = vpack.c.b16 %v950, %v946
  %v1319 = vpack.c.b16 %v955, %v951
  %v1320 = vpack.c.b16 %v956, %v952
  %v1321 = vpack.c.b16 %v957, %v953
  %v1322 = vpack.c.b16 %v958, %v954
  %v1323 = vpack.c.b16 %v963, %v959
  %v1324 = vpack.c.b16 %v964, %v960
  %v1325 = vpack.c.b16 %v965, %v961
  %v1326 = vpack.c.b16 %v966, %v962
  %v1327 = vpack.c.b16 %v971, %v967
  %v1328 = vpack.c.b16 %v972, %v968
  %v1329 = vpack.c.b16 %v973, %v969
  %v1330 = vpack.c.b16 %v974, %v970
  %v1331 = vpack.c.b16 %v979, %v975
  %v1332 = vpack.c.b16 %v980, %v976
  %v1333 = vpack.c.b16 %v981, %v977
  %v1334 = vpack.c.b16 %v982, %v978
  %v1335 = vpack.c.b16 %v987, %v983
  %v1336 = vpack.c.b16 %v988, %v984
  %v1337 = vpack.c.b16 %v989, %v985
  %v1338 = vpack.c.b16 %v990, %v986
  %v1339 = vpack.c.b16 %v995, %v991
  %v1340 = vpack.c.b16 %v996, %v992
  %v1341 = vpack.c.b16 %v997, %v993
  %v1342 = vpack.c.b16 %v998, %v994
  %v1343 = vpack.c.b16 %v1003, %v999
  %v1344 = vpack.c.b16 %v1004, %v1000
  %v1345 = vpack.c.b16 %v1005, %v1001
  %v1346 = vpack.c.b16 %v1006, %v1002
  %v1347 = vpack.c.b16 %v1011, %v1007
  %v1348 = vpack.c.b16 %v1012, %v1008
  %v1349 = vpack.c.b16 %v1013, %v1009
  %v1350 = vpack.c.b16 %v1014, %v1010
  %v1351 = vpack.c.b16 %v1019, %v1015
  %v1352 = vpack.c.b16 %v1020, %v1016
  %v1353 = vpack.c.b16 %v1021, %v1017
  %v1354 = vpack.c.b16 %v1022, %v1018
  %v1355 = vpack.c.b16 %v1027, %v1023
  %v1356 = vpack.c.b16 %v1028, %v1024
  %v1357 = vpack.c.b16 %v1029, %v1025
  %v1358 = vpack.c.b16 %v1030, %v1026
  %v1359 = vpack.c.b16 %v1035, %v1031
  %v1360 = vpack.c.b16 %v1036, %v1032
  %v1361 = vpack.c.b16 %v1037, %v1033
  %v1362 = vpack.c.b16 %v1038, %v1034
  %v1363 = vpack.c.b16 %v1043, %v1039
  %v1364 = vpack.c.b16 %v1044, %v1040
  %v1365 = vpack.c.b16 %v1045, %v1041
  %v1366 = vpack.c.b16 %v1046, %v1042
  %v1367 = vpack.c.b16 %v1051, %v1047
  %v1368 = vpack.c.b16 %v1052, %v1048
  %v1369 = vpack.c.b16 %v1053, %v1049
  %v1370 = vpack.c.b16 %v1054, %v1050
  %v1371 = vpack.c.b16 %v1059, %v1055
  %v1372 = vpack.c.b16 %v1060, %v1056
  %v1373 = vpack.c.b16 %v1061, %v1057
  %v1374 = vpack.c.b16 %v1062, %v1058
  %v1375 = vpack.c.b16 %v1067, %v1063
  %v1376 = vpack.c.b16 %v1068, %v1064
  %v1377 = vpack.c.b16 %v1069, %v1065
  %v1378 = vpack.c.b16 %v1070, %v1066
  %v1379 = vpack.c.b16 %v1075, %v1071
  %v1380 = vpack.c.b16 %v1076, %v1072
  %v1381 = vpack.c.b16 %v1077, %v1073
  %v1382 = vpack.c.b16 %v1078, %v1074
  %v1383 = vpack.c.b16 %v1083, %v1079
  %v1384 = vpack.c.b16 %v1084, %v1080
  %v1385 = vpack.c.b16 %v1085, %v1081
  %v1386 = vpack.c.b16 %v1086, %v1082
  %v1387 = vpack.c.b16 %v1091, %v1087
  %v1388 = vpack.c.b16 %v1092, %v1088
  %v1389 = vpack.c.b16 %v1093, %v1089
  %v1390 = vpack.c.b16 %v1094, %v1090
  %v1391 = vpack.c.b16 %v1099, %v1095
  %v1392 = vpack.c.b16 %v1100, %v1096
  %v1393 = vpack.c.b16 %v1101, %v1097
  %v1394 = vpack.c.b16 %v1102, %v1098
  %v1395 = vpack.c.b16 %v1107, %v1103
  %v1396 = vpack.c.b16 %v1108, %v1104
  %v1397 = vpack.c.b16 %v1109, %v1105
  %v1398 = vpack.c.b16 %v1110, %v1106
  %v1399 = vpack.c.b16 %v1115, %v1111
  %v1400 = vpack.c.b16 %v1116, %v1112
  %v1401 = vpack.c.b16 %v1117, %v1113
  %v1402 = vpack.c.b16 %v1118, %v1114
  %v1403 = vpack.c.b16 %v1123, %v1119
  %v1404 = vpack.c.b16 %v1124, %v1120
  %v1405 = vpack.c.b16 %v1125, %v1121
  %v1406 = vpack.c.b16 %v1126, %v1122
  %v1407 = vpack.c.b16 %v1131, %v1127
  %v1408 = vpack.c.b16 %v1132, %v1128
  %v1409 = vpack.c.b16 %v1133, %v1129
  %v1410 = vpack.c.b16 %v1134, %v1130
  %v1411 = vpack.c.b16 %v1139, %v1135
  %v1412 = vpack.c.b16 %v1140, %v1136
  %v1413 = vpack.c.b16 %v1141, %v1137
  %v1414 = vpack.c.b16 %v1142, %v1138
  %v1415 = vpack.c.b16 %v1147, %v1143
  %v1416 = vpack.c.b16 %v1148, %v1144
  %v1417 = vpack.c.b16 %v1149, %v1145
  %v1418 = vpack.c.b16 %v1150, %v1146
  %v1419 = vpack.c.b16 %v1155, %v1151
  %v1420 = vpack.c.b16 %v1156, %v1152
  %v1421 = vpack.c.b16 %v1157, %v1153
  %v1422 = vpack.c.b16 %v1158, %v1154
  %v1423 = vpack.c.b16 %v1163, %v1159
  %v1424 = vpack.c.b16 %v1164, %v1160
  %v1425 = vpack.c.b16 %v1165, %v1161
  %v1426 = vpack.c.b16 %v1166, %v1162
  %v1427 = vpack.c.b16 %v1171, %v1167
  %v1428 = vpack.c.b16 %v1172, %v1168
  %v1429 = vpack.c.b16 %v1173, %v1169
  %v1430 = vpack.c.b16 %v1174, %v1170
  %1687 = vmatpush.bf16.msra.mxu0 %v1203
  %1688 = vmatpush.bf16.msra.mxu0 %v1199
  %1689 = vmatpush.bf16.msra.mxu0 %v1195
  %1690 = vmatpush.bf16.msra.mxu0 %v1191
  %1691 = vmatpush.bf16.msra.mxu0 %v1187
  %1692 = vmatpush.bf16.msra.mxu0 %v1183
  %1693 = vmatpush.bf16.msra.mxu0 %v1179
  %1694 = vmatpush.bf16.msra.mxu0 %v1175
  %1695 = vmatmul.bf16.gmra.mxu0 %v143
  %v1696 = vpop.f32.mrf.mxu0
  %v1697 = vadd.f32 0.0, %v1696
  %v1698 = vpop.f32.mrf.mxu0
  %1699 = vdwg.mxu0
  %1700 = vmatpush.bf16.msra.mxu0 %v1235
  %1701 = vmatpush.bf16.msra.mxu0 %v1231
  %1702 = vmatpush.bf16.msra.mxu0 %v1227
  %1703 = vmatpush.bf16.msra.mxu0 %v1223
  %1704 = vmatpush.bf16.msra.mxu0 %v1219
  %1705 = vmatpush.bf16.msra.mxu0 %v1215
  %1706 = vmatpush.bf16.msra.mxu0 %v1211
  %1707 = vmatpush.bf16.msra.mxu0 %v1207
  %1708 = vmatmul.bf16.gmra.mxu0 %v144
  %v1709 = vpop.f32.mrf.mxu0
  %v1710 = vadd.f32 %v1697, %v1709
  %v1711 = vpop.f32.mrf.mxu0
  %1712 = vdwg.mxu0
  %1713 = vmatpush.bf16.msra.mxu0 %v1267
  %1714 = vmatpush.bf16.msra.mxu0 %v1263
  %1715 = vmatpush.bf16.msra.mxu0 %v1259
  %1716 = vmatpush.bf16.msra.mxu0 %v1255
  %1717 = vmatpush.bf16.msra.mxu0 %v1251
  %1718 = vmatpush.bf16.msra.mxu0 %v1247
  %1719 = vmatpush.bf16.msra.mxu0 %v1243
  %1720 = vmatpush.bf16.msra.mxu0 %v1239
  %1721 = vmatmul.bf16.gmra.mxu0 %v145
  %v1722 = vpop.f32.mrf.mxu0
  %v1723 = vadd.f32 %v1710, %v1722
  %v1724 = vpop.f32.mrf.mxu0
  %1725 = vdwg.mxu0
  %1726 = vmatpush.bf16.msra.mxu0 %v1299
  %1727 = vmatpush.bf16.msra.mxu0 %v1295
  %1728 = vmatpush.bf16.msra.mxu0 %v1291
  %1729 = vmatpush.bf16.msra.mxu0 %v1287
  %1730 = vmatpush.bf16.msra.mxu0 %v1283
  %1731 = vmatpush.bf16.msra.mxu0 %v1279
  %1732 = vmatpush.bf16.msra.mxu0 %v1275
  %1733 = vmatpush.bf16.msra.mxu0 %v1271
  %1734 = vmatmul.bf16.gmra.mxu0 %v146
  %v1735 = vpop.f32.mrf.mxu0
  %v1736 = vadd.f32 %v1723, %v1735
  %v1737 = vpop.f32.mrf.mxu0
  %1738 = vdwg.mxu0
  %1739 = vmatpush.bf16.msra.mxu0 %v1331
  %1740 = vmatpush.bf16.msra.mxu0 %v1327
  %1741 = vmatpush.bf16.msra.mxu0 %v1323
  %1742 = vmatpush.bf16.msra.mxu0 %v1319
  %1743 = vmatpush.bf16.msra.mxu0 %v1315
  %1744 = vmatpush.bf16.msra.mxu0 %v1311
  %1745 = vmatpush.bf16.msra.mxu0 %v1307
  %1746 = vmatpush.bf16.msra.mxu0 %v1303
  %1747 = vmatmul.bf16.gmra.mxu0 %v147
  %v1748 = vpop.f32.mrf.mxu0
  %v1749 = vadd.f32 %v1736, %v1748
  %v1750 = vpop.f32.mrf.mxu0
  %1751 = vdwg.mxu0
  %1752 = vmatpush.bf16.msra.mxu0 %v1363
  %1753 = vmatpush.bf16.msra.mxu0 %v1359
  %1754 = vmatpush.bf16.msra.mxu0 %v1355
  %1755 = vmatpush.bf16.msra.mxu0 %v1351
  %1756 = vmatpush.bf16.msra.mxu0 %v1347
  %1757 = vmatpush.bf16.msra.mxu0 %v1343
  %1758 = vmatpush.bf16.msra.mxu0 %v1339
  %1759 = vmatpush.bf16.msra.mxu0 %v1335
  %1760 = vmatmul.bf16.gmra.mxu0 %v148
  %v1761 = vpop.f32.mrf.mxu0
  %v1762 = vadd.f32 %v1749, %v1761
  %v1763 = vpop.f32.mrf.mxu0
  %1764 = vdwg.mxu0
  %1765 = vmatpush.bf16.msra.mxu0 %v1395
  %1766 = vmatpush.bf16.msra.mxu0 %v1391
  %1767 = vmatpush.bf16.msra.mxu0 %v1387
  %1768 = vmatpush.bf16.msra.mxu0 %v1383
  %1769 = vmatpush.bf16.msra.mxu0 %v1379
  %1770 = vmatpush.bf16.msra.mxu0 %v1375
  %1771 = vmatpush.bf16.msra.mxu0 %v1371
  %1772 = vmatpush.bf16.msra.mxu0 %v1367
  %1773 = vmatmul.bf16.gmra.mxu0 %v149
  %v1774 = vpop.f32.mrf.mxu0
  %v1775 = vadd.f32 %v1762, %v1774
  %v1776 = vpop.f32.mrf.mxu0
  %1777 = vdwg.mxu0
  %1778 = vmatpush.bf16.msra.mxu0 %v1427
  %1779 = vmatpush.bf16.msra.mxu0 %v1423
  %1780 = vmatpush.bf16.msra.mxu0 %v1419
  %1781 = vmatpush.bf16.msra.mxu0 %v1415
  %1782 = vmatpush.bf16.msra.mxu0 %v1411
  %1783 = vmatpush.bf16.msra.mxu0 %v1407
  %1784 = vmatpush.bf16.msra.mxu0 %v1403
  %1785 = vmatpush.bf16.msra.mxu0 %v1399
  %1786 = vmatmul.bf16.gmra.mxu0 %v150
  %v1787 = vpop.f32.mrf.mxu0
  %v1788 = vadd.f32 %v1775, %v1787
  %v1789 = vpop.f32.mrf.mxu0
  %1790 = vdwg.mxu0
  %1791 = vmatpush.bf16.msra.mxu0 %v1204
  %1792 = vmatpush.bf16.msra.mxu0 %v1200
  %1793 = vmatpush.bf16.msra.mxu0 %v1196
  %1794 = vmatpush.bf16.msra.mxu0 %v1192
  %1795 = vmatpush.bf16.msra.mxu0 %v1188
  %1796 = vmatpush.bf16.msra.mxu0 %v1184
  %1797 = vmatpush.bf16.msra.mxu0 %v1180
  %1798 = vmatpush.bf16.msra.mxu0 %v1176
  %1799 = vmatmul.bf16.gmra.mxu0 %v143
  %v1800 = vpop.f32.mrf.mxu0
  %v1801 = vadd.f32 0.0, %v1800
  %v1802 = vpop.f32.mrf.mxu0
  %1803 = vdwg.mxu0
  %1804 = vmatpush.bf16.msra.mxu0 %v1236
  %1805 = vmatpush.bf16.msra.mxu0 %v1232
  %1806 = vmatpush.bf16.msra.mxu0 %v1228
  %1807 = vmatpush.bf16.msra.mxu0 %v1224
  %1808 = vmatpush.bf16.msra.mxu0 %v1220
  %1809 = vmatpush.bf16.msra.mxu0 %v1216
  %1810 = vmatpush.bf16.msra.mxu0 %v1212
  %1811 = vmatpush.bf16.msra.mxu0 %v1208
  %1812 = vmatmul.bf16.gmra.mxu0 %v144
  %v1813 = vpop.f32.mrf.mxu0
  %v1814 = vadd.f32 %v1801, %v1813
  %v1815 = vpop.f32.mrf.mxu0
  %1816 = vdwg.mxu0
  %1817 = vmatpush.bf16.msra.mxu0 %v1268
  %1818 = vmatpush.bf16.msra.mxu0 %v1264
  %1819 = vmatpush.bf16.msra.mxu0 %v1260
  %1820 = vmatpush.bf16.msra.mxu0 %v1256
  %1821 = vmatpush.bf16.msra.mxu0 %v1252
  %1822 = vmatpush.bf16.msra.mxu0 %v1248
  %1823 = vmatpush.bf16.msra.mxu0 %v1244
  %1824 = vmatpush.bf16.msra.mxu0 %v1240
  %1825 = vmatmul.bf16.gmra.mxu0 %v145
  %v1826 = vpop.f32.mrf.mxu0
  %v1827 = vadd.f32 %v1814, %v1826
  %v1828 = vpop.f32.mrf.mxu0
  %1829 = vdwg.mxu0
  %1830 = vmatpush.bf16.msra.mxu0 %v1300
  %1831 = vmatpush.bf16.msra.mxu0 %v1296
  %1832 = vmatpush.bf16.msra.mxu0 %v1292
  %1833 = vmatpush.bf16.msra.mxu0 %v1288
  %1834 = vmatpush.bf16.msra.mxu0 %v1284
  %1835 = vmatpush.bf16.msra.mxu0 %v1280
  %1836 = vmatpush.bf16.msra.mxu0 %v1276
  %1837 = vmatpush.bf16.msra.mxu0 %v1272
  %1838 = vmatmul.bf16.gmra.mxu0 %v146
  %v1839 = vpop.f32.mrf.mxu0
  %v1840 = vadd.f32 %v1827, %v1839
  %v1841 = vpop.f32.mrf.mxu0
  %1842 = vdwg.mxu0
  %1843 = vmatpush.bf16.msra.mxu0 %v1332
  %1844 = vmatpush.bf16.msra.mxu0 %v1328
  %1845 = vmatpush.bf16.msra.mxu0 %v1324
  %1846 = vmatpush.bf16.msra.mxu0 %v1320
  %1847 = vmatpush.bf16.msra.mxu0 %v1316
  %1848 = vmatpush.bf16.msra.mxu0 %v1312
  %1849 = vmatpush.bf16.msra.mxu0 %v1308
  %1850 = vmatpush.bf16.msra.mxu0 %v1304
  %1851 = vmatmul.bf16.gmra.mxu0 %v147
  %v1852 = vpop.f32.mrf.mxu0
  %v1853 = vadd.f32 %v1840, %v1852
  %v1854 = vpop.f32.mrf.mxu0
  %1855 = vdwg.mxu0
  %1856 = vmatpush.bf16.msra.mxu0 %v1364
  %1857 = vmatpush.bf16.msra.mxu0 %v1360
  %1858 = vmatpush.bf16.msra.mxu0 %v1356
  %1859 = vmatpush.bf16.msra.mxu0 %v1352
  %1860 = vmatpush.bf16.msra.mxu0 %v1348
  %1861 = vmatpush.bf16.msra.mxu0 %v1344
  %1862 = vmatpush.bf16.msra.mxu0 %v1340
  %1863 = vmatpush.bf16.msra.mxu0 %v1336
  %1864 = vmatmul.bf16.gmra.mxu0 %v148
  %v1865 = vpop.f32.mrf.mxu0
  %v1866 = vadd.f32 %v1853, %v1865
  %v1867 = vpop.f32.mrf.mxu0
  %1868 = vdwg.mxu0
  %1869 = vmatpush.bf16.msra.mxu0 %v1396
  %1870 = vmatpush.bf16.msra.mxu0 %v1392
  %1871 = vmatpush.bf16.msra.mxu0 %v1388
  %1872 = vmatpush.bf16.msra.mxu0 %v1384
  %1873 = vmatpush.bf16.msra.mxu0 %v1380
  %1874 = vmatpush.bf16.msra.mxu0 %v1376
  %1875 = vmatpush.bf16.msra.mxu0 %v1372
  %1876 = vmatpush.bf16.msra.mxu0 %v1368
  %1877 = vmatmul.bf16.gmra.mxu0 %v149
  %v1878 = vpop.f32.mrf.mxu0
  %v1879 = vadd.f32 %v1866, %v1878
  %v1880 = vpop.f32.mrf.mxu0
  %1881 = vdwg.mxu0
  %1882 = vmatpush.bf16.msra.mxu0 %v1428
  %1883 = vmatpush.bf16.msra.mxu0 %v1424
  %1884 = vmatpush.bf16.msra.mxu0 %v1420
  %1885 = vmatpush.bf16.msra.mxu0 %v1416
  %1886 = vmatpush.bf16.msra.mxu0 %v1412
  %1887 = vmatpush.bf16.msra.mxu0 %v1408
  %1888 = vmatpush.bf16.msra.mxu0 %v1404
  %1889 = vmatpush.bf16.msra.mxu0 %v1400
  %1890 = vmatmul.bf16.gmra.mxu0 %v150
  %v1891 = vpop.f32.mrf.mxu0
  %v1892 = vadd.f32 %v1879, %v1891
  %v1893 = vpop.f32.mrf.mxu0
  %1894 = vdwg.mxu0
  %1895 = vmatpush.bf16.msra.mxu0 %v1205
  %1896 = vmatpush.bf16.msra.mxu0 %v1201
  %1897 = vmatpush.bf16.msra.mxu0 %v1197
  %1898 = vmatpush.bf16.msra.mxu0 %v1193
  %1899 = vmatpush.bf16.msra.mxu0 %v1189
  %1900 = vmatpush.bf16.msra.mxu0 %v1185
  %1901 = vmatpush.bf16.msra.mxu0 %v1181
  %1902 = vmatpush.bf16.msra.mxu0 %v1177
  %1903 = vmatmul.bf16.gmra.mxu0 %v143
  %v1904 = vpop.f32.mrf.mxu0
  %v1905 = vadd.f32 0.0, %v1904
  %v1906 = vpop.f32.mrf.mxu0
  %1907 = vdwg.mxu0
  %1908 = vmatpush.bf16.msra.mxu0 %v1237
  %1909 = vmatpush.bf16.msra.mxu0 %v1233
  %1910 = vmatpush.bf16.msra.mxu0 %v1229
  %1911 = vmatpush.bf16.msra.mxu0 %v1225
  %1912 = vmatpush.bf16.msra.mxu0 %v1221
  %1913 = vmatpush.bf16.msra.mxu0 %v1217
  %1914 = vmatpush.bf16.msra.mxu0 %v1213
  %1915 = vmatpush.bf16.msra.mxu0 %v1209
  %1916 = vmatmul.bf16.gmra.mxu0 %v144
  %v1917 = vpop.f32.mrf.mxu0
  %v1918 = vadd.f32 %v1905, %v1917
  %v1919 = vpop.f32.mrf.mxu0
  %1920 = vdwg.mxu0
  %1921 = vmatpush.bf16.msra.mxu0 %v1269
  %1922 = vmatpush.bf16.msra.mxu0 %v1265
  %1923 = vmatpush.bf16.msra.mxu0 %v1261
  %1924 = vmatpush.bf16.msra.mxu0 %v1257
  %1925 = vmatpush.bf16.msra.mxu0 %v1253
  %1926 = vmatpush.bf16.msra.mxu0 %v1249
  %1927 = vmatpush.bf16.msra.mxu0 %v1245
  %1928 = vmatpush.bf16.msra.mxu0 %v1241
  %1929 = vmatmul.bf16.gmra.mxu0 %v145
  %v1930 = vpop.f32.mrf.mxu0
  %v1931 = vadd.f32 %v1918, %v1930
  %v1932 = vpop.f32.mrf.mxu0
  %1933 = vdwg.mxu0
  %1934 = vmatpush.bf16.msra.mxu0 %v1301
  %1935 = vmatpush.bf16.msra.mxu0 %v1297
  %1936 = vmatpush.bf16.msra.mxu0 %v1293
  %1937 = vmatpush.bf16.msra.mxu0 %v1289
  %1938 = vmatpush.bf16.msra.mxu0 %v1285
  %1939 = vmatpush.bf16.msra.mxu0 %v1281
  %1940 = vmatpush.bf16.msra.mxu0 %v1277
  %1941 = vmatpush.bf16.msra.mxu0 %v1273
  %1942 = vmatmul.bf16.gmra.mxu0 %v146
  %v1943 = vpop.f32.mrf.mxu0
  %v1944 = vadd.f32 %v1931, %v1943
  %v1945 = vpop.f32.mrf.mxu0
  %1946 = vdwg.mxu0
  %1947 = vmatpush.bf16.msra.mxu0 %v1333
  %1948 = vmatpush.bf16.msra.mxu0 %v1329
  %1949 = vmatpush.bf16.msra.mxu0 %v1325
  %1950 = vmatpush.bf16.msra.mxu0 %v1321
  %1951 = vmatpush.bf16.msra.mxu0 %v1317
  %1952 = vmatpush.bf16.msra.mxu0 %v1313
  %1953 = vmatpush.bf16.msra.mxu0 %v1309
  %1954 = vmatpush.bf16.msra.mxu0 %v1305
  %1955 = vmatmul.bf16.gmra.mxu0 %v147
  %v1956 = vpop.f32.mrf.mxu0
  %v1957 = vadd.f32 %v1944, %v1956
  %v1958 = vpop.f32.mrf.mxu0
  %1959 = vdwg.mxu0
  %1960 = vmatpush.bf16.msra.mxu0 %v1365
  %1961 = vmatpush.bf16.msra.mxu0 %v1361
  %1962 = vmatpush.bf16.msra.mxu0 %v1357
  %1963 = vmatpush.bf16.msra.mxu0 %v1353
  %1964 = vmatpush.bf16.msra.mxu0 %v1349
  %1965 = vmatpush.bf16.msra.mxu0 %v1345
  %1966 = vmatpush.bf16.msra.mxu0 %v1341
  %1967 = vmatpush.bf16.msra.mxu0 %v1337
  %1968 = vmatmul.bf16.gmra.mxu0 %v148
  %v1969 = vpop.f32.mrf.mxu0
  %v1970 = vadd.f32 %v1957, %v1969
  %v1971 = vpop.f32.mrf.mxu0
  %1972 = vdwg.mxu0
  %1973 = vmatpush.bf16.msra.mxu0 %v1397
  %1974 = vmatpush.bf16.msra.mxu0 %v1393
  %1975 = vmatpush.bf16.msra.mxu0 %v1389
  %1976 = vmatpush.bf16.msra.mxu0 %v1385
  %1977 = vmatpush.bf16.msra.mxu0 %v1381
  %1978 = vmatpush.bf16.msra.mxu0 %v1377
  %1979 = vmatpush.bf16.msra.mxu0 %v1373
  %1980 = vmatpush.bf16.msra.mxu0 %v1369
  %1981 = vmatmul.bf16.gmra.mxu0 %v149
  %v1982 = vpop.f32.mrf.mxu0
  %v1983 = vadd.f32 %v1970, %v1982
  %v1984 = vpop.f32.mrf.mxu0
  %1985 = vdwg.mxu0
  %1986 = vmatpush.bf16.msra.mxu0 %v1429
  %1987 = vmatpush.bf16.msra.mxu0 %v1425
  %1988 = vmatpush.bf16.msra.mxu0 %v1421
  %1989 = vmatpush.bf16.msra.mxu0 %v1417
  %1990 = vmatpush.bf16.msra.mxu0 %v1413
  %1991 = vmatpush.bf16.msra.mxu0 %v1409
  %1992 = vmatpush.bf16.msra.mxu0 %v1405
  %1993 = vmatpush.bf16.msra.mxu0 %v1401
  %1994 = vmatmul.bf16.gmra.mxu0 %v150
  %v1995 = vpop.f32.mrf.mxu0
  %v1996 = vadd.f32 %v1983, %v1995
  %v1997 = vpop.f32.mrf.mxu0
  %1998 = vdwg.mxu0
  %1999 = vmatpush.bf16.msra.mxu0 %v1206
  %2000 = vmatpush.bf16.msra.mxu0 %v1202
  %2001 = vmatpush.bf16.msra.mxu0 %v1198
  %2002 = vmatpush.bf16.msra.mxu0 %v1194
  %2003 = vmatpush.bf16.msra.mxu0 %v1190
  %2004 = vmatpush.bf16.msra.mxu0 %v1186
  %2005 = vmatpush.bf16.msra.mxu0 %v1182
  %2006 = vmatpush.bf16.msra.mxu0 %v1178
  %2007 = vmatmul.bf16.gmra.mxu0 %v143
  %v2008 = vpop.f32.mrf.mxu0
  %v2009 = vadd.f32 0.0, %v2008
  %v2010 = vpop.f32.mrf.mxu0
  %2011 = vdwg.mxu0
  %2012 = vmatpush.bf16.msra.mxu0 %v1238
  %2013 = vmatpush.bf16.msra.mxu0 %v1234
  %2014 = vmatpush.bf16.msra.mxu0 %v1230
  %2015 = vmatpush.bf16.msra.mxu0 %v1226
  %2016 = vmatpush.bf16.msra.mxu0 %v1222
  %2017 = vmatpush.bf16.msra.mxu0 %v1218
  %2018 = vmatpush.bf16.msra.mxu0 %v1214
  %2019 = vmatpush.bf16.msra.mxu0 %v1210
  %2020 = vmatmul.bf16.gmra.mxu0 %v144
  %v2021 = vpop.f32.mrf.mxu0
  %v2022 = vadd.f32 %v2009, %v2021
  %v2023 = vpop.f32.mrf.mxu0
  %2024 = vdwg.mxu0
  %2025 = vmatpush.bf16.msra.mxu0 %v1270
  %2026 = vmatpush.bf16.msra.mxu0 %v1266
  %2027 = vmatpush.bf16.msra.mxu0 %v1262
  %2028 = vmatpush.bf16.msra.mxu0 %v1258
  %2029 = vmatpush.bf16.msra.mxu0 %v1254
  %2030 = vmatpush.bf16.msra.mxu0 %v1250
  %2031 = vmatpush.bf16.msra.mxu0 %v1246
  %2032 = vmatpush.bf16.msra.mxu0 %v1242
  %2033 = vmatmul.bf16.gmra.mxu0 %v145
  %v2034 = vpop.f32.mrf.mxu0
  %v2035 = vadd.f32 %v2022, %v2034
  %v2036 = vpop.f32.mrf.mxu0
  %2037 = vdwg.mxu0
  %2038 = vmatpush.bf16.msra.mxu0 %v1302
  %2039 = vmatpush.bf16.msra.mxu0 %v1298
  %2040 = vmatpush.bf16.msra.mxu0 %v1294
  %2041 = vmatpush.bf16.msra.mxu0 %v1290
  %2042 = vmatpush.bf16.msra.mxu0 %v1286
  %2043 = vmatpush.bf16.msra.mxu0 %v1282
  %2044 = vmatpush.bf16.msra.mxu0 %v1278
  %2045 = vmatpush.bf16.msra.mxu0 %v1274
  %2046 = vmatmul.bf16.gmra.mxu0 %v146
  %v2047 = vpop.f32.mrf.mxu0
  %v2048 = vadd.f32 %v2035, %v2047
  %v2049 = vpop.f32.mrf.mxu0
  %2050 = vdwg.mxu0
  %2051 = vmatpush.bf16.msra.mxu0 %v1334
  %2052 = vmatpush.bf16.msra.mxu0 %v1330
  %2053 = vmatpush.bf16.msra.mxu0 %v1326
  %2054 = vmatpush.bf16.msra.mxu0 %v1322
  %2055 = vmatpush.bf16.msra.mxu0 %v1318
  %2056 = vmatpush.bf16.msra.mxu0 %v1314
  %2057 = vmatpush.bf16.msra.mxu0 %v1310
  %2058 = vmatpush.bf16.msra.mxu0 %v1306
  %2059 = vmatmul.bf16.gmra.mxu0 %v147
  %v2060 = vpop.f32.mrf.mxu0
  %v2061 = vadd.f32 %v2048, %v2060
  %v2062 = vpop.f32.mrf.mxu0
  %2063 = vdwg.mxu0
  %2064 = vmatpush.bf16.msra.mxu0 %v1366
  %2065 = vmatpush.bf16.msra.mxu0 %v1362
  %2066 = vmatpush.bf16.msra.mxu0 %v1358
  %2067 = vmatpush.bf16.msra.mxu0 %v1354
  %2068 = vmatpush.bf16.msra.mxu0 %v1350
  %2069 = vmatpush.bf16.msra.mxu0 %v1346
  %2070 = vmatpush.bf16.msra.mxu0 %v1342
  %2071 = vmatpush.bf16.msra.mxu0 %v1338
  %2072 = vmatmul.bf16.gmra.mxu0 %v148
  %v2073 = vpop.f32.mrf.mxu0
  %v2074 = vadd.f32 %v2061, %v2073
  %v2075 = vpop.f32.mrf.mxu0
  %2076 = vdwg.mxu0
  %2077 = vmatpush.bf16.msra.mxu0 %v1398
  %2078 = vmatpush.bf16.msra.mxu0 %v1394
  %2079 = vmatpush.bf16.msra.mxu0 %v1390
  %2080 = vmatpush.bf16.msra.mxu0 %v1386
  %2081 = vmatpush.bf16.msra.mxu0 %v1382
  %2082 = vmatpush.bf16.msra.mxu0 %v1378
  %2083 = vmatpush.bf16.msra.mxu0 %v1374
  %2084 = vmatpush.bf16.msra.mxu0 %v1370
  %2085 = vmatmul.bf16.gmra.mxu0 %v149
  %v2086 = vpop.f32.mrf.mxu0
  %v2087 = vadd.f32 %v2074, %v2086
  %v2088 = vpop.f32.mrf.mxu0
  %2089 = vdwg.mxu0
  %2090 = vmatpush.bf16.msra.mxu0 %v1430
  %2091 = vmatpush.bf16.msra.mxu0 %v1426
  %2092 = vmatpush.bf16.msra.mxu0 %v1422
  %2093 = vmatpush.bf16.msra.mxu0 %v1418
  %2094 = vmatpush.bf16.msra.mxu0 %v1414
  %2095 = vmatpush.bf16.msra.mxu0 %v1410
  %2096 = vmatpush.bf16.msra.mxu0 %v1406
  %2097 = vmatpush.bf16.msra.mxu0 %v1402
  %2098 = vmatmul.bf16.gmra.mxu0 %v150
  %v2099 = vpop.f32.mrf.mxu0
  %v2100 = vadd.f32 %v2087, %v2099
  %v2101 = vpop.f32.mrf.mxu0
  %2102 = vdwg.mxu0
  %v2103 = vpack.c.bf16 %v1892, %v1788
  %v2104 = vpack.c.bf16 %v2100, %v1996
  %2105 = vst [vmem:[%s4] sm:$0xff] %v2103
  %2106 = vst [vmem:[%s4 + $0x8] sm:$0xff] %v2104
  // Predicated region
  $region18: #{downsample_forward.9} parent=0 // pred_check
    _
  $region19: #{downsample_forward.9} parent=0 // pred_check_branch
    %2108 = sbr.rel (0) target = $region21
  $region20: #{downsample_forward.9} parent=0 // pred_region
    _
  $region21: #{downsample_forward.9} parent=0 // pred_fallthru
    _
  // Predicated region
  $region22: #{downsample_forward.9} parent=0 // pred_check
    _
  $region23: #{downsample_forward.9} parent=0 // pred_check_branch
    %2110 = sbr.rel (0) target = $region25
  $region24: #{downsample_forward.9} parent=0 // pred_region
    _
  $region25: #{downsample_forward.9} parent=0 // pred_fallthru
    _

</llo_original>
